<compile_context>
chip_gen: v6e
topology: v6e:2x2x1
jax: 0.10.0
libtpu: 0.0.40
codegen_flags: <defaults>
</compile_context>

<pallas_src>
from typing import Any, NamedTuple

import jax
import jax.numpy as jnp
from jax.experimental import pallas as pl
from jax.experimental.pallas import tpu as pltpu


def _round_up(x, m):
    return ((x + m - 1) // m) * m


def _device_kind():
    try:
        return jax.devices()[0].device_kind.lower()
    except Exception:
        return ""


# ----------------------------------------------------------------------------
# Kernel
# ----------------------------------------------------------------------------
def _cswag_kernel(x_ref, w1_ref, b1_ref, w2_ref, b2_ref, o_ref, h_acc):
    """Grid = (batch tile ["parallel"], K tile over D ["arbitrary" reduction]).

    Step (b, k): h_acc += x[b, k-tile] @ W1_all[k-tile, :]      (f32 accum)
    Last k step: ReLU(+bias) -> mode-averaging matmul -> +bias -> store.
    """
    k = pl.program_id(1)

    @pl.when(k == 0)
    def _():
        h_acc[...] = jnp.zeros_like(h_acc)

    h_acc[...] += jnp.dot(x_ref[...], w1_ref[...],
                          preferred_element_type=jnp.float32)

    @pl.when(k == pl.num_programs(1) - 1)
    def _():
        # VPU-side math stays in f32 (v5e has no bf16 VPU path).
        h = jnp.maximum(h_acc[...] + b1_ref[...], 0.0)
        y = jnp.dot(h.astype(w2_ref.dtype), w2_ref[...],
                    preferred_element_type=jnp.float32)
        o_ref[...] = (y + b2_ref[...]).astype(o_ref.dtype)


# ----------------------------------------------------------------------------
# Weight preparation (call once, cache the result)
# ----------------------------------------------------------------------------
class PreparedCSWAG(NamedTuple):
    w1_p: jax.Array      # [D_p, MHID_p]   compute_dtype
    b1_p: jax.Array      # [1, MHID_p]     f32
    w2_p: jax.Array      # [MHID_p, OUT_p] compute_dtype (pre-scaled by 1/M)
    b2_p: jax.Array      # [1, OUT_p]      f32           (pre-scaled by 1/M)
    D: int
    OUT: int
    D_p: int
    MHID_p: int
    OUT_p: int
    tk: int
    compute_dtype: Any


def prepare_cswag_weights(w1, b1, w2, b2, *, compute_dtype=jnp.bfloat16,
                          max_block_k=None):
    """Fold the mode dimension, pre-scale by 1/M, pad and cast the weights.

    w1: [M, D, HID]   b1: [M, 1, HID]   w2: [M, HID, OUT]   b2: [M, 1, OUT]
    This is the expensive, per-call-hoisted part: call it ONCE per weight set
    (e.g. after cSWAG.update_models()) and reuse the returned struct.
    """
    num_modes, D, HID = w1.shape
    OUT = w2.shape[-1]
    MHID = num_modes * HID
    inv_m = 1.0 / num_modes

    # ---- fold modes into the weight matrices (exact; ReLU is elementwise) ----
    w1_all = jnp.transpose(w1, (1, 0, 2)).reshape(D, MHID)        # cols blocked by mode
    b1_all = b1.reshape(1, MHID)
    w2_all = w2.reshape(MHID, OUT) * inv_m                        # row-stack => sum; *1/M folded in
    b2_all = jnp.sum(b2, axis=0).reshape(1, OUT) * inv_m

    # ---- tiling of the K (=D) axis ----
    if max_block_k is None:
        kind = _device_kind()
        # Bigger K tiles on v6e/v7x (more scoped VMEM headroom); 4096 on v5e.
        max_block_k = 8192 if ("v6" in kind or "v7" in kind) else 4096
    max_block_k = max(128, _round_up(max_block_k, 128))

    MHID_p = _round_up(MHID, 128)           # lane-dense hidden dim
    OUT_p = _round_up(OUT, 128)             # lane-dense output -> unmasked vst
    D128 = _round_up(D, 128)
    tk = D128 if D128 <= max_block_k else max_block_k
    D_p = _round_up(D, tk)

    # Zero padding is exact: padded D rows / hidden cols / OUT cols contribute 0.
    w1_p = jnp.zeros((D_p, MHID_p), compute_dtype).at[:D, :MHID].set(
        w1_all.astype(compute_dtype))
    b1_p = jnp.zeros((1, MHID_p), jnp.float32).at[:, :MHID].set(
        b1_all.astype(jnp.float32))
    w2_p = jnp.zeros((MHID_p, OUT_p), compute_dtype).at[:MHID, :OUT].set(
        w2_all.astype(compute_dtype))
    b2_p = jnp.zeros((1, OUT_p), jnp.float32).at[:, :OUT].set(
        b2_all.astype(jnp.float32))

    return PreparedCSWAG(w1_p, b1_p, w2_p, b2_p, D, OUT, D_p, MHID_p, OUT_p,
                         tk, jnp.dtype(compute_dtype))


# ----------------------------------------------------------------------------
# pallas_call builder + forward
# ----------------------------------------------------------------------------
def _build_call(bb, tk, B_p, D_p, MHID_p, OUT_p, single_buffer_invariants,
                vmem_limit_bytes):
    # Invariant (index_map == (0,0)) inputs: request 1 buffer instead of the
    # default 2 so the resident W2 block is not doubled in VMEM.
    inv_kw = {"pipeline_mode": pl.Buffered(1)} if single_buffer_invariants else {}
    grid = (B_p // bb, D_p // tk)
    return pl.pallas_call(
        _cswag_kernel,
        out_shape=jax.ShapeDtypeStruct((B_p, OUT_p), jnp.float32),
        grid_spec=pltpu.PrefetchScalarGridSpec(
            num_scalar_prefetch=0,
            grid=grid,
            in_specs=[
                pl.BlockSpec((bb, tk), lambda b, k: (b, k)),               # x tile
                pl.BlockSpec((tk, MHID_p), lambda b, k: (k, 0)),           # W1 K-tile
                pl.BlockSpec((1, MHID_p), lambda b, k: (0, 0), **inv_kw),  # b1 (resident)
                pl.BlockSpec((MHID_p, OUT_p), lambda b, k: (0, 0), **inv_kw),  # W2 (resident)
                pl.BlockSpec((1, OUT_p), lambda b, k: (0, 0), **inv_kw),   # b2 (resident)
            ],
            out_specs=pl.BlockSpec((bb, OUT_p), lambda b, k: (b, 0)),
            scratch_shapes=[pltpu.VMEM((bb, MHID_p), jnp.float32)],        # hidden accum
        ),
        compiler_params=pltpu.CompilerParams(
            # batch axis parallel (engages both v7x TensorCores when >=2 tiles),
            # K axis is the resident-accumulator reduction.
            dimension_semantics=("parallel", "arbitrary"),
            vmem_limit_bytes=vmem_limit_bytes,
        ),
    )


def cswag_apply(prepared: PreparedCSWAG, x_nchw, *, block_b=512):
    """Ensemble-averaged forward pass using cached/prepared weights.

    x_nchw : [B, C, H, W] f32 (row-major flatten == torch .view(B, -1))
    returns: [B, OUT] f32
    """
    B = x_nchw.shape[0]
    cdt = prepared.compute_dtype
    itemsize = jnp.dtype(cdt).itemsize
    # Round the batch tile to the dtype sublane packing (bf16 -> 16, f32 -> 8).
    pack = {4: 8, 2: 16, 1: 32}[itemsize]

    block_b = max(pack, _round_up(block_b, pack))
    bb = min(_round_up(B, pack), block_b)
    if B >= 32:
        # Keep >= 2 batch tiles so the "parallel" axis feeds both v7x cores.
        bb = min(bb, _round_up((B + 1) // 2, pack))
    B_p = _round_up(B, bb)

    x_flat = x_nchw.reshape(B, -1)
    assert x_flat.shape[1] == prepared.D, "input feature dim mismatch"
    x_p = jnp.zeros((B_p, prepared.D_p), cdt).at[:B, :prepared.D].set(
        x_flat.astype(cdt))

    # Scoped-VMEM budget from the actual tile footprint (conservative: assume
    # double buffers everywhere) + headroom; capped below physical VMEM.
    tk, MHID_p, OUT_p = prepared.tk, prepared.MHID_p, prepared.OUT_p
    vmem_need = (2 * bb * tk * itemsize            # x tile (double buffered)
                 + 2 * tk * MHID_p * itemsize      # W1 tile (double buffered)
                 + 2 * MHID_p * 4                  # b1
                 + 2 * MHID_p * OUT_p * itemsize   # W2
                 + 2 * OUT_p * 4                   # b2
                 + 2 * bb * OUT_p * 4              # output tile
                 + bb * MHID_p * 4)                # hidden accumulator
    kind = _device_kind()
    cap = (56 << 20) if "v7" in kind else (100 << 20)
    vmem_limit = int(min(cap, max(32 << 20, vmem_need + (8 << 20))))

    args = (x_p, prepared.w1_p, prepared.b1_p, prepared.w2_p, prepared.b2_p)
    try:
        out_p = _build_call(bb, tk, B_p, prepared.D_p, MHID_p, OUT_p,
                            True, vmem_limit)(*args)
    except Exception:
        # Fallback if this JAX build rejects pipeline_mode=pl.Buffered(1).
        out_p = _build_call(bb, tk, B_p, prepared.D_p, MHID_p, OUT_p,
                            False, vmem_limit)(*args)
    return out_p[:B, :prepared.OUT]


def cswag_forward(x_nchw, w1, b1, w2, b2, *, compute_dtype=jnp.bfloat16,
                  block_b=512, max_block_k=None):
    """One-shot convenience wrapper (prep + apply). For repeated calls, call
    prepare_cswag_weights() once and reuse the result with cswag_apply()."""
    prepared = prepare_cswag_weights(w1, b1, w2, b2,
                                     compute_dtype=compute_dtype,
                                     max_block_k=max_block_k)
    return cswag_apply(prepared, x_nchw, block_b=block_b)


def cswag_reference(x_nchw, w1, b1, w2, b2):
    """Pure-JAX reference (mirrors the PyTorch forward, mode-by-mode)."""
    B = x_nchw.shape[0]
    x_flat = x_nchw.reshape(B, -1)
    outs = []
    for m in range(w1.shape[0]):
        h = jnp.maximum(x_flat @ w1[m] + b1[m], 0.0)
        outs.append(h @ w2[m] + b2[m])
    return sum(outs) / len(outs)


if __name__ == "__main__":
    # Small shapes consistent with an image-classifier ensemble.
    B, C, H, W = 2, 4, 16, 16          # x: [2, 4, 16, 16] NCHW
    D = C * H * W                      # 1024
    HID = 128
    OUT = 32
    NUM_MODES = 3                      # len(mode_models)

    key = jax.random.PRNGKey(0)
    kx, kw1, kb1, kw2, kb2 = jax.random.split(key, 5)

    x = jax.random.normal(kx, (B, C, H, W), dtype=jnp.float32)
    w1 = jax.random.normal(kw1, (NUM_MODES, D, HID), dtype=jnp.float32) * 0.02
    b1 = jax.random.normal(kb1, (NUM_MODES, 1, HID), dtype=jnp.float32) * 0.02
    w2 = jax.random.normal(kw2, (NUM_MODES, HID, OUT), dtype=jnp.float32) * 0.02
    b2 = jax.random.normal(kb2, (NUM_MODES, 1, OUT), dtype=jnp.float32) * 0.02

    ref = cswag_reference(x, w1, b1, w2, b2)

    # Default path: weights prepared once (cached bf16 fold/pad), f32 accum.
    prepared_bf16 = prepare_cswag_weights(w1, b1, w2, b2,
                                          compute_dtype=jnp.bfloat16)
    out = jax.block_until_ready(cswag_apply(prepared_bf16, x))
    assert out.shape == (B, OUT)
    assert jnp.allclose(out, ref, atol=1e-2, rtol=1e-2), "mismatch (bf16 path)"

    # Exact-math check: f32 compute dtype must match the reference tightly.
    prepared_f32 = prepare_cswag_weights(w1, b1, w2, b2,
                                         compute_dtype=jnp.float32)
    out_f32 = jax.block_until_ready(cswag_apply(prepared_f32, x))
    assert jnp.allclose(out_f32, ref, atol=1e-4, rtol=1e-4), "mismatch (f32 path)"

    # TODO(synk): update_models() (SWAG posterior sampling + BN-statistics
    # refresh) is a training-time, side-effecting procedure with no
    # forward-pass compute; it is intentionally not translated. After it runs,
    # re-run prepare_cswag_weights() to refresh the cached folded weights.
    print("KERNEL_OK")
</pallas_src>

<mosaic_0001>
module attributes {stable_mosaic.version = 11 : i64} {
  func.func @_cswag_kernel(%arg0: i32, %arg1: i32, %arg2: memref<16x1024xbf16, #tpu.memory_space<vmem>>, %arg3: memref<1024x384xbf16, #tpu.memory_space<vmem>>, %arg4: memref<1x384xf32, #tpu.memory_space<vmem>>, %arg5: memref<384x128xbf16, #tpu.memory_space<vmem>>, %arg6: memref<1x128xf32, #tpu.memory_space<vmem>>, %arg7: memref<16x128xf32, #tpu.memory_space<vmem>>, %arg8: memref<16x384xf32, #tpu.memory_space<vmem>>) attributes {dimension_semantics = [#tpu.dimension_semantics<parallel>, #tpu.dimension_semantics<arbitrary>], iteration_bounds = array<i64: 1, 1>, scalar_prefetch = 0 : i64, scratch_operands = 1 : i64, tpu.core_type = #tpu.core_type<tc>, window_params = [{transform_indices = @transform_0, window_bounds = array<i64: 16, 1024>}, {transform_indices = @transform_1, window_bounds = array<i64: 1024, 384>}, {pipeline_mode = #tpu.pipeline_mode<synchronous>, transform_indices = @transform_2, window_bounds = array<i64: 1, 384>}, {pipeline_mode = #tpu.pipeline_mode<synchronous>, transform_indices = @transform_3, window_bounds = array<i64: 384, 128>}, {pipeline_mode = #tpu.pipeline_mode<synchronous>, transform_indices = @transform_4, window_bounds = array<i64: 1, 128>}, {transform_indices = @transform_5, window_bounds = array<i64: 16, 128>}]} {
    %c0_i32 = arith.constant 0 : i32
    %0 = arith.cmpi eq, %arg1, %c0_i32 : i32
    %1 = arith.extui %0 : i1 to i32
    %c0_i32_0 = arith.constant 0 : i32
    %2 = arith.cmpi ne, %1, %c0_i32_0 : i32
    scf.if %2 {
      %cst_10 = arith.constant 0.000000e+00 : f32
      %12 = vector.broadcast %cst_10 : f32 to vector<16x384xf32>
      %c0_11 = arith.constant 0 : index
      %c0_12 = arith.constant 0 : index
      %13 = vector.load %arg8[%c0_11, %c0_12] : memref<16x384xf32, #tpu.memory_space<vmem>>, vector<16x384xf32>
      tpu.vector_store %arg8[%c0_11, %c0_12], %12 {strides = array<i32>} : memref<16x384xf32, #tpu.memory_space<vmem>>, vector<16x384xf32>,
    } else {
    }
    %c0 = arith.constant 0 : index
    %c0_1 = arith.constant 0 : index
    %3 = vector.load %arg8[%c0, %c0_1] : memref<16x384xf32, #tpu.memory_space<vmem>>, vector<16x384xf32>
    %c0_2 = arith.constant 0 : index
    %c0_3 = arith.constant 0 : index
    %4 = vector.load %arg2[%c0_2, %c0_3] : memref<16x1024xbf16, #tpu.memory_space<vmem>>, vector<16x1024xbf16>
    %c0_4 = arith.constant 0 : index
    %c0_5 = arith.constant 0 : index
    %5 = vector.load %arg3[%c0_4, %c0_5] : memref<1024x384xbf16, #tpu.memory_space<vmem>>, vector<1024x384xbf16>
    %cst = arith.constant dense<0.000000e+00> : vector<16x384xf32>
    %6 = tpu.matmul %4, %5, %cst {dimension_numbers = #tpu.dot_dimension_numbers<[1], [0], [0], [1], [0, 0, 1, 1], [], []>} : vector<16x1024xbf16>, vector<1024x384xbf16>, vector<16x384xf32> -> vector<16x384xf32>
    %7 = arith.addf %3, %6 : vector<16x384xf32>
    %c0_6 = arith.constant 0 : index
    %c0_7 = arith.constant 0 : index
    %8 = vector.load %arg8[%c0_6, %c0_7] : memref<16x384xf32, #tpu.memory_space<vmem>>, vector<16x384xf32>
    tpu.vector_store %arg8[%c0_6, %c0_7], %7 {strides = array<i32>} : memref<16x384xf32, #tpu.memory_space<vmem>>, vector<16x384xf32>,
    %c0_i32_8 = arith.constant 0 : i32
    %9 = arith.cmpi eq, %arg1, %c0_i32_8 : i32
    %10 = arith.extui %9 : i1 to i32
    %c0_i32_9 = arith.constant 0 : i32
    %11 = arith.cmpi ne, %10, %c0_i32_9 : i32
    scf.if %11 {
      %c0_10 = arith.constant 0 : index
      %c0_11 = arith.constant 0 : index
      %12 = vector.load %arg8[%c0_10, %c0_11] : memref<16x384xf32, #tpu.memory_space<vmem>>, vector<16x384xf32>
      %c0_12 = arith.constant 0 : index
      %c0_13 = arith.constant 0 : index
      %13 = vector.load %arg4[%c0_12, %c0_13] : memref<1x384xf32, #tpu.memory_space<vmem>>, vector<1x384xf32>
      %14 = vector.broadcast %13 : vector<1x384xf32> to vector<16x384xf32>
      %15 = arith.addf %12, %14 : vector<16x384xf32>
      %cst_14 = arith.constant 0.000000e+00 : f32
      %16 = vector.broadcast %cst_14 : f32 to vector<16x384xf32>
      %17 = arith.maximumf %15, %16 : vector<16x384xf32>
      %18 = arith.truncf %17 : vector<16x384xf32> to vector<16x384xbf16>
      %c0_15 = arith.constant 0 : index
      %c0_16 = arith.constant 0 : index
      %19 = vector.load %arg5[%c0_15, %c0_16] : memref<384x128xbf16, #tpu.memory_space<vmem>>, vector<384x128xbf16>
      %cst_17 = arith.constant dense<0.000000e+00> : vector<16x128xf32>
      %20 = tpu.matmul %18, %19, %cst_17 {dimension_numbers = #tpu.dot_dimension_numbers<[1], [0], [0], [1], [0, 0, 1, 1], [], []>} : vector<16x384xbf16>, vector<384x128xbf16>, vector<16x128xf32> -> vector<16x128xf32>
      %c0_18 = arith.constant 0 : index
      %c0_19 = arith.constant 0 : index
      %21 = vector.load %arg6[%c0_18, %c0_19] : memref<1x128xf32, #tpu.memory_space<vmem>>, vector<1x128xf32>
      %22 = vector.broadcast %21 : vector<1x128xf32> to vector<16x128xf32>
      %23 = arith.addf %20, %22 : vector<16x128xf32>
      %c0_20 = arith.constant 0 : index
      %c0_21 = arith.constant 0 : index
      %24 = vector.load %arg7[%c0_20, %c0_21] : memref<16x128xf32, #tpu.memory_space<vmem>>, vector<16x128xf32>
      tpu.vector_store %arg7[%c0_20, %c0_21], %23 {strides = array<i32>} : memref<16x128xf32, #tpu.memory_space<vmem>>, vector<16x128xf32>,
    } else {
    }
    return
  }
  func.func @transform_0(%arg0: i32, %arg1: i32) -> (i32, i32) {
    %c0_i32 = arith.constant 0 : i32
    return %arg0, %arg1 : i32, i32
  }
  func.func @transform_1(%arg0: i32, %arg1: i32) -> (i32, i32) {
    %c0_i32 = arith.constant 0 : i32
    %c0_i32_0 = arith.constant 0 : i32
    return %arg1, %c0_i32 : i32, i32
  }
  func.func @transform_2(%arg0: i32, %arg1: i32) -> (i32, i32) {
    %c0_i32 = arith.constant 0 : i32
    %c0_i32_0 = arith.constant 0 : i32
    %c0_i32_1 = arith.constant 0 : i32
    return %c0_i32, %c0_i32_0 : i32, i32
  }
  func.func @transform_3(%arg0: i32, %arg1: i32) -> (i32, i32) {
    %c0_i32 = arith.constant 0 : i32
    %c0_i32_0 = arith.constant 0 : i32
    %c0_i32_1 = arith.constant 0 : i32
    return %c0_i32, %c0_i32_0 : i32, i32
  }
  func.func @transform_4(%arg0: i32, %arg1: i32) -> (i32, i32) {
    %c0_i32 = arith.constant 0 : i32
    %c0_i32_0 = arith.constant 0 : i32
    %c0_i32_1 = arith.constant 0 : i32
    return %c0_i32, %c0_i32_0 : i32, i32
  }
  func.func @transform_5(%arg0: i32, %arg1: i32) -> (i32, i32) {
    %c0_i32 = arith.constant 0 : i32
    %c0_i32_0 = arith.constant 0 : i32
    return %arg0, %c0_i32 : i32, i32
  }
}

module attributes {stable_mosaic.version = 11 : i64} {
  func.func @_cswag_kernel(%arg0: i32, %arg1: i32, %arg2: memref<16x1024xbf16, #tpu.memory_space<vmem>>, %arg3: memref<1024x384xbf16, #tpu.memory_space<vmem>>, %arg4: memref<1x384xf32, #tpu.memory_space<vmem>>, %arg5: memref<384x128xbf16, #tpu.memory_space<vmem>>, %arg6: memref<1x128xf32, #tpu.memory_space<vmem>>, %arg7: memref<16x128xf32, #tpu.memory_space<vmem>>, %arg8: memref<16x384xf32, #tpu.memory_space<vmem>>) attributes {dimension_semantics = [#tpu.dimension_semantics<parallel>, #tpu.dimension_semantics<arbitrary>], iteration_bounds = array<i64: 1, 1>, scalar_prefetch = 0 : i64, scratch_operands = 1 : i64, tpu.core_type = #tpu.core_type<tc>, window_params = [{transform_indices = @transform_0, window_bounds = array<i64: 16, 1024>}, {transform_indices = @transform_1, window_bounds = array<i64: 1024, 384>}, {pipeline_mode = #tpu.pipeline_mode<synchronous>, transform_indices = @transform_2, window_bounds = array<i64: 1, 384>}, {pipeline_mode = #tpu.pipeline_mode<synchronous>, transform_indices = @transform_3, window_bounds = array<i64: 384, 128>}, {pipeline_mode = #tpu.pipeline_mode<synchronous>, transform_indices = @transform_4, window_bounds = array<i64: 1, 128>}, {transform_indices = @transform_5, window_bounds = array<i64: 16, 128>}]} {
    %c0_i32 = arith.constant 0 : i32
    %0 = arith.cmpi eq, %arg1, %c0_i32 : i32
    %1 = arith.extui %0 : i1 to i32
    %c0_i32_0 = arith.constant 0 : i32
    %2 = arith.cmpi ne, %1, %c0_i32_0 : i32
    scf.if %2 {
      %cst_10 = arith.constant 0.000000e+00 : f32
      %12 = vector.broadcast %cst_10 : f32 to vector<16x384xf32>
      %c0_11 = arith.constant 0 : index
      %c0_12 = arith.constant 0 : index
      %13 = vector.load %arg8[%c0_11, %c0_12] : memref<16x384xf32, #tpu.memory_space<vmem>>, vector<16x384xf32>
      tpu.vector_store %arg8[%c0_11, %c0_12], %12 {strides = array<i32>} : memref<16x384xf32, #tpu.memory_space<vmem>>, vector<16x384xf32>,
    } else {
    }
    %c0 = arith.constant 0 : index
    %c0_1 = arith.constant 0 : index
    %3 = vector.load %arg8[%c0, %c0_1] : memref<16x384xf32, #tpu.memory_space<vmem>>, vector<16x384xf32>
    %c0_2 = arith.constant 0 : index
    %c0_3 = arith.constant 0 : index
    %4 = vector.load %arg2[%c0_2, %c0_3] : memref<16x1024xbf16, #tpu.memory_space<vmem>>, vector<16x1024xbf16>
    %c0_4 = arith.constant 0 : index
    %c0_5 = arith.constant 0 : index
    %5 = vector.load %arg3[%c0_4, %c0_5] : memref<1024x384xbf16, #tpu.memory_space<vmem>>, vector<1024x384xbf16>
    %cst = arith.constant dense<0.000000e+00> : vector<16x384xf32>
    %6 = tpu.matmul %4, %5, %cst {dimension_numbers = #tpu.dot_dimension_numbers<[1], [0], [0], [1], [0, 0, 1, 1], [], []>} : vector<16x1024xbf16>, vector<1024x384xbf16>, vector<16x384xf32> -> vector<16x384xf32>
    %7 = arith.addf %3, %6 : vector<16x384xf32>
    %c0_6 = arith.constant 0 : index
    %c0_7 = arith.constant 0 : index
    %8 = vector.load %arg8[%c0_6, %c0_7] : memref<16x384xf32, #tpu.memory_space<vmem>>, vector<16x384xf32>
    tpu.vector_store %arg8[%c0_6, %c0_7], %7 {strides = array<i32>} : memref<16x384xf32, #tpu.memory_space<vmem>>, vector<16x384xf32>,
    %c0_i32_8 = arith.constant 0 : i32
    %9 = arith.cmpi eq, %arg1, %c0_i32_8 : i32
    %10 = arith.extui %9 : i1 to i32
    %c0_i32_9 = arith.constant 0 : i32
    %11 = arith.cmpi ne, %10, %c0_i32_9 : i32
    scf.if %11 {
      %c0_10 = arith.constant 0 : index
      %c0_11 = arith.constant 0 : index
      %12 = vector.load %arg8[%c0_10, %c0_11] : memref<16x384xf32, #tpu.memory_space<vmem>>, vector<16x384xf32>
      %c0_12 = arith.constant 0 : index
      %c0_13 = arith.constant 0 : index
      %13 = vector.load %arg4[%c0_12, %c0_13] : memref<1x384xf32, #tpu.memory_space<vmem>>, vector<1x384xf32>
      %14 = vector.broadcast %13 : vector<1x384xf32> to vector<16x384xf32>
      %15 = arith.addf %12, %14 : vector<16x384xf32>
      %cst_14 = arith.constant 0.000000e+00 : f32
      %16 = vector.broadcast %cst_14 : f32 to vector<16x384xf32>
      %17 = arith.maximumf %15, %16 : vector<16x384xf32>
      %18 = arith.truncf %17 : vector<16x384xf32> to vector<16x384xbf16>
      %c0_15 = arith.constant 0 : index
      %c0_16 = arith.constant 0 : index
      %19 = vector.load %arg5[%c0_15, %c0_16] : memref<384x128xbf16, #tpu.memory_space<vmem>>, vector<384x128xbf16>
      %cst_17 = arith.constant dense<0.000000e+00> : vector<16x128xf32>
      %20 = tpu.matmul %18, %19, %cst_17 {dimension_numbers = #tpu.dot_dimension_numbers<[1], [0], [0], [1], [0, 0, 1, 1], [], []>} : vector<16x384xbf16>, vector<384x128xbf16>, vector<16x128xf32> -> vector<16x128xf32>
      %c0_18 = arith.constant 0 : index
      %c0_19 = arith.constant 0 : index
      %21 = vector.load %arg6[%c0_18, %c0_19] : memref<1x128xf32, #tpu.memory_space<vmem>>, vector<1x128xf32>
      %22 = vector.broadcast %21 : vector<1x128xf32> to vector<16x128xf32>
      %23 = arith.addf %20, %22 : vector<16x128xf32>
      %c0_20 = arith.constant 0 : index
      %c0_21 = arith.constant 0 : index
      %24 = vector.load %arg7[%c0_20, %c0_21] : memref<16x128xf32, #tpu.memory_space<vmem>>, vector<16x128xf32>
      tpu.vector_store %arg7[%c0_20, %c0_21], %23 {strides = array<i32>} : memref<16x128xf32, #tpu.memory_space<vmem>>, vector<16x128xf32>,
    } else {
    }
    return
  }
  func.func @transform_0(%arg0: i32, %arg1: i32) -> (i32, i32) {
    %c0_i32 = arith.constant 0 : i32
    return %arg0, %arg1 : i32, i32
  }
  func.func @transform_1(%arg0: i32, %arg1: i32) -> (i32, i32) {
    %c0_i32 = arith.constant 0 : i32
    %c0_i32_0 = arith.constant 0 : i32
    return %arg1, %c0_i32 : i32, i32
  }
  func.func @transform_2(%arg0: i32, %arg1: i32) -> (i32, i32) {
    %c0_i32 = arith.constant 0 : i32
    %c0_i32_0 = arith.constant 0 : i32
    %c0_i32_1 = arith.constant 0 : i32
    return %c0_i32, %c0_i32_0 : i32, i32
  }
  func.func @transform_3(%arg0: i32, %arg1: i32) -> (i32, i32) {
    %c0_i32 = arith.constant 0 : i32
    %c0_i32_0 = arith.constant 0 : i32
    %c0_i32_1 = arith.constant 0 : i32
    return %c0_i32, %c0_i32_0 : i32, i32
  }
  func.func @transform_4(%arg0: i32, %arg1: i32) -> (i32, i32) {
    %c0_i32 = arith.constant 0 : i32
    %c0_i32_0 = arith.constant 0 : i32
    %c0_i32_1 = arith.constant 0 : i32
    return %c0_i32, %c0_i32_0 : i32, i32
  }
  func.func @transform_5(%arg0: i32, %arg1: i32) -> (i32, i32) {
    %c0_i32 = arith.constant 0 : i32
    %c0_i32_0 = arith.constant 0 : i32
    return %arg0, %c0_i32 : i32, i32
  }
}

</mosaic_0001>

<llo_original>
// kernel: tpu_custom_call.1
$region0: #{tpu_custom_call.1}
  #allocation0 [shape = 'u32[]', space=smem, size = 0x4, offset = 0x4, fixed_abs, tag = 'smem constant byte address 0x4 - core index']
  #allocation1 [shape = 'u32[144,128]{1,0:T(1,128)}', space=vmem, size = 0x12000, scoped, tag = 'internal scratch']
  #allocation2 [shape = 'f32[16,384]{1,0:T(8,128)}', space=vmem, size = 0x6000, scoped, tag = 'scratch operand']
  %s0 = inlined_call_operand.hbm [shape: bf16[16,1024], index: 0, kind: input, shape index: {}]
  %s1 = inlined_call_operand.hbm [shape: bf16[1024,384], index: 1, kind: input, shape index: {}]
  %s2 = inlined_call_operand.vmem [shape: f32[1,384], index: 2, kind: input, shape index: {}]
  %s3 = inlined_call_operand.hbm [shape: bf16[384,128], index: 3, kind: input, shape index: {}]
  %s4 = inlined_call_operand.vmem [shape: f32[1,128], index: 4, kind: input, shape index: {}]
  %s5 = inlined_call_operand.hbm [shape: f32[16,128], index: 5, kind: output, shape index: {}]
  %s6 = sld [smem:[#allocation0]]
  $region50: #{tpu_custom_call.1} parent=0
    _
  %s8 = ssub.s32 1, %s6
  %s9 = scalar_select 0, %s8, %s6
  $region1: #{tpu_custom_call.1} parent=0
    #allocation3 [shape = 'u8[32768]{0}', space=vmem, size = 0x8000, scoped, tag = 'input window, operand 0, single buffered']
    #allocation4 [shape = 's32[1]{0}', space=sflag, size = 0x4, scoped, tag = 'scoped memory for tpu_custom_call.1']
    #allocation5 [shape = 's32[1]{0}', space=sflag, size = 0x4, scoped, tag = 'scoped memory for tpu_custom_call.1']
    #allocation6 [shape = 'u8[786432]{0}', space=vmem, size = 0xc0000, scoped, tag = 'input window, operand 1, single buffered']
    #allocation7 [shape = 's32[1]{0}', space=sflag, size = 0x4, scoped, tag = 'scoped memory for tpu_custom_call.1']
    #allocation8 [shape = 'u8[98304]{0}', space=vmem, size = 0x18000, scoped, tag = 'input window, operand 3, single buffered']
    #allocation9 [shape = 'u8[8192]{0}', space=vmem, size = 0x2000, scoped, tag = 'output window, operand 0, single buffered']
    %10 = vsyncpa [#allocation4], 0
    %11 = vsyncpa [#allocation7], 0
    %12 = vsyncpa [#allocation5], 0
    // Predicated region
    $region2: #{tpu_custom_call.1} parent=1 // pred_check
      _
    $region3: #{tpu_custom_call.1} parent=1 // pred_check_branch
      %14 = sbr.rel (0) target = $region5
    $region4: #{tpu_custom_call.1} parent=1 // pred_region
      %s16 = ssub.s32 1024, 1024
      %17 = vsyncadd [#allocation4], %s16
      %s18 = sshll.u32 [#allocation3], 4
      %s19 = int_to_ptr.vmem [resolvable:$true] %s18
      %24 = dma.hbm_to_vmem [thread:$0]  %s0, 1024, %s19, [#allocation4], 512, 512, 32
    $region5: #{tpu_custom_call.1} parent=1 // pred_fallthru
      _
    // Predicated region
    $region6: #{tpu_custom_call.1} parent=1 // pred_check
      _
    $region7: #{tpu_custom_call.1} parent=1 // pred_check_branch
      %26 = sbr.rel (0) target = $region9
    $region8: #{tpu_custom_call.1} parent=1 // pred_region
      %s28 = ssub.s32 24576, 24576
      %29 = vsyncadd [#allocation7], %s28
      %s30 = sshll.u32 [#allocation6], 4
      %s31 = int_to_ptr.vmem [resolvable:$true] %s30
      %36 = dma.hbm_to_vmem [thread:$0]  %s1, 24576, %s31, [#allocation7], 192, 192, 12
    $region9: #{tpu_custom_call.1} parent=1 // pred_fallthru
      _
    // Predicated region
    $region10: #{tpu_custom_call.1} parent=1 // pred_check
      _
    $region11: #{tpu_custom_call.1} parent=1 // pred_check_branch
      %38 = sbr.rel (0) target = $region13
    $region12: #{tpu_custom_call.1} parent=1 // pred_region
      _
    $region13: #{tpu_custom_call.1} parent=1 // pred_fallthru
      _
    // Predicated region
    $region14: #{tpu_custom_call.1} parent=1 // pred_check
      _
    $region15: #{tpu_custom_call.1} parent=1 // pred_check_branch
      %40 = sbr.rel (0) target = $region17
    $region16: #{tpu_custom_call.1} parent=1 // pred_region
      %s42 = ssub.s32 3072, 3072
      %43 = vsyncadd [#allocation7], %s42
      %s44 = sshll.u32 [#allocation8], 4
      %s45 = int_to_ptr.vmem [resolvable:$true] %s44
      %50 = dma.hbm_to_vmem [thread:$0]  %s3, 3072, %s45, [#allocation7], 64, 64, 4
    $region17: #{tpu_custom_call.1} parent=1 // pred_fallthru
      _
    // Predicated region
    $region18: #{tpu_custom_call.1} parent=1 // pred_check
      _
    $region19: #{tpu_custom_call.1} parent=1 // pred_check_branch
      %52 = sbr.rel (0) target = $region21
    $region20: #{tpu_custom_call.1} parent=1 // pred_region
      _
    $region21: #{tpu_custom_call.1} parent=1 // pred_fallthru
      _
    // Predicated region
    $region22: #{tpu_custom_call.1} parent=1 // pred_check
      _
    $region23: #{tpu_custom_call.1} parent=1 // pred_check_branch
      %54 = sbr.rel (0) target = $region25
    $region24: #{tpu_custom_call.1} parent=1 // pred_region
      %55 = dma.done [#allocation4], 1024
    $region25: #{tpu_custom_call.1} parent=1 // pred_fallthru
      _
    // Predicated region
    $region26: #{tpu_custom_call.1} parent=1 // pred_check
      _
    $region27: #{tpu_custom_call.1} parent=1 // pred_check_branch
      %57 = sbr.rel (0) target = $region29
    $region28: #{tpu_custom_call.1} parent=1 // pred_region
      %58 = dma.done [#allocation7], 24576
    $region29: #{tpu_custom_call.1} parent=1 // pred_fallthru
      _
    // Predicated region
    $region30: #{tpu_custom_call.1} parent=1 // pred_check
      _
    $region31: #{tpu_custom_call.1} parent=1 // pred_check_branch
      %60 = sbr.rel (0) target = $region33
    $region32: #{tpu_custom_call.1} parent=1 // pred_region
      %61 = dma.done [#allocation7], 3072
    $region33: #{tpu_custom_call.1} parent=1 // pred_fallthru
      _
    %p63 = scmp.eq.s32.totalorder 0, 0
    // Predicated region
    $region34: #{tpu_custom_call.1} parent=1 // pred_check
      %p64 = pneg %p63
    $region35: #{tpu_custom_call.1} parent=1 // pred_check_branch
      %66 = sbr.rel (%p64) target = $region37
    $region36: #{tpu_custom_call.1} parent=1 // pred_region
      %67 = vst [vmem:[#allocation2] sm:$0xff] 0.0
      %68 = vst [vmem:[#allocation2 + $0x8] sm:$0xff] 0.0
      %69 = vst [vmem:[#allocation2 + $0x10] sm:$0xff] 0.0
      %70 = vst [vmem:[#allocation2 + $0x18] sm:$0xff] 0.0
      %71 = vst [vmem:[#allocation2 + $0x20] sm:$0xff] 0.0
      %72 = vst [vmem:[#allocation2 + $0x28] sm:$0xff] 0.0
    $region37: #{tpu_custom_call.1} parent=1 // pred_fallthru
      _
    %v73 = vld [vmem:[#allocation2] sm:$0xff]
    %v74 = vld [vmem:[#allocation2 + $0x8] sm:$0xff]
    %v75 = vld [vmem:[#allocation2 + $0x10] sm:$0xff]
    %v76 = vld [vmem:[#allocation2 + $0x18] sm:$0xff]
    %v77 = vld [vmem:[#allocation2 + $0x20] sm:$0xff]
    %v78 = vld [vmem:[#allocation2 + $0x28] sm:$0xff]
    %v79 = vld [vmem:[#allocation3] sm:$0xff]
    %v80 = vld [vmem:[#allocation3 + $0x8] sm:$0xff]
    %v81 = vld [vmem:[#allocation3 + $0x10] sm:$0xff]
    %v82 = vld [vmem:[#allocation3 + $0x18] sm:$0xff]
    %v83 = vld [vmem:[#allocation3 + $0x20] sm:$0xff]
    %v84 = vld [vmem:[#allocation3 + $0x28] sm:$0xff]
    %v85 = vld [vmem:[#allocation3 + $0x30] sm:$0xff]
    %v86 = vld [vmem:[#allocation3 + $0x38] sm:$0xff]
    %v87 = vld [vmem:[#allocation6] sm:$0xff]
    %v88 = vld [vmem:[#allocation6 + $0x8] sm:$0xf]
    %v89 = vld [vmem:[#allocation6 + $0xc] sm:$0xff]
    %v90 = vld [vmem:[#allocation6 + $0x14] sm:$0xf]
    %v91 = vld [vmem:[#allocation6 + $0x18] sm:$0xff]
    %v92 = vld [vmem:[#allocation6 + $0x20] sm:$0xf]
    %v93 = vld [vmem:[#allocation6 + $0x24] sm:$0xff]
    %v94 = vld [vmem:[#allocation6 + $0x2c] sm:$0xf]
    %v95 = vld [vmem:[#allocation6 + $0x30] sm:$0xff]
    %v96 = vld [vmem:[#allocation6 + $0x38] sm:$0xf]
    %v97 = vld [vmem:[#allocation6 + $0x3c] sm:$0xff]
    %v98 = vld [vmem:[#allocation6 + $0x44] sm:$0xf]
    %v99 = vld [vmem:[#allocation6 + $0x48] sm:$0xff]
    %v100 = vld [vmem:[#allocation6 + $0x50] sm:$0xf]
    %v101 = vld [vmem:[#allocation6 + $0x54] sm:$0xff]
    %v102 = vld [vmem:[#allocation6 + $0x5c] sm:$0xf]
    %v103 = vld [vmem:[#allocation6 + $0x60] sm:$0xff]
    %v104 = vld [vmem:[#allocation6 + $0x68] sm:$0xf]
    %v105 = vld [vmem:[#allocation6 + $0x6c] sm:$0xff]
    %v106 = vld [vmem:[#allocation6 + $0x74] sm:$0xf]
    %v107 = vld [vmem:[#allocation6 + $0x78] sm:$0xff]
    %v108 = vld [vmem:[#allocation6 + $0x80] sm:$0xf]
    %v109 = vld [vmem:[#allocation6 + $0x84] sm:$0xff]
    %v110 = vld [vmem:[#allocation6 + $0x8c] sm:$0xf]
    %v111 = vld [vmem:[#allocation6 + $0x90] sm:$0xff]
    %v112 = vld [vmem:[#allocation6 + $0x98] sm:$0xf]
    %v113 = vld [vmem:[#allocation6 + $0x9c] sm:$0xff]
    %v114 = vld [vmem:[#allocation6 + $0xa4] sm:$0xf]
    %v115 = vld [vmem:[#allocation6 + $0xa8] sm:$0xff]
    %v116 = vld [vmem:[#allocation6 + $0xb0] sm:$0xf]
    %v117 = vld [vmem:[#allocation6 + $0xb4] sm:$0xff]
    %v118 = vld [vmem:[#allocation6 + $0xbc] sm:$0xf]
    %v119 = vld [vmem:[#allocation6 + $0xc0] sm:$0xff]
    %v120 = vld [vmem:[#allocation6 + $0xc8] sm:$0xf]
    %v121 = vld [vmem:[#allocation6 + $0xcc] sm:$0xff]
    %v122 = vld [vmem:[#allocation6 + $0xd4] sm:$0xf]
    %v123 = vld [vmem:[#allocation6 + $0xd8] sm:$0xff]
    %v124 = vld [vmem:[#allocation6 + $0xe0] sm:$0xf]
    %v125 = vld [vmem:[#allocation6 + $0xe4] sm:$0xff]
    %v126 = vld [vmem:[#allocation6 + $0xec] sm:$0xf]
    %v127 = vld [vmem:[#allocation6 + $0xf0] sm:$0xff]
    %v128 = vld [vmem:[#allocation6 + $0xf8] sm:$0xf]
    %v129 = vld [vmem:[#allocation6 + $0xfc] sm:$0xff]
    %v130 = vld [vmem:[#allocation6 + $0x104] sm:$0xf]
    %v131 = vld [vmem:[#allocation6 + $0x108] sm:$0xff]
    %v132 = vld [vmem:[#allocation6 + $0x110] sm:$0xf]
    %v133 = vld [vmem:[#allocation6 + $0x114] sm:$0xff]
    %v134 = vld [vmem:[#allocation6 + $0x11c] sm:$0xf]
    %v135 = vld [vmem:[#allocation6 + $0x120] sm:$0xff]
    %v136 = vld [vmem:[#allocation6 + $0x128] sm:$0xf]
    %v137 = vld [vmem:[#allocation6 + $0x12c] sm:$0xff]
    %v138 = vld [vmem:[#allocation6 + $0x134] sm:$0xf]
    %v139 = vld [vmem:[#allocation6 + $0x138] sm:$0xff]
    %v140 = vld [vmem:[#allocation6 + $0x140] sm:$0xf]
    %v141 = vld [vmem:[#allocation6 + $0x144] sm:$0xff]
    %v142 = vld [vmem:[#allocation6 + $0x14c] sm:$0xf]
    %v143 = vld [vmem:[#allocation6 + $0x150] sm:$0xff]
    %v144 = vld [vmem:[#allocation6 + $0x158] sm:$0xf]
    %v145 = vld [vmem:[#allocation6 + $0x15c] sm:$0xff]
    %v146 = vld [vmem:[#allocation6 + $0x164] sm:$0xf]
    %v147 = vld [vmem:[#allocation6 + $0x168] sm:$0xff]
    %v148 = vld [vmem:[#allocation6 + $0x170] sm:$0xf]
    %v149 = vld [vmem:[#allocation6 + $0x174] sm:$0xff]
    %v150 = vld [vmem:[#allocation6 + $0x17c] sm:$0xf]
    %v151 = vld [vmem:[#allocation6 + $0x180] sm:$0xff]
    %v152 = vld [vmem:[#allocation6 + $0x188] sm:$0xf]
    %v153 = vld [vmem:[#allocation6 + $0x18c] sm:$0xff]
    %v154 = vld [vmem:[#allocation6 + $0x194] sm:$0xf]
    %v155 = vld [vmem:[#allocation6 + $0x198] sm:$0xff]
    %v156 = vld [vmem:[#allocation6 + $0x1a0] sm:$0xf]
    %v157 = vld [vmem:[#allocation6 + $0x1a4] sm:$0xff]
    %v158 = vld [vmem:[#allocation6 + $0x1ac] sm:$0xf]
    %v159 = vld [vmem:[#allocation6 + $0x1b0] sm:$0xff]
    %v160 = vld [vmem:[#allocation6 + $0x1b8] sm:$0xf]
    %v161 = vld [vmem:[#allocation6 + $0x1bc] sm:$0xff]
    %v162 = vld [vmem:[#allocation6 + $0x1c4] sm:$0xf]
    %v163 = vld [vmem:[#allocation6 + $0x1c8] sm:$0xff]
    %v164 = vld [vmem:[#allocation6 + $0x1d0] sm:$0xf]
    %v165 = vld [vmem:[#allocation6 + $0x1d4] sm:$0xff]
    %v166 = vld [vmem:[#allocation6 + $0x1dc] sm:$0xf]
    %v167 = vld [vmem:[#allocation6 + $0x1e0] sm:$0xff]
    %v168 = vld [vmem:[#allocation6 + $0x1e8] sm:$0xf]
    %v169 = vld [vmem:[#allocation6 + $0x1ec] sm:$0xff]
    %v170 = vld [vmem:[#allocation6 + $0x1f4] sm:$0xf]
    %v171 = vld [vmem:[#allocation6 + $0x1f8] sm:$0xff]
    %v172 = vld [vmem:[#allocation6 + $0x200] sm:$0xf]
    %v173 = vld [vmem:[#allocation6 + $0x204] sm:$0xff]
    %v174 = vld [vmem:[#allocation6 + $0x20c] sm:$0xf]
    %v175 = vld [vmem:[#allocation6 + $0x210] sm:$0xff]
    %v176 = vld [vmem:[#allocation6 + $0x218] sm:$0xf]
    %v177 = vld [vmem:[#allocation6 + $0x21c] sm:$0xff]
    %v178 = vld [vmem:[#allocation6 + $0x224] sm:$0xf]
    %v179 = vld [vmem:[#allocation6 + $0x228] sm:$0xff]
    %v180 = vld [vmem:[#allocation6 + $0x230] sm:$0xf]
    %v181 = vld [vmem:[#allocation6 + $0x234] sm:$0xff]
    %v182 = vld [vmem:[#allocation6 + $0x23c] sm:$0xf]
    %v183 = vld [vmem:[#allocation6 + $0x240] sm:$0xff]
    %v184 = vld [vmem:[#allocation6 + $0x248] sm:$0xf]
    %v185 = vld [vmem:[#allocation6 + $0x24c] sm:$0xff]
    %v186 = vld [vmem:[#allocation6 + $0x254] sm:$0xf]
    %v187 = vld [vmem:[#allocation6 + $0x258] sm:$0xff]
    %v188 = vld [vmem:[#allocation6 + $0x260] sm:$0xf]
    %v189 = vld [vmem:[#allocation6 + $0x264] sm:$0xff]
    %v190 = vld [vmem:[#allocation6 + $0x26c] sm:$0xf]
    %v191 = vld [vmem:[#allocation6 + $0x270] sm:$0xff]
    %v192 = vld [vmem:[#allocation6 + $0x278] sm:$0xf]
    %v193 = vld [vmem:[#allocation6 + $0x27c] sm:$0xff]
    %v194 = vld [vmem:[#allocation6 + $0x284] sm:$0xf]
    %v195 = vld [vmem:[#allocation6 + $0x288] sm:$0xff]
    %v196 = vld [vmem:[#allocation6 + $0x290] sm:$0xf]
    %v197 = vld [vmem:[#allocation6 + $0x294] sm:$0xff]
    %v198 = vld [vmem:[#allocation6 + $0x29c] sm:$0xf]
    %v199 = vld [vmem:[#allocation6 + $0x2a0] sm:$0xff]
    %v200 = vld [vmem:[#allocation6 + $0x2a8] sm:$0xf]
    %v201 = vld [vmem:[#allocation6 + $0x2ac] sm:$0xff]
    %v202 = vld [vmem:[#allocation6 + $0x2b4] sm:$0xf]
    %v203 = vld [vmem:[#allocation6 + $0x2b8] sm:$0xff]
    %v204 = vld [vmem:[#allocation6 + $0x2c0] sm:$0xf]
    %v205 = vld [vmem:[#allocation6 + $0x2c4] sm:$0xff]
    %v206 = vld [vmem:[#allocation6 + $0x2cc] sm:$0xf]
    %v207 = vld [vmem:[#allocation6 + $0x2d0] sm:$0xff]
    %v208 = vld [vmem:[#allocation6 + $0x2d8] sm:$0xf]
    %v209 = vld [vmem:[#allocation6 + $0x2dc] sm:$0xff]
    %v210 = vld [vmem:[#allocation6 + $0x2e4] sm:$0xf]
    %v211 = vld [vmem:[#allocation6 + $0x2e8] sm:$0xff]
    %v212 = vld [vmem:[#allocation6 + $0x2f0] sm:$0xf]
    %v213 = vld [vmem:[#allocation6 + $0x2f4] sm:$0xff]
    %v214 = vld [vmem:[#allocation6 + $0x2fc] sm:$0xf]
    %v215 = vld [vmem:[#allocation6 + $0x300] sm:$0xff]
    %v216 = vld [vmem:[#allocation6 + $0x308] sm:$0xf]
    %v217 = vld [vmem:[#allocation6 + $0x30c] sm:$0xff]
    %v218 = vld [vmem:[#allocation6 + $0x314] sm:$0xf]
    %v219 = vld [vmem:[#allocation6 + $0x318] sm:$0xff]
    %v220 = vld [vmem:[#allocation6 + $0x320] sm:$0xf]
    %v221 = vld [vmem:[#allocation6 + $0x324] sm:$0xff]
    %v222 = vld [vmem:[#allocation6 + $0x32c] sm:$0xf]
    %v223 = vld [vmem:[#allocation6 + $0x330] sm:$0xff]
    %v224 = vld [vmem:[#allocation6 + $0x338] sm:$0xf]
    %v225 = vld [vmem:[#allocation6 + $0x33c] sm:$0xff]
    %v226 = vld [vmem:[#allocation6 + $0x344] sm:$0xf]
    %v227 = vld [vmem:[#allocation6 + $0x348] sm:$0xff]
    %v228 = vld [vmem:[#allocation6 + $0x350] sm:$0xf]
    %v229 = vld [vmem:[#allocation6 + $0x354] sm:$0xff]
    %v230 = vld [vmem:[#allocation6 + $0x35c] sm:$0xf]
    %v231 = vld [vmem:[#allocation6 + $0x360] sm:$0xff]
    %v232 = vld [vmem:[#allocation6 + $0x368] sm:$0xf]
    %v233 = vld [vmem:[#allocation6 + $0x36c] sm:$0xff]
    %v234 = vld [vmem:[#allocation6 + $0x374] sm:$0xf]
    %v235 = vld [vmem:[#allocation6 + $0x378] sm:$0xff]
    %v236 = vld [vmem:[#allocation6 + $0x380] sm:$0xf]
    %v237 = vld [vmem:[#allocation6 + $0x384] sm:$0xff]
    %v238 = vld [vmem:[#allocation6 + $0x38c] sm:$0xf]
    %v239 = vld [vmem:[#allocation6 + $0x390] sm:$0xff]
    %v240 = vld [vmem:[#allocation6 + $0x398] sm:$0xf]
    %v241 = vld [vmem:[#allocation6 + $0x39c] sm:$0xff]
    %v242 = vld [vmem:[#allocation6 + $0x3a4] sm:$0xf]
    %v243 = vld [vmem:[#allocation6 + $0x3a8] sm:$0xff]
    %v244 = vld [vmem:[#allocation6 + $0x3b0] sm:$0xf]
    %v245 = vld [vmem:[#allocation6 + $0x3b4] sm:$0xff]
    %v246 = vld [vmem:[#allocation6 + $0x3bc] sm:$0xf]
    %v247 = vld [vmem:[#allocation6 + $0x3c0] sm:$0xff]
    %v248 = vld [vmem:[#allocation6 + $0x3c8] sm:$0xf]
    %v249 = vld [vmem:[#allocation6 + $0x3cc] sm:$0xff]
    %v250 = vld [vmem:[#allocation6 + $0x3d4] sm:$0xf]
    %v251 = vld [vmem:[#allocation6 + $0x3d8] sm:$0xff]
    %v252 = vld [vmem:[#allocation6 + $0x3e0] sm:$0xf]
    %v253 = vld [vmem:[#allocation6 + $0x3e4] sm:$0xff]
    %v254 = vld [vmem:[#allocation6 + $0x3ec] sm:$0xf]
    %v255 = vld [vmem:[#allocation6 + $0x3f0] sm:$0xff]
    %v256 = vld [vmem:[#allocation6 + $0x3f8] sm:$0xf]
    %v257 = vld [vmem:[#allocation6 + $0x3fc] sm:$0xff]
    %v258 = vld [vmem:[#allocation6 + $0x404] sm:$0xf]
    %v259 = vld [vmem:[#allocation6 + $0x408] sm:$0xff]
    %v260 = vld [vmem:[#allocation6 + $0x410] sm:$0xf]
    %v261 = vld [vmem:[#allocation6 + $0x414] sm:$0xff]
    %v262 = vld [vmem:[#allocation6 + $0x41c] sm:$0xf]
    %v263 = vld [vmem:[#allocation6 + $0x420] sm:$0xff]
    %v264 = vld [vmem:[#allocation6 + $0x428] sm:$0xf]
    %v265 = vld [vmem:[#allocation6 + $0x42c] sm:$0xff]
    %v266 = vld [vmem:[#allocation6 + $0x434] sm:$0xf]
    %v267 = vld [vmem:[#allocation6 + $0x438] sm:$0xff]
    %v268 = vld [vmem:[#allocation6 + $0x440] sm:$0xf]
    %v269 = vld [vmem:[#allocation6 + $0x444] sm:$0xff]
    %v270 = vld [vmem:[#allocation6 + $0x44c] sm:$0xf]
    %v271 = vld [vmem:[#allocation6 + $0x450] sm:$0xff]
    %v272 = vld [vmem:[#allocation6 + $0x458] sm:$0xf]
    %v273 = vld [vmem:[#allocation6 + $0x45c] sm:$0xff]
    %v274 = vld [vmem:[#allocation6 + $0x464] sm:$0xf]
    %v275 = vld [vmem:[#allocation6 + $0x468] sm:$0xff]
    %v276 = vld [vmem:[#allocation6 + $0x470] sm:$0xf]
    %v277 = vld [vmem:[#allocation6 + $0x474] sm:$0xff]
    %v278 = vld [vmem:[#allocation6 + $0x47c] sm:$0xf]
    %v279 = vld [vmem:[#allocation6 + $0x480] sm:$0xff]
    %v280 = vld [vmem:[#allocation6 + $0x488] sm:$0xf]
    %v281 = vld [vmem:[#allocation6 + $0x48c] sm:$0xff]
    %v282 = vld [vmem:[#allocation6 + $0x494] sm:$0xf]
    %v283 = vld [vmem:[#allocation6 + $0x498] sm:$0xff]
    %v284 = vld [vmem:[#allocation6 + $0x4a0] sm:$0xf]
    %v285 = vld [vmem:[#allocation6 + $0x4a4] sm:$0xff]
    %v286 = vld [vmem:[#allocation6 + $0x4ac] sm:$0xf]
    %v287 = vld [vmem:[#allocation6 + $0x4b0] sm:$0xff]
    %v288 = vld [vmem:[#allocation6 + $0x4b8] sm:$0xf]
    %v289 = vld [vmem:[#allocation6 + $0x4bc] sm:$0xff]
    %v290 = vld [vmem:[#allocation6 + $0x4c4] sm:$0xf]
    %v291 = vld [vmem:[#allocation6 + $0x4c8] sm:$0xff]
    %v292 = vld [vmem:[#allocation6 + $0x4d0] sm:$0xf]
    %v293 = vld [vmem:[#allocation6 + $0x4d4] sm:$0xff]
    %v294 = vld [vmem:[#allocation6 + $0x4dc] sm:$0xf]
    %v295 = vld [vmem:[#allocation6 + $0x4e0] sm:$0xff]
    %v296 = vld [vmem:[#allocation6 + $0x4e8] sm:$0xf]
    %v297 = vld [vmem:[#allocation6 + $0x4ec] sm:$0xff]
    %v298 = vld [vmem:[#allocation6 + $0x4f4] sm:$0xf]
    %v299 = vld [vmem:[#allocation6 + $0x4f8] sm:$0xff]
    %v300 = vld [vmem:[#allocation6 + $0x500] sm:$0xf]
    %v301 = vld [vmem:[#allocation6 + $0x504] sm:$0xff]
    %v302 = vld [vmem:[#allocation6 + $0x50c] sm:$0xf]
    %v303 = vld [vmem:[#allocation6 + $0x510] sm:$0xff]
    %v304 = vld [vmem:[#allocation6 + $0x518] sm:$0xf]
    %v305 = vld [vmem:[#allocation6 + $0x51c] sm:$0xff]
    %v306 = vld [vmem:[#allocation6 + $0x524] sm:$0xf]
    %v307 = vld [vmem:[#allocation6 + $0x528] sm:$0xff]
    %v308 = vld [vmem:[#allocation6 + $0x530] sm:$0xf]
    %v309 = vld [vmem:[#allocation6 + $0x534] sm:$0xff]
    %v310 = vld [vmem:[#allocation6 + $0x53c] sm:$0xf]
    %v311 = vld [vmem:[#allocation6 + $0x540] sm:$0xff]
    %v312 = vld [vmem:[#allocation6 + $0x548] sm:$0xf]
    %v313 = vld [vmem:[#allocation6 + $0x54c] sm:$0xff]
    %v314 = vld [vmem:[#allocation6 + $0x554] sm:$0xf]
    %v315 = vld [vmem:[#allocation6 + $0x558] sm:$0xff]
    %v316 = vld [vmem:[#allocation6 + $0x560] sm:$0xf]
    %v317 = vld [vmem:[#allocation6 + $0x564] sm:$0xff]
    %v318 = vld [vmem:[#allocation6 + $0x56c] sm:$0xf]
    %v319 = vld [vmem:[#allocation6 + $0x570] sm:$0xff]
    %v320 = vld [vmem:[#allocation6 + $0x578] sm:$0xf]
    %v321 = vld [vmem:[#allocation6 + $0x57c] sm:$0xff]
    %v322 = vld [vmem:[#allocation6 + $0x584] sm:$0xf]
    %v323 = vld [vmem:[#allocation6 + $0x588] sm:$0xff]
    %v324 = vld [vmem:[#allocation6 + $0x590] sm:$0xf]
    %v325 = vld [vmem:[#allocation6 + $0x594] sm:$0xff]
    %v326 = vld [vmem:[#allocation6 + $0x59c] sm:$0xf]
    %v327 = vld [vmem:[#allocation6 + $0x5a0] sm:$0xff]
    %v328 = vld [vmem:[#allocation6 + $0x5a8] sm:$0xf]
    %v329 = vld [vmem:[#allocation6 + $0x5ac] sm:$0xff]
    %v330 = vld [vmem:[#allocation6 + $0x5b4] sm:$0xf]
    %v331 = vld [vmem:[#allocation6 + $0x5b8] sm:$0xff]
    %v332 = vld [vmem:[#allocation6 + $0x5c0] sm:$0xf]
    %v333 = vld [vmem:[#allocation6 + $0x5c4] sm:$0xff]
    %v334 = vld [vmem:[#allocation6 + $0x5cc] sm:$0xf]
    %v335 = vld [vmem:[#allocation6 + $0x5d0] sm:$0xff]
    %v336 = vld [vmem:[#allocation6 + $0x5d8] sm:$0xf]
    %v337 = vld [vmem:[#allocation6 + $0x5dc] sm:$0xff]
    %v338 = vld [vmem:[#allocation6 + $0x5e4] sm:$0xf]
    %v339 = vld [vmem:[#allocation6 + $0x5e8] sm:$0xff]
    %v340 = vld [vmem:[#allocation6 + $0x5f0] sm:$0xf]
    %v341 = vld [vmem:[#allocation6 + $0x5f4] sm:$0xff]
    %v342 = vld [vmem:[#allocation6 + $0x5fc] sm:$0xf]
    %v351 = vunpack.c.l.b16 %v79
    %v352 = vunpack.c.h.b16 %v79
    %v353 = vunpack.c.l.b16 %v80
    %v354 = vunpack.c.h.b16 %v80
    %v355 = vunpack.c.l.b16 %v81
    %v356 = vunpack.c.h.b16 %v81
    %v357 = vunpack.c.l.b16 %v82
    %v358 = vunpack.c.h.b16 %v82
    %v359 = vunpack.c.l.b16 %v83
    %v360 = vunpack.c.h.b16 %v83
    %v361 = vunpack.c.l.b16 %v84
    %v362 = vunpack.c.h.b16 %v84
    %v363 = vunpack.c.l.b16 %v85
    %v364 = vunpack.c.h.b16 %v85
    %v365 = vunpack.c.l.b16 %v86
    %v366 = vunpack.c.h.b16 %v86
    %v367 = vpack.c.b16 %v359, %v351
    %v368 = vpack.c.b16 %v360, %v352
    %v369 = vpack.c.b16 %v361, %v353
    %v370 = vpack.c.b16 %v362, %v354
    %v371 = vpack.c.b16 %v363, %v355
    %v372 = vpack.c.b16 %v364, %v356
    %v373 = vpack.c.b16 %v365, %v357
    %v374 = vpack.c.b16 %v366, %v358
    %v639 = vunpack.c.l.b16 %v87
    %v640 = vunpack.c.h.b16 %v87
    %v641 = vunpack.c.l.b16 %v88
    %v642 = vunpack.c.l.b16 %v89
    %v643 = vunpack.c.h.b16 %v89
    %v644 = vunpack.c.l.b16 %v90
    %v645 = vunpack.c.l.b16 %v91
    %v646 = vunpack.c.h.b16 %v91
    %v647 = vunpack.c.l.b16 %v92
    %v648 = vunpack.c.l.b16 %v93
    %v649 = vunpack.c.h.b16 %v93
    %v650 = vunpack.c.l.b16 %v94
    %v651 = vunpack.c.l.b16 %v95
    %v652 = vunpack.c.h.b16 %v95
    %v653 = vunpack.c.l.b16 %v96
    %v654 = vunpack.c.l.b16 %v97
    %v655 = vunpack.c.h.b16 %v97
    %v656 = vunpack.c.l.b16 %v98
    %v657 = vunpack.c.l.b16 %v99
    %v658 = vunpack.c.h.b16 %v99
    %v659 = vunpack.c.l.b16 %v100
    %v660 = vunpack.c.l.b16 %v101
    %v661 = vunpack.c.h.b16 %v101
    %v662 = vunpack.c.l.b16 %v102
    %v663 = vunpack.c.l.b16 %v103
    %v664 = vunpack.c.h.b16 %v103
    %v665 = vunpack.c.l.b16 %v104
    %v666 = vunpack.c.l.b16 %v105
    %v667 = vunpack.c.h.b16 %v105
    %v668 = vunpack.c.l.b16 %v106
    %v669 = vunpack.c.l.b16 %v107
    %v670 = vunpack.c.h.b16 %v107
    %v671 = vunpack.c.l.b16 %v108
    %v672 = vunpack.c.l.b16 %v109
    %v673 = vunpack.c.h.b16 %v109
    %v674 = vunpack.c.l.b16 %v110
    %v675 = vunpack.c.l.b16 %v111
    %v676 = vunpack.c.h.b16 %v111
    %v677 = vunpack.c.l.b16 %v112
    %v678 = vunpack.c.l.b16 %v113
    %v679 = vunpack.c.h.b16 %v113
    %v680 = vunpack.c.l.b16 %v114
    %v681 = vunpack.c.l.b16 %v115
    %v682 = vunpack.c.h.b16 %v115
    %v683 = vunpack.c.l.b16 %v116
    %v684 = vunpack.c.l.b16 %v117
    %v685 = vunpack.c.h.b16 %v117
    %v686 = vunpack.c.l.b16 %v118
    %v687 = vunpack.c.l.b16 %v119
    %v688 = vunpack.c.h.b16 %v119
    %v689 = vunpack.c.l.b16 %v120
    %v690 = vunpack.c.l.b16 %v121
    %v691 = vunpack.c.h.b16 %v121
    %v692 = vunpack.c.l.b16 %v122
    %v693 = vunpack.c.l.b16 %v123
    %v694 = vunpack.c.h.b16 %v123
    %v695 = vunpack.c.l.b16 %v124
    %v696 = vunpack.c.l.b16 %v125
    %v697 = vunpack.c.h.b16 %v125
    %v698 = vunpack.c.l.b16 %v126
    %v699 = vunpack.c.l.b16 %v127
    %v700 = vunpack.c.h.b16 %v127
    %v701 = vunpack.c.l.b16 %v128
    %v702 = vunpack.c.l.b16 %v129
    %v703 = vunpack.c.h.b16 %v129
    %v704 = vunpack.c.l.b16 %v130
    %v705 = vunpack.c.l.b16 %v131
    %v706 = vunpack.c.h.b16 %v131
    %v707 = vunpack.c.l.b16 %v132
    %v708 = vunpack.c.l.b16 %v133
    %v709 = vunpack.c.h.b16 %v133
    %v710 = vunpack.c.l.b16 %v134
    %v711 = vunpack.c.l.b16 %v135
    %v712 = vunpack.c.h.b16 %v135
    %v713 = vunpack.c.l.b16 %v136
    %v714 = vunpack.c.l.b16 %v137
    %v715 = vunpack.c.h.b16 %v137
    %v716 = vunpack.c.l.b16 %v138
    %v717 = vunpack.c.l.b16 %v139
    %v718 = vunpack.c.h.b16 %v139
    %v719 = vunpack.c.l.b16 %v140
    %v720 = vunpack.c.l.b16 %v141
    %v721 = vunpack.c.h.b16 %v141
    %v722 = vunpack.c.l.b16 %v142
    %v723 = vunpack.c.l.b16 %v143
    %v724 = vunpack.c.h.b16 %v143
    %v725 = vunpack.c.l.b16 %v144
    %v726 = vunpack.c.l.b16 %v145
    %v727 = vunpack.c.h.b16 %v145
    %v728 = vunpack.c.l.b16 %v146
    %v729 = vunpack.c.l.b16 %v147
    %v730 = vunpack.c.h.b16 %v147
    %v731 = vunpack.c.l.b16 %v148
    %v732 = vunpack.c.l.b16 %v149
    %v733 = vunpack.c.h.b16 %v149
    %v734 = vunpack.c.l.b16 %v150
    %v735 = vunpack.c.l.b16 %v151
    %v736 = vunpack.c.h.b16 %v151
    %v737 = vunpack.c.l.b16 %v152
    %v738 = vunpack.c.l.b16 %v153
    %v739 = vunpack.c.h.b16 %v153
    %v740 = vunpack.c.l.b16 %v154
    %v741 = vunpack.c.l.b16 %v155
    %v742 = vunpack.c.h.b16 %v155
    %v743 = vunpack.c.l.b16 %v156
    %v744 = vunpack.c.l.b16 %v157
    %v745 = vunpack.c.h.b16 %v157
    %v746 = vunpack.c.l.b16 %v158
    %v747 = vunpack.c.l.b16 %v159
    %v748 = vunpack.c.h.b16 %v159
    %v749 = vunpack.c.l.b16 %v160
    %v750 = vunpack.c.l.b16 %v161
    %v751 = vunpack.c.h.b16 %v161
    %v752 = vunpack.c.l.b16 %v162
    %v753 = vunpack.c.l.b16 %v163
    %v754 = vunpack.c.h.b16 %v163
    %v755 = vunpack.c.l.b16 %v164
    %v756 = vunpack.c.l.b16 %v165
    %v757 = vunpack.c.h.b16 %v165
    %v758 = vunpack.c.l.b16 %v166
    %v759 = vunpack.c.l.b16 %v167
    %v760 = vunpack.c.h.b16 %v167
    %v761 = vunpack.c.l.b16 %v168
    %v762 = vunpack.c.l.b16 %v169
    %v763 = vunpack.c.h.b16 %v169
    %v764 = vunpack.c.l.b16 %v170
    %v765 = vunpack.c.l.b16 %v171
    %v766 = vunpack.c.h.b16 %v171
    %v767 = vunpack.c.l.b16 %v172
    %v768 = vunpack.c.l.b16 %v173
    %v769 = vunpack.c.h.b16 %v173
    %v770 = vunpack.c.l.b16 %v174
    %v771 = vunpack.c.l.b16 %v175
    %v772 = vunpack.c.h.b16 %v175
    %v773 = vunpack.c.l.b16 %v176
    %v774 = vunpack.c.l.b16 %v177
    %v775 = vunpack.c.h.b16 %v177
    %v776 = vunpack.c.l.b16 %v178
    %v777 = vunpack.c.l.b16 %v179
    %v778 = vunpack.c.h.b16 %v179
    %v779 = vunpack.c.l.b16 %v180
    %v780 = vunpack.c.l.b16 %v181
    %v781 = vunpack.c.h.b16 %v181
    %v782 = vunpack.c.l.b16 %v182
    %v783 = vunpack.c.l.b16 %v183
    %v784 = vunpack.c.h.b16 %v183
    %v785 = vunpack.c.l.b16 %v184
    %v786 = vunpack.c.l.b16 %v185
    %v787 = vunpack.c.h.b16 %v185
    %v788 = vunpack.c.l.b16 %v186
    %v789 = vunpack.c.l.b16 %v187
    %v790 = vunpack.c.h.b16 %v187
    %v791 = vunpack.c.l.b16 %v188
    %v792 = vunpack.c.l.b16 %v189
    %v793 = vunpack.c.h.b16 %v189
    %v794 = vunpack.c.l.b16 %v190
    %v795 = vunpack.c.l.b16 %v191
    %v796 = vunpack.c.h.b16 %v191
    %v797 = vunpack.c.l.b16 %v192
    %v798 = vunpack.c.l.b16 %v193
    %v799 = vunpack.c.h.b16 %v193
    %v800 = vunpack.c.l.b16 %v194
    %v801 = vunpack.c.l.b16 %v195
    %v802 = vunpack.c.h.b16 %v195
    %v803 = vunpack.c.l.b16 %v196
    %v804 = vunpack.c.l.b16 %v197
    %v805 = vunpack.c.h.b16 %v197
    %v806 = vunpack.c.l.b16 %v198
    %v807 = vunpack.c.l.b16 %v199
    %v808 = vunpack.c.h.b16 %v199
    %v809 = vunpack.c.l.b16 %v200
    %v810 = vunpack.c.l.b16 %v201
    %v811 = vunpack.c.h.b16 %v201
    %v812 = vunpack.c.l.b16 %v202
    %v813 = vunpack.c.l.b16 %v203
    %v814 = vunpack.c.h.b16 %v203
    %v815 = vunpack.c.l.b16 %v204
    %v816 = vunpack.c.l.b16 %v205
    %v817 = vunpack.c.h.b16 %v205
    %v818 = vunpack.c.l.b16 %v206
    %v819 = vunpack.c.l.b16 %v207
    %v820 = vunpack.c.h.b16 %v207
    %v821 = vunpack.c.l.b16 %v208
    %v822 = vunpack.c.l.b16 %v209
    %v823 = vunpack.c.h.b16 %v209
    %v824 = vunpack.c.l.b16 %v210
    %v825 = vunpack.c.l.b16 %v211
    %v826 = vunpack.c.h.b16 %v211
    %v827 = vunpack.c.l.b16 %v212
    %v828 = vunpack.c.l.b16 %v213
    %v829 = vunpack.c.h.b16 %v213
    %v830 = vunpack.c.l.b16 %v214
    %v831 = vunpack.c.l.b16 %v215
    %v832 = vunpack.c.h.b16 %v215
    %v833 = vunpack.c.l.b16 %v216
    %v834 = vunpack.c.l.b16 %v217
    %v835 = vunpack.c.h.b16 %v217
    %v836 = vunpack.c.l.b16 %v218
    %v837 = vunpack.c.l.b16 %v219
    %v838 = vunpack.c.h.b16 %v219
    %v839 = vunpack.c.l.b16 %v220
    %v840 = vunpack.c.l.b16 %v221
    %v841 = vunpack.c.h.b16 %v221
    %v842 = vunpack.c.l.b16 %v222
    %v843 = vunpack.c.l.b16 %v223
    %v844 = vunpack.c.h.b16 %v223
    %v845 = vunpack.c.l.b16 %v224
    %v846 = vunpack.c.l.b16 %v225
    %v847 = vunpack.c.h.b16 %v225
    %v848 = vunpack.c.l.b16 %v226
    %v849 = vunpack.c.l.b16 %v227
    %v850 = vunpack.c.h.b16 %v227
    %v851 = vunpack.c.l.b16 %v228
    %v852 = vunpack.c.l.b16 %v229
    %v853 = vunpack.c.h.b16 %v229
    %v854 = vunpack.c.l.b16 %v230
    %v855 = vunpack.c.l.b16 %v231
    %v856 = vunpack.c.h.b16 %v231
    %v857 = vunpack.c.l.b16 %v232
    %v858 = vunpack.c.l.b16 %v233
    %v859 = vunpack.c.h.b16 %v233
    %v860 = vunpack.c.l.b16 %v234
    %v861 = vunpack.c.l.b16 %v235
    %v862 = vunpack.c.h.b16 %v235
    %v863 = vunpack.c.l.b16 %v236
    %v864 = vunpack.c.l.b16 %v237
    %v865 = vunpack.c.h.b16 %v237
    %v866 = vunpack.c.l.b16 %v238
    %v867 = vunpack.c.l.b16 %v239
    %v868 = vunpack.c.h.b16 %v239
    %v869 = vunpack.c.l.b16 %v240
    %v870 = vunpack.c.l.b16 %v241
    %v871 = vunpack.c.h.b16 %v241
    %v872 = vunpack.c.l.b16 %v242
    %v873 = vunpack.c.l.b16 %v243
    %v874 = vunpack.c.h.b16 %v243
    %v875 = vunpack.c.l.b16 %v244
    %v876 = vunpack.c.l.b16 %v245
    %v877 = vunpack.c.h.b16 %v245
    %v878 = vunpack.c.l.b16 %v246
    %v879 = vunpack.c.l.b16 %v247
    %v880 = vunpack.c.h.b16 %v247
    %v881 = vunpack.c.l.b16 %v248
    %v882 = vunpack.c.l.b16 %v249
    %v883 = vunpack.c.h.b16 %v249
    %v884 = vunpack.c.l.b16 %v250
    %v885 = vunpack.c.l.b16 %v251
    %v886 = vunpack.c.h.b16 %v251
    %v887 = vunpack.c.l.b16 %v252
    %v888 = vunpack.c.l.b16 %v253
    %v889 = vunpack.c.h.b16 %v253
    %v890 = vunpack.c.l.b16 %v254
    %v891 = vunpack.c.l.b16 %v255
    %v892 = vunpack.c.h.b16 %v255
    %v893 = vunpack.c.l.b16 %v256
    %v894 = vunpack.c.l.b16 %v257
    %v895 = vunpack.c.h.b16 %v257
    %v896 = vunpack.c.l.b16 %v258
    %v897 = vunpack.c.l.b16 %v259
    %v898 = vunpack.c.h.b16 %v259
    %v899 = vunpack.c.l.b16 %v260
    %v900 = vunpack.c.l.b16 %v261
    %v901 = vunpack.c.h.b16 %v261
    %v902 = vunpack.c.l.b16 %v262
    %v903 = vunpack.c.l.b16 %v263
    %v904 = vunpack.c.h.b16 %v263
    %v905 = vunpack.c.l.b16 %v264
    %v906 = vunpack.c.l.b16 %v265
    %v907 = vunpack.c.h.b16 %v265
    %v908 = vunpack.c.l.b16 %v266
    %v909 = vunpack.c.l.b16 %v267
    %v910 = vunpack.c.h.b16 %v267
    %v911 = vunpack.c.l.b16 %v268
    %v912 = vunpack.c.l.b16 %v269
    %v913 = vunpack.c.h.b16 %v269
    %v914 = vunpack.c.l.b16 %v270
    %v915 = vunpack.c.l.b16 %v271
    %v916 = vunpack.c.h.b16 %v271
    %v917 = vunpack.c.l.b16 %v272
    %v918 = vunpack.c.l.b16 %v273
    %v919 = vunpack.c.h.b16 %v273
    %v920 = vunpack.c.l.b16 %v274
    %v921 = vunpack.c.l.b16 %v275
    %v922 = vunpack.c.h.b16 %v275
    %v923 = vunpack.c.l.b16 %v276
    %v924 = vunpack.c.l.b16 %v277
    %v925 = vunpack.c.h.b16 %v277
    %v926 = vunpack.c.l.b16 %v278
    %v927 = vunpack.c.l.b16 %v279
    %v928 = vunpack.c.h.b16 %v279
    %v929 = vunpack.c.l.b16 %v280
    %v930 = vunpack.c.l.b16 %v281
    %v931 = vunpack.c.h.b16 %v281
    %v932 = vunpack.c.l.b16 %v282
    %v933 = vunpack.c.l.b16 %v283
    %v934 = vunpack.c.h.b16 %v283
    %v935 = vunpack.c.l.b16 %v284
    %v936 = vunpack.c.l.b16 %v285
    %v937 = vunpack.c.h.b16 %v285
    %v938 = vunpack.c.l.b16 %v286
    %v939 = vunpack.c.l.b16 %v287
    %v940 = vunpack.c.h.b16 %v287
    %v941 = vunpack.c.l.b16 %v288
    %v942 = vunpack.c.l.b16 %v289
    %v943 = vunpack.c.h.b16 %v289
    %v944 = vunpack.c.l.b16 %v290
    %v945 = vunpack.c.l.b16 %v291
    %v946 = vunpack.c.h.b16 %v291
    %v947 = vunpack.c.l.b16 %v292
    %v948 = vunpack.c.l.b16 %v293
    %v949 = vunpack.c.h.b16 %v293
    %v950 = vunpack.c.l.b16 %v294
    %v951 = vunpack.c.l.b16 %v295
    %v952 = vunpack.c.h.b16 %v295
    %v953 = vunpack.c.l.b16 %v296
    %v954 = vunpack.c.l.b16 %v297
    %v955 = vunpack.c.h.b16 %v297
    %v956 = vunpack.c.l.b16 %v298
    %v957 = vunpack.c.l.b16 %v299
    %v958 = vunpack.c.h.b16 %v299
    %v959 = vunpack.c.l.b16 %v300
    %v960 = vunpack.c.l.b16 %v301
    %v961 = vunpack.c.h.b16 %v301
    %v962 = vunpack.c.l.b16 %v302
    %v963 = vunpack.c.l.b16 %v303
    %v964 = vunpack.c.h.b16 %v303
    %v965 = vunpack.c.l.b16 %v304
    %v966 = vunpack.c.l.b16 %v305
    %v967 = vunpack.c.h.b16 %v305
    %v968 = vunpack.c.l.b16 %v306
    %v969 = vunpack.c.l.b16 %v307
    %v970 = vunpack.c.h.b16 %v307
    %v971 = vunpack.c.l.b16 %v308
    %v972 = vunpack.c.l.b16 %v309
    %v973 = vunpack.c.h.b16 %v309
    %v974 = vunpack.c.l.b16 %v310
    %v975 = vunpack.c.l.b16 %v311
    %v976 = vunpack.c.h.b16 %v311
    %v977 = vunpack.c.l.b16 %v312
    %v978 = vunpack.c.l.b16 %v313
    %v979 = vunpack.c.h.b16 %v313
    %v980 = vunpack.c.l.b16 %v314
    %v981 = vunpack.c.l.b16 %v315
    %v982 = vunpack.c.h.b16 %v315
    %v983 = vunpack.c.l.b16 %v316
    %v984 = vunpack.c.l.b16 %v317
    %v985 = vunpack.c.h.b16 %v317
    %v986 = vunpack.c.l.b16 %v318
    %v987 = vunpack.c.l.b16 %v319
    %v988 = vunpack.c.h.b16 %v319
    %v989 = vunpack.c.l.b16 %v320
    %v990 = vunpack.c.l.b16 %v321
    %v991 = vunpack.c.h.b16 %v321
    %v992 = vunpack.c.l.b16 %v322
    %v993 = vunpack.c.l.b16 %v323
    %v994 = vunpack.c.h.b16 %v323
    %v995 = vunpack.c.l.b16 %v324
    %v996 = vunpack.c.l.b16 %v325
    %v997 = vunpack.c.h.b16 %v325
    %v998 = vunpack.c.l.b16 %v326
    %v999 = vunpack.c.l.b16 %v327
    %v1000 = vunpack.c.h.b16 %v327
    %v1001 = vunpack.c.l.b16 %v328
    %v1002 = vunpack.c.l.b16 %v329
    %v1003 = vunpack.c.h.b16 %v329
    %v1004 = vunpack.c.l.b16 %v330
    %v1005 = vunpack.c.l.b16 %v331
    %v1006 = vunpack.c.h.b16 %v331
    %v1007 = vunpack.c.l.b16 %v332
    %v1008 = vunpack.c.l.b16 %v333
    %v1009 = vunpack.c.h.b16 %v333
    %v1010 = vunpack.c.l.b16 %v334
    %v1011 = vunpack.c.l.b16 %v335
    %v1012 = vunpack.c.h.b16 %v335
    %v1013 = vunpack.c.l.b16 %v336
    %v1014 = vunpack.c.l.b16 %v337
    %v1015 = vunpack.c.h.b16 %v337
    %v1016 = vunpack.c.l.b16 %v338
    %v1017 = vunpack.c.l.b16 %v339
    %v1018 = vunpack.c.h.b16 %v339
    %v1019 = vunpack.c.l.b16 %v340
    %v1020 = vunpack.c.l.b16 %v341
    %v1021 = vunpack.c.h.b16 %v341
    %v1022 = vunpack.c.l.b16 %v342
    %v1023 = vpack.c.b16 %v642, %v639
    %v1024 = vpack.c.b16 %v643, %v640
    %v1025 = vpack.c.b16 %v644, %v641
    %v1026 = vpack.c.b16 %v648, %v645
    %v1027 = vpack.c.b16 %v649, %v646
    %v1028 = vpack.c.b16 %v650, %v647
    %v1029 = vpack.c.b16 %v654, %v651
    %v1030 = vpack.c.b16 %v655, %v652
    %v1031 = vpack.c.b16 %v656, %v653
    %v1032 = vpack.c.b16 %v660, %v657
    %v1033 = vpack.c.b16 %v661, %v658
    %v1034 = vpack.c.b16 %v662, %v659
    %v1035 = vpack.c.b16 %v666, %v663
    %v1036 = vpack.c.b16 %v667, %v664
    %v1037 = vpack.c.b16 %v668, %v665
    %v1038 = vpack.c.b16 %v672, %v669
    %v1039 = vpack.c.b16 %v673, %v670
    %v1040 = vpack.c.b16 %v674, %v671
    %v1041 = vpack.c.b16 %v678, %v675
    %v1042 = vpack.c.b16 %v679, %v676
    %v1043 = vpack.c.b16 %v680, %v677
    %v1044 = vpack.c.b16 %v684, %v681
    %v1045 = vpack.c.b16 %v685, %v682
    %v1046 = vpack.c.b16 %v686, %v683
    %v1047 = vpack.c.b16 %v690, %v687
    %v1048 = vpack.c.b16 %v691, %v688
    %v1049 = vpack.c.b16 %v692, %v689
    %v1050 = vpack.c.b16 %v696, %v693
    %v1051 = vpack.c.b16 %v697, %v694
    %v1052 = vpack.c.b16 %v698, %v695
    %v1053 = vpack.c.b16 %v702, %v699
    %v1054 = vpack.c.b16 %v703, %v700
    %v1055 = vpack.c.b16 %v704, %v701
    %v1056 = vpack.c.b16 %v708, %v705
    %v1057 = vpack.c.b16 %v709, %v706
    %v1058 = vpack.c.b16 %v710, %v707
    %v1059 = vpack.c.b16 %v714, %v711
    %v1060 = vpack.c.b16 %v715, %v712
    %v1061 = vpack.c.b16 %v716, %v713
    %v1062 = vpack.c.b16 %v720, %v717
    %v1063 = vpack.c.b16 %v721, %v718
    %v1064 = vpack.c.b16 %v722, %v719
    %v1065 = vpack.c.b16 %v726, %v723
    %v1066 = vpack.c.b16 %v727, %v724
    %v1067 = vpack.c.b16 %v728, %v725
    %v1068 = vpack.c.b16 %v732, %v729
    %v1069 = vpack.c.b16 %v733, %v730
    %v1070 = vpack.c.b16 %v734, %v731
    %v1071 = vpack.c.b16 %v738, %v735
    %v1072 = vpack.c.b16 %v739, %v736
    %v1073 = vpack.c.b16 %v740, %v737
    %v1074 = vpack.c.b16 %v744, %v741
    %v1075 = vpack.c.b16 %v745, %v742
    %v1076 = vpack.c.b16 %v746, %v743
    %v1077 = vpack.c.b16 %v750, %v747
    %v1078 = vpack.c.b16 %v751, %v748
    %v1079 = vpack.c.b16 %v752, %v749
    %v1080 = vpack.c.b16 %v756, %v753
    %v1081 = vpack.c.b16 %v757, %v754
    %v1082 = vpack.c.b16 %v758, %v755
    %v1083 = vpack.c.b16 %v762, %v759
    %v1084 = vpack.c.b16 %v763, %v760
    %v1085 = vpack.c.b16 %v764, %v761
    %v1086 = vpack.c.b16 %v768, %v765
    %v1087 = vpack.c.b16 %v769, %v766
    %v1088 = vpack.c.b16 %v770, %v767
    %v1089 = vpack.c.b16 %v774, %v771
    %v1090 = vpack.c.b16 %v775, %v772
    %v1091 = vpack.c.b16 %v776, %v773
    %v1092 = vpack.c.b16 %v780, %v777
    %v1093 = vpack.c.b16 %v781, %v778
    %v1094 = vpack.c.b16 %v782, %v779
    %v1095 = vpack.c.b16 %v786, %v783
    %v1096 = vpack.c.b16 %v787, %v784
    %v1097 = vpack.c.b16 %v788, %v785
    %v1098 = vpack.c.b16 %v792, %v789
    %v1099 = vpack.c.b16 %v793, %v790
    %v1100 = vpack.c.b16 %v794, %v791
    %v1101 = vpack.c.b16 %v798, %v795
    %v1102 = vpack.c.b16 %v799, %v796
    %v1103 = vpack.c.b16 %v800, %v797
    %v1104 = vpack.c.b16 %v804, %v801
    %v1105 = vpack.c.b16 %v805, %v802
    %v1106 = vpack.c.b16 %v806, %v803
    %v1107 = vpack.c.b16 %v810, %v807
    %v1108 = vpack.c.b16 %v811, %v808
    %v1109 = vpack.c.b16 %v812, %v809
    %v1110 = vpack.c.b16 %v816, %v813
    %v1111 = vpack.c.b16 %v817, %v814
    %v1112 = vpack.c.b16 %v818, %v815
    %v1113 = vpack.c.b16 %v822, %v819
    %v1114 = vpack.c.b16 %v823, %v820
    %v1115 = vpack.c.b16 %v824, %v821
    %v1116 = vpack.c.b16 %v828, %v825
    %v1117 = vpack.c.b16 %v829, %v826
    %v1118 = vpack.c.b16 %v830, %v827
    %v1119 = vpack.c.b16 %v834, %v831
    %v1120 = vpack.c.b16 %v835, %v832
    %v1121 = vpack.c.b16 %v836, %v833
    %v1122 = vpack.c.b16 %v840, %v837
    %v1123 = vpack.c.b16 %v841, %v838
    %v1124 = vpack.c.b16 %v842, %v839
    %v1125 = vpack.c.b16 %v846, %v843
    %v1126 = vpack.c.b16 %v847, %v844
    %v1127 = vpack.c.b16 %v848, %v845
    %v1128 = vpack.c.b16 %v852, %v849
    %v1129 = vpack.c.b16 %v853, %v850
    %v1130 = vpack.c.b16 %v854, %v851
    %v1131 = vpack.c.b16 %v858, %v855
    %v1132 = vpack.c.b16 %v859, %v856
    %v1133 = vpack.c.b16 %v860, %v857
    %v1134 = vpack.c.b16 %v864, %v861
    %v1135 = vpack.c.b16 %v865, %v862
    %v1136 = vpack.c.b16 %v866, %v863
    %v1137 = vpack.c.b16 %v870, %v867
    %v1138 = vpack.c.b16 %v871, %v868
    %v1139 = vpack.c.b16 %v872, %v869
    %v1140 = vpack.c.b16 %v876, %v873
    %v1141 = vpack.c.b16 %v877, %v874
    %v1142 = vpack.c.b16 %v878, %v875
    %v1143 = vpack.c.b16 %v882, %v879
    %v1144 = vpack.c.b16 %v883, %v880
    %v1145 = vpack.c.b16 %v884, %v881
    %v1146 = vpack.c.b16 %v888, %v885
    %v1147 = vpack.c.b16 %v889, %v886
    %v1148 = vpack.c.b16 %v890, %v887
    %v1149 = vpack.c.b16 %v894, %v891
    %v1150 = vpack.c.b16 %v895, %v892
    %v1151 = vpack.c.b16 %v896, %v893
    %v1152 = vpack.c.b16 %v900, %v897
    %v1153 = vpack.c.b16 %v901, %v898
    %v1154 = vpack.c.b16 %v902, %v899
    %v1155 = vpack.c.b16 %v906, %v903
    %v1156 = vpack.c.b16 %v907, %v904
    %v1157 = vpack.c.b16 %v908, %v905
    %v1158 = vpack.c.b16 %v912, %v909
    %v1159 = vpack.c.b16 %v913, %v910
    %v1160 = vpack.c.b16 %v914, %v911
    %v1161 = vpack.c.b16 %v918, %v915
    %v1162 = vpack.c.b16 %v919, %v916
    %v1163 = vpack.c.b16 %v920, %v917
    %v1164 = vpack.c.b16 %v924, %v921
    %v1165 = vpack.c.b16 %v925, %v922
    %v1166 = vpack.c.b16 %v926, %v923
    %v1167 = vpack.c.b16 %v930, %v927
    %v1168 = vpack.c.b16 %v931, %v928
    %v1169 = vpack.c.b16 %v932, %v929
    %v1170 = vpack.c.b16 %v936, %v933
    %v1171 = vpack.c.b16 %v937, %v934
    %v1172 = vpack.c.b16 %v938, %v935
    %v1173 = vpack.c.b16 %v942, %v939
    %v1174 = vpack.c.b16 %v943, %v940
    %v1175 = vpack.c.b16 %v944, %v941
    %v1176 = vpack.c.b16 %v948, %v945
    %v1177 = vpack.c.b16 %v949, %v946
    %v1178 = vpack.c.b16 %v950, %v947
    %v1179 = vpack.c.b16 %v954, %v951
    %v1180 = vpack.c.b16 %v955, %v952
    %v1181 = vpack.c.b16 %v956, %v953
    %v1182 = vpack.c.b16 %v960, %v957
    %v1183 = vpack.c.b16 %v961, %v958
    %v1184 = vpack.c.b16 %v962, %v959
    %v1185 = vpack.c.b16 %v966, %v963
    %v1186 = vpack.c.b16 %v967, %v964
    %v1187 = vpack.c.b16 %v968, %v965
    %v1188 = vpack.c.b16 %v972, %v969
    %v1189 = vpack.c.b16 %v973, %v970
    %v1190 = vpack.c.b16 %v974, %v971
    %v1191 = vpack.c.b16 %v978, %v975
    %v1192 = vpack.c.b16 %v979, %v976
    %v1193 = vpack.c.b16 %v980, %v977
    %v1194 = vpack.c.b16 %v984, %v981
    %v1195 = vpack.c.b16 %v985, %v982
    %v1196 = vpack.c.b16 %v986, %v983
    %v1197 = vpack.c.b16 %v990, %v987
    %v1198 = vpack.c.b16 %v991, %v988
    %v1199 = vpack.c.b16 %v992, %v989
    %v1200 = vpack.c.b16 %v996, %v993
    %v1201 = vpack.c.b16 %v997, %v994
    %v1202 = vpack.c.b16 %v998, %v995
    %v1203 = vpack.c.b16 %v1002, %v999
    %v1204 = vpack.c.b16 %v1003, %v1000
    %v1205 = vpack.c.b16 %v1004, %v1001
    %v1206 = vpack.c.b16 %v1008, %v1005
    %v1207 = vpack.c.b16 %v1009, %v1006
    %v1208 = vpack.c.b16 %v1010, %v1007
    %v1209 = vpack.c.b16 %v1014, %v1011
    %v1210 = vpack.c.b16 %v1015, %v1012
    %v1211 = vpack.c.b16 %v1016, %v1013
    %v1212 = vpack.c.b16 %v1020, %v1017
    %v1213 = vpack.c.b16 %v1021, %v1018
    %v1214 = vpack.c.b16 %v1022, %v1019
    %1407 = vmatprep.subr.bf16.mxu0 %v1045
    %1408 = vmatpush1.bf16.msra.mxu0 %v1044
    %1409 = vmatprep.subr.bf16.mxu0 %v1042
    %1410 = vmatpush1.bf16.msra.mxu0 %v1041
    %1411 = vmatprep.subr.bf16.mxu0 %v1039
    %1412 = vmatpush1.bf16.msra.mxu0 %v1038
    %1413 = vmatprep.subr.bf16.mxu0 %v1036
    %1414 = vmatpush1.bf16.msra.mxu0 %v1035
    %1415 = vmatprep.subr.bf16.mxu0 %v1033
    %1416 = vmatpush1.bf16.msra.mxu0 %v1032
    %1417 = vmatprep.subr.bf16.mxu0 %v1030
    %1418 = vmatpush1.bf16.msra.mxu0 %v1029
    %1419 = vmatprep.subr.bf16.mxu0 %v1027
    %1420 = vmatpush1.bf16.msra.mxu0 %v1026
    %1421 = vmatprep.subr.bf16.mxu0 %v1024
    %1422 = vmatpush1.bf16.msra.mxu0 %v1023
    %1423 = vmatprep.subr.bf16.mxu0 %v1069
    %1424 = vmatpush2.bf16.msra.mxu0 %v1068
    %1425 = vmatprep.subr.bf16.mxu0 %v1066
    %1426 = vmatpush2.bf16.msra.mxu0 %v1065
    %1427 = vmatprep.subr.bf16.mxu0 %v1063
    %1428 = vmatpush2.bf16.msra.mxu0 %v1062
    %1429 = vmatprep.subr.bf16.mxu0 %v1060
    %1430 = vmatpush2.bf16.msra.mxu0 %v1059
    %1431 = vmatprep.subr.bf16.mxu0 %v1057
    %1432 = vmatpush2.bf16.msra.mxu0 %v1056
    %1433 = vmatprep.subr.bf16.mxu0 %v1054
    %1434 = vmatpush2.bf16.msra.mxu0 %v1053
    %1435 = vmatprep.subr.bf16.mxu0 %v1051
    %1436 = vmatpush2.bf16.msra.mxu0 %v1050
    %1437 = vmatprep.subr.bf16.mxu0 %v1048
    %1438 = vmatpush2.bf16.msra.mxu0 %v1047
    %1439 = vmatprep.mubr.bf16.mxu0 %v368
    %1440 = vmatmul.mubr.bf16.gmra.mxu0 %v367
    %v1441 = vpop.f32.mrf.mxu0
    %v1442 = vadd.f32 0.0, %v1441
    %v1443 = vpop.f32.mrf.mxu0
    %v1444 = vadd.f32 0.0, %v1443
    %v1445 = vpop.f32.mrf.mxu0
    %v1446 = vadd.f32 0.0, %v1445
    %v1447 = vpop.f32.mrf.mxu0
    %v1448 = vadd.f32 0.0, %v1447
    %1449 = vdwg.mxu0
    %1450 = vmatprep.subr.bf16.mxu0 %v1093
    %1451 = vmatpush1.bf16.msra.mxu0 %v1092
    %1452 = vmatprep.subr.bf16.mxu0 %v1090
    %1453 = vmatpush1.bf16.msra.mxu0 %v1089
    %1454 = vmatprep.subr.bf16.mxu0 %v1087
    %1455 = vmatpush1.bf16.msra.mxu0 %v1086
    %1456 = vmatprep.subr.bf16.mxu0 %v1084
    %1457 = vmatpush1.bf16.msra.mxu0 %v1083
    %1458 = vmatprep.subr.bf16.mxu0 %v1081
    %1459 = vmatpush1.bf16.msra.mxu0 %v1080
    %1460 = vmatprep.subr.bf16.mxu0 %v1078
    %1461 = vmatpush1.bf16.msra.mxu0 %v1077
    %1462 = vmatprep.subr.bf16.mxu0 %v1075
    %1463 = vmatpush1.bf16.msra.mxu0 %v1074
    %1464 = vmatprep.subr.bf16.mxu0 %v1072
    %1465 = vmatpush1.bf16.msra.mxu0 %v1071
    %1466 = vmatprep.subr.bf16.mxu0 %v1117
    %1467 = vmatpush2.bf16.msra.mxu0 %v1116
    %1468 = vmatprep.subr.bf16.mxu0 %v1114
    %1469 = vmatpush2.bf16.msra.mxu0 %v1113
    %1470 = vmatprep.subr.bf16.mxu0 %v1111
    %1471 = vmatpush2.bf16.msra.mxu0 %v1110
    %1472 = vmatprep.subr.bf16.mxu0 %v1108
    %1473 = vmatpush2.bf16.msra.mxu0 %v1107
    %1474 = vmatprep.subr.bf16.mxu0 %v1105
    %1475 = vmatpush2.bf16.msra.mxu0 %v1104
    %1476 = vmatprep.subr.bf16.mxu0 %v1102
    %1477 = vmatpush2.bf16.msra.mxu0 %v1101
    %1478 = vmatprep.subr.bf16.mxu0 %v1099
    %1479 = vmatpush2.bf16.msra.mxu0 %v1098
    %1480 = vmatprep.subr.bf16.mxu0 %v1096
    %1481 = vmatpush2.bf16.msra.mxu0 %v1095
    %1482 = vmatprep.mubr.bf16.mxu0 %v370
    %1483 = vmatmul.mubr.bf16.gmra.mxu0 %v369
    %v1484 = vpop.f32.mrf.mxu0
    %v1485 = vadd.f32 %v1442, %v1484
    %v1486 = vpop.f32.mrf.mxu0
    %v1487 = vadd.f32 %v1444, %v1486
    %v1488 = vpop.f32.mrf.mxu0
    %v1489 = vadd.f32 %v1446, %v1488
    %v1490 = vpop.f32.mrf.mxu0
    %v1491 = vadd.f32 %v1448, %v1490
    %1492 = vdwg.mxu0
    %1493 = vmatprep.subr.bf16.mxu0 %v1141
    %1494 = vmatpush1.bf16.msra.mxu0 %v1140
    %1495 = vmatprep.subr.bf16.mxu0 %v1138
    %1496 = vmatpush1.bf16.msra.mxu0 %v1137
    %1497 = vmatprep.subr.bf16.mxu0 %v1135
    %1498 = vmatpush1.bf16.msra.mxu0 %v1134
    %1499 = vmatprep.subr.bf16.mxu0 %v1132
    %1500 = vmatpush1.bf16.msra.mxu0 %v1131
    %1501 = vmatprep.subr.bf16.mxu0 %v1129
    %1502 = vmatpush1.bf16.msra.mxu0 %v1128
    %1503 = vmatprep.subr.bf16.mxu0 %v1126
    %1504 = vmatpush1.bf16.msra.mxu0 %v1125
    %1505 = vmatprep.subr.bf16.mxu0 %v1123
    %1506 = vmatpush1.bf16.msra.mxu0 %v1122
    %1507 = vmatprep.subr.bf16.mxu0 %v1120
    %1508 = vmatpush1.bf16.msra.mxu0 %v1119
    %1509 = vmatprep.subr.bf16.mxu0 %v1165
    %1510 = vmatpush2.bf16.msra.mxu0 %v1164
    %1511 = vmatprep.subr.bf16.mxu0 %v1162
    %1512 = vmatpush2.bf16.msra.mxu0 %v1161
    %1513 = vmatprep.subr.bf16.mxu0 %v1159
    %1514 = vmatpush2.bf16.msra.mxu0 %v1158
    %1515 = vmatprep.subr.bf16.mxu0 %v1156
    %1516 = vmatpush2.bf16.msra.mxu0 %v1155
    %1517 = vmatprep.subr.bf16.mxu0 %v1153
    %1518 = vmatpush2.bf16.msra.mxu0 %v1152
    %1519 = vmatprep.subr.bf16.mxu0 %v1150
    %1520 = vmatpush2.bf16.msra.mxu0 %v1149
    %1521 = vmatprep.subr.bf16.mxu0 %v1147
    %1522 = vmatpush2.bf16.msra.mxu0 %v1146
    %1523 = vmatprep.subr.bf16.mxu0 %v1144
    %1524 = vmatpush2.bf16.msra.mxu0 %v1143
    %1525 = vmatprep.mubr.bf16.mxu0 %v372
    %1526 = vmatmul.mubr.bf16.gmra.mxu0 %v371
    %v1527 = vpop.f32.mrf.mxu0
    %v1528 = vadd.f32 %v1485, %v1527
    %v1529 = vpop.f32.mrf.mxu0
    %v1530 = vadd.f32 %v1487, %v1529
    %v1531 = vpop.f32.mrf.mxu0
    %v1532 = vadd.f32 %v1489, %v1531
    %v1533 = vpop.f32.mrf.mxu0
    %v1534 = vadd.f32 %v1491, %v1533
    %1535 = vdwg.mxu0
    %1536 = vmatprep.subr.bf16.mxu0 %v1189
    %1537 = vmatpush1.bf16.msra.mxu0 %v1188
    %1538 = vmatprep.subr.bf16.mxu0 %v1186
    %1539 = vmatpush1.bf16.msra.mxu0 %v1185
    %1540 = vmatprep.subr.bf16.mxu0 %v1183
    %1541 = vmatpush1.bf16.msra.mxu0 %v1182
    %1542 = vmatprep.subr.bf16.mxu0 %v1180
    %1543 = vmatpush1.bf16.msra.mxu0 %v1179
    %1544 = vmatprep.subr.bf16.mxu0 %v1177
    %1545 = vmatpush1.bf16.msra.mxu0 %v1176
    %1546 = vmatprep.subr.bf16.mxu0 %v1174
    %1547 = vmatpush1.bf16.msra.mxu0 %v1173
    %1548 = vmatprep.subr.bf16.mxu0 %v1171
    %1549 = vmatpush1.bf16.msra.mxu0 %v1170
    %1550 = vmatprep.subr.bf16.mxu0 %v1168
    %1551 = vmatpush1.bf16.msra.mxu0 %v1167
    %1552 = vmatprep.subr.bf16.mxu0 %v1213
    %1553 = vmatpush2.bf16.msra.mxu0 %v1212
    %1554 = vmatprep.subr.bf16.mxu0 %v1210
    %1555 = vmatpush2.bf16.msra.mxu0 %v1209
    %1556 = vmatprep.subr.bf16.mxu0 %v1207
    %1557 = vmatpush2.bf16.msra.mxu0 %v1206
    %1558 = vmatprep.subr.bf16.mxu0 %v1204
    %1559 = vmatpush2.bf16.msra.mxu0 %v1203
    %1560 = vmatprep.subr.bf16.mxu0 %v1201
    %1561 = vmatpush2.bf16.msra.mxu0 %v1200
    %1562 = vmatprep.subr.bf16.mxu0 %v1198
    %1563 = vmatpush2.bf16.msra.mxu0 %v1197
    %1564 = vmatprep.subr.bf16.mxu0 %v1195
    %1565 = vmatpush2.bf16.msra.mxu0 %v1194
    %1566 = vmatprep.subr.bf16.mxu0 %v1192
    %1567 = vmatpush2.bf16.msra.mxu0 %v1191
    %1568 = vmatprep.mubr.bf16.mxu0 %v374
    %1569 = vmatmul.mubr.bf16.gmra.mxu0 %v373
    %v1570 = vpop.f32.mrf.mxu0
    %v1571 = vadd.f32 %v1528, %v1570
    %v1572 = vpop.f32.mrf.mxu0
    %v1573 = vadd.f32 %v1530, %v1572
    %v1574 = vpop.f32.mrf.mxu0
    %v1575 = vadd.f32 %v1532, %v1574
    %v1576 = vpop.f32.mrf.mxu0
    %v1577 = vadd.f32 %v1534, %v1576
    %1578 = vdwg.mxu0
    %1579 = vmatprep.subr.bf16.mxu0 0
    %1580 = vmatpush1.bf16.msra.mxu0 %v1046
    %1581 = vmatprep.subr.bf16.mxu0 0
    %1582 = vmatpush1.bf16.msra.mxu0 %v1043
    %1583 = vmatprep.subr.bf16.mxu0 0
    %1584 = vmatpush1.bf16.msra.mxu0 %v1040
    %1585 = vmatprep.subr.bf16.mxu0 0
    %1586 = vmatpush1.bf16.msra.mxu0 %v1037
    %1587 = vmatprep.subr.bf16.mxu0 0
    %1588 = vmatpush1.bf16.msra.mxu0 %v1034
    %1589 = vmatprep.subr.bf16.mxu0 0
    %1590 = vmatpush1.bf16.msra.mxu0 %v1031
    %1591 = vmatprep.subr.bf16.mxu0 0
    %1592 = vmatpush1.bf16.msra.mxu0 %v1028
    %1593 = vmatprep.subr.bf16.mxu0 0
    %1594 = vmatpush1.bf16.msra.mxu0 %v1025
    %1595 = vmatprep.subr.bf16.mxu0 0
    %1596 = vmatpush2.bf16.msra.mxu0 %v1070
    %1597 = vmatprep.subr.bf16.mxu0 0
    %1598 = vmatpush2.bf16.msra.mxu0 %v1067
    %1599 = vmatprep.subr.bf16.mxu0 0
    %1600 = vmatpush2.bf16.msra.mxu0 %v1064
    %1601 = vmatprep.subr.bf16.mxu0 0
    %1602 = vmatpush2.bf16.msra.mxu0 %v1061
    %1603 = vmatprep.subr.bf16.mxu0 0
    %1604 = vmatpush2.bf16.msra.mxu0 %v1058
    %1605 = vmatprep.subr.bf16.mxu0 0
    %1606 = vmatpush2.bf16.msra.mxu0 %v1055
    %1607 = vmatprep.subr.bf16.mxu0 0
    %1608 = vmatpush2.bf16.msra.mxu0 %v1052
    %1609 = vmatprep.subr.bf16.mxu0 0
    %1610 = vmatpush2.bf16.msra.mxu0 %v1049
    %1611 = vmatprep.mubr.bf16.mxu0 %v368
    %1612 = vmatmul.mubr.bf16.gmra.mxu0 %v367
    %v1613 = vpop.f32.mrf.mxu0
    %v1614 = vadd.f32 0.0, %v1613
    %v1615 = vpop.f32.mrf.mxu0
    %v1616 = vpop.f32.mrf.mxu0
    %v1617 = vadd.f32 0.0, %v1616
    %v1618 = vpop.f32.mrf.mxu0
    %1619 = vdwg.mxu0
    %1620 = vmatprep.subr.bf16.mxu0 0
    %1621 = vmatpush1.bf16.msra.mxu0 %v1094
    %1622 = vmatprep.subr.bf16.mxu0 0
    %1623 = vmatpush1.bf16.msra.mxu0 %v1091
    %1624 = vmatprep.subr.bf16.mxu0 0
    %1625 = vmatpush1.bf16.msra.mxu0 %v1088
    %1626 = vmatprep.subr.bf16.mxu0 0
    %1627 = vmatpush1.bf16.msra.mxu0 %v1085
    %1628 = vmatprep.subr.bf16.mxu0 0
    %1629 = vmatpush1.bf16.msra.mxu0 %v1082
    %1630 = vmatprep.subr.bf16.mxu0 0
    %1631 = vmatpush1.bf16.msra.mxu0 %v1079
    %1632 = vmatprep.subr.bf16.mxu0 0
    %1633 = vmatpush1.bf16.msra.mxu0 %v1076
    %1634 = vmatprep.subr.bf16.mxu0 0
    %1635 = vmatpush1.bf16.msra.mxu0 %v1073
    %1636 = vmatprep.subr.bf16.mxu0 0
    %1637 = vmatpush2.bf16.msra.mxu0 %v1118
    %1638 = vmatprep.subr.bf16.mxu0 0
    %1639 = vmatpush2.bf16.msra.mxu0 %v1115
    %1640 = vmatprep.subr.bf16.mxu0 0
    %1641 = vmatpush2.bf16.msra.mxu0 %v1112
    %1642 = vmatprep.subr.bf16.mxu0 0
    %1643 = vmatpush2.bf16.msra.mxu0 %v1109
    %1644 = vmatprep.subr.bf16.mxu0 0
    %1645 = vmatpush2.bf16.msra.mxu0 %v1106
    %1646 = vmatprep.subr.bf16.mxu0 0
    %1647 = vmatpush2.bf16.msra.mxu0 %v1103
    %1648 = vmatprep.subr.bf16.mxu0 0
    %1649 = vmatpush2.bf16.msra.mxu0 %v1100
    %1650 = vmatprep.subr.bf16.mxu0 0
    %1651 = vmatpush2.bf16.msra.mxu0 %v1097
    %1652 = vmatprep.mubr.bf16.mxu0 %v370
    %1653 = vmatmul.mubr.bf16.gmra.mxu0 %v369
    %v1654 = vpop.f32.mrf.mxu0
    %v1655 = vadd.f32 %v1614, %v1654
    %v1656 = vpop.f32.mrf.mxu0
    %v1657 = vpop.f32.mrf.mxu0
    %v1658 = vadd.f32 %v1617, %v1657
    %v1659 = vpop.f32.mrf.mxu0
    %1660 = vdwg.mxu0
    %1661 = vmatprep.subr.bf16.mxu0 0
    %1662 = vmatpush1.bf16.msra.mxu0 %v1142
    %1663 = vmatprep.subr.bf16.mxu0 0
    %1664 = vmatpush1.bf16.msra.mxu0 %v1139
    %1665 = vmatprep.subr.bf16.mxu0 0
    %1666 = vmatpush1.bf16.msra.mxu0 %v1136
    %1667 = vmatprep.subr.bf16.mxu0 0
    %1668 = vmatpush1.bf16.msra.mxu0 %v1133
    %1669 = vmatprep.subr.bf16.mxu0 0
    %1670 = vmatpush1.bf16.msra.mxu0 %v1130
    %1671 = vmatprep.subr.bf16.mxu0 0
    %1672 = vmatpush1.bf16.msra.mxu0 %v1127
    %1673 = vmatprep.subr.bf16.mxu0 0
    %1674 = vmatpush1.bf16.msra.mxu0 %v1124
    %1675 = vmatprep.subr.bf16.mxu0 0
    %1676 = vmatpush1.bf16.msra.mxu0 %v1121
    %1677 = vmatprep.subr.bf16.mxu0 0
    %1678 = vmatpush2.bf16.msra.mxu0 %v1166
    %1679 = vmatprep.subr.bf16.mxu0 0
    %1680 = vmatpush2.bf16.msra.mxu0 %v1163
    %1681 = vmatprep.subr.bf16.mxu0 0
    %1682 = vmatpush2.bf16.msra.mxu0 %v1160
    %1683 = vmatprep.subr.bf16.mxu0 0
    %1684 = vmatpush2.bf16.msra.mxu0 %v1157
    %1685 = vmatprep.subr.bf16.mxu0 0
    %1686 = vmatpush2.bf16.msra.mxu0 %v1154
    %1687 = vmatprep.subr.bf16.mxu0 0
    %1688 = vmatpush2.bf16.msra.mxu0 %v1151
    %1689 = vmatprep.subr.bf16.mxu0 0
    %1690 = vmatpush2.bf16.msra.mxu0 %v1148
    %1691 = vmatprep.subr.bf16.mxu0 0
    %1692 = vmatpush2.bf16.msra.mxu0 %v1145
    %1693 = vmatprep.mubr.bf16.mxu0 %v372
    %1694 = vmatmul.mubr.bf16.gmra.mxu0 %v371
    %v1695 = vpop.f32.mrf.mxu0
    %v1696 = vadd.f32 %v1655, %v1695
    %v1697 = vpop.f32.mrf.mxu0
    %v1698 = vpop.f32.mrf.mxu0
    %v1699 = vadd.f32 %v1658, %v1698
    %v1700 = vpop.f32.mrf.mxu0
    %1701 = vdwg.mxu0
    %1702 = vmatprep.subr.bf16.mxu0 0
    %1703 = vmatpush1.bf16.msra.mxu0 %v1190
    %1704 = vmatprep.subr.bf16.mxu0 0
    %1705 = vmatpush1.bf16.msra.mxu0 %v1187
    %1706 = vmatprep.subr.bf16.mxu0 0
    %1707 = vmatpush1.bf16.msra.mxu0 %v1184
    %1708 = vmatprep.subr.bf16.mxu0 0
    %1709 = vmatpush1.bf16.msra.mxu0 %v1181
    %1710 = vmatprep.subr.bf16.mxu0 0
    %1711 = vmatpush1.bf16.msra.mxu0 %v1178
    %1712 = vmatprep.subr.bf16.mxu0 0
    %1713 = vmatpush1.bf16.msra.mxu0 %v1175
    %1714 = vmatprep.subr.bf16.mxu0 0
    %1715 = vmatpush1.bf16.msra.mxu0 %v1172
    %1716 = vmatprep.subr.bf16.mxu0 0
    %1717 = vmatpush1.bf16.msra.mxu0 %v1169
    %1718 = vmatprep.subr.bf16.mxu0 0
    %1719 = vmatpush2.bf16.msra.mxu0 %v1214
    %1720 = vmatprep.subr.bf16.mxu0 0
    %1721 = vmatpush2.bf16.msra.mxu0 %v1211
    %1722 = vmatprep.subr.bf16.mxu0 0
    %1723 = vmatpush2.bf16.msra.mxu0 %v1208
    %1724 = vmatprep.subr.bf16.mxu0 0
    %1725 = vmatpush2.bf16.msra.mxu0 %v1205
    %1726 = vmatprep.subr.bf16.mxu0 0
    %1727 = vmatpush2.bf16.msra.mxu0 %v1202
    %1728 = vmatprep.subr.bf16.mxu0 0
    %1729 = vmatpush2.bf16.msra.mxu0 %v1199
    %1730 = vmatprep.subr.bf16.mxu0 0
    %1731 = vmatpush2.bf16.msra.mxu0 %v1196
    %1732 = vmatprep.subr.bf16.mxu0 0
    %1733 = vmatpush2.bf16.msra.mxu0 %v1193
    %1734 = vmatprep.mubr.bf16.mxu0 %v374
    %1735 = vmatmul.mubr.bf16.gmra.mxu0 %v373
    %v1736 = vpop.f32.mrf.mxu0
    %v1737 = vadd.f32 %v1696, %v1736
    %v1738 = vpop.f32.mrf.mxu0
    %v1739 = vpop.f32.mrf.mxu0
    %v1740 = vadd.f32 %v1699, %v1739
    %v1741 = vpop.f32.mrf.mxu0
    %1742 = vdwg.mxu0
    %v1743 = vadd.f32 %v73, %v1571
    %v1744 = vadd.f32 %v74, %v1573
    %v1745 = vadd.f32 %v75, %v1737
    %v1746 = vadd.f32 %v76, %v1575
    %v1747 = vadd.f32 %v77, %v1577
    %v1748 = vadd.f32 %v78, %v1740
    %1749 = vst [vmem:[#allocation2] sm:$0xff] %v1743
    %1750 = vst [vmem:[#allocation2 + $0x8] sm:$0xff] %v1744
    %1751 = vst [vmem:[#allocation2 + $0x10] sm:$0xff] %v1745
    %1752 = vst [vmem:[#allocation2 + $0x18] sm:$0xff] %v1746
    %1753 = vst [vmem:[#allocation2 + $0x20] sm:$0xff] %v1747
    %1754 = vst [vmem:[#allocation2 + $0x28] sm:$0xff] %v1748
    // Predicated region
    $region38: #{tpu_custom_call.1} parent=1 // pred_check
      %p1755 = pneg %p63
    $region39: #{tpu_custom_call.1} parent=1 // pred_check_branch
      %1757 = sbr.rel (%p1755) target = $region41
    $region40: #{tpu_custom_call.1} parent=1 // pred_region
      %v1758 = vld [vmem:[#allocation2] sm:$0xff]
      %v1759 = vld [vmem:[#allocation2 + $0x8] sm:$0xff]
      %v1760 = vld [vmem:[#allocation2 + $0x10] sm:$0xff]
      %v1761 = vld [vmem:[#allocation2 + $0x18] sm:$0xff]
      %v1762 = vld [vmem:[#allocation2 + $0x20] sm:$0xff]
      %v1763 = vld [vmem:[#allocation2 + $0x28] sm:$0xff]
      %v1764 = vld [vmem:[%s2] sm:$0x7]
      %v1766 = vlaneseq
      %v1767 = vshrl.u32 %v1766, 7
      %v1768 = vsub.s32 0, %v1767
      %v1769 = vrot.slane %v1764, %v1768
      %v1770 = vlaneseq
      %v1771 = vshrl.u32 %v1770, 7
      %v1772 = vsub.s32 1, %v1771
      %v1773 = vrot.slane %v1764, %v1772
      %v1774 = vlaneseq
      %v1775 = vshrl.u32 %v1774, 7
      %v1776 = vsub.s32 2, %v1775
      %v1777 = vrot.slane %v1764, %v1776
      %v1781 = vadd.f32 %v1758, %v1769
      %v1782 = vadd.f32 %v1759, %v1773
      %v1783 = vadd.f32 %v1760, %v1777
      %v1784 = vadd.f32 %v1761, %v1769
      %v1785 = vadd.f32 %v1762, %v1773
      %v1786 = vadd.f32 %v1763, %v1777
      %v1787 = vmax.f32 %v1781, 0.0
      %v1788 = vmax.f32 %v1782, 0.0
      %v1789 = vmax.f32 %v1783, 0.0
      %v1790 = vmax.f32 %v1784, 0.0
      %v1791 = vmax.f32 %v1785, 0.0
      %v1792 = vmax.f32 %v1786, 0.0
      %v1793 = vpack.c.bf16 %v1790, %v1787
      %v1794 = vpack.c.bf16 %v1791, %v1788
      %v1795 = vpack.c.bf16 %v1792, %v1789
      %v1796 = vld [vmem:[#allocation8] sm:$0xf]
      %v1797 = vld [vmem:[#allocation8 + $0x4] sm:$0xf]
      %v1798 = vld [vmem:[#allocation8 + $0x8] sm:$0xf]
      %v1799 = vld [vmem:[#allocation8 + $0xc] sm:$0xf]
      %v1800 = vld [vmem:[#allocation8 + $0x10] sm:$0xf]
      %v1801 = vld [vmem:[#allocation8 + $0x14] sm:$0xf]
      %v1802 = vld [vmem:[#allocation8 + $0x18] sm:$0xf]
      %v1803 = vld [vmem:[#allocation8 + $0x1c] sm:$0xf]
      %v1804 = vld [vmem:[#allocation8 + $0x20] sm:$0xf]
      %v1805 = vld [vmem:[#allocation8 + $0x24] sm:$0xf]
      %v1806 = vld [vmem:[#allocation8 + $0x28] sm:$0xf]
      %v1807 = vld [vmem:[#allocation8 + $0x2c] sm:$0xf]
      %v1808 = vld [vmem:[#allocation8 + $0x30] sm:$0xf]
      %v1809 = vld [vmem:[#allocation8 + $0x34] sm:$0xf]
      %v1810 = vld [vmem:[#allocation8 + $0x38] sm:$0xf]
      %v1811 = vld [vmem:[#allocation8 + $0x3c] sm:$0xf]
      %v1812 = vld [vmem:[#allocation8 + $0x40] sm:$0xf]
      %v1813 = vld [vmem:[#allocation8 + $0x44] sm:$0xf]
      %v1814 = vld [vmem:[#allocation8 + $0x48] sm:$0xf]
      %v1815 = vld [vmem:[#allocation8 + $0x4c] sm:$0xf]
      %v1816 = vld [vmem:[#allocation8 + $0x50] sm:$0xf]
      %v1817 = vld [vmem:[#allocation8 + $0x54] sm:$0xf]
      %v1818 = vld [vmem:[#allocation8 + $0x58] sm:$0xf]
      %v1819 = vld [vmem:[#allocation8 + $0x5c] sm:$0xf]
      %v1820 = vld [vmem:[#allocation8 + $0x60] sm:$0xf]
      %v1821 = vld [vmem:[#allocation8 + $0x64] sm:$0xf]
      %v1822 = vld [vmem:[#allocation8 + $0x68] sm:$0xf]
      %v1823 = vld [vmem:[#allocation8 + $0x6c] sm:$0xf]
      %v1824 = vld [vmem:[#allocation8 + $0x70] sm:$0xf]
      %v1825 = vld [vmem:[#allocation8 + $0x74] sm:$0xf]
      %v1826 = vld [vmem:[#allocation8 + $0x78] sm:$0xf]
      %v1827 = vld [vmem:[#allocation8 + $0x7c] sm:$0xf]
      %v1828 = vld [vmem:[#allocation8 + $0x80] sm:$0xf]
      %v1829 = vld [vmem:[#allocation8 + $0x84] sm:$0xf]
      %v1830 = vld [vmem:[#allocation8 + $0x88] sm:$0xf]
      %v1831 = vld [vmem:[#allocation8 + $0x8c] sm:$0xf]
      %v1832 = vld [vmem:[#allocation8 + $0x90] sm:$0xf]
      %v1833 = vld [vmem:[#allocation8 + $0x94] sm:$0xf]
      %v1834 = vld [vmem:[#allocation8 + $0x98] sm:$0xf]
      %v1835 = vld [vmem:[#allocation8 + $0x9c] sm:$0xf]
      %v1836 = vld [vmem:[#allocation8 + $0xa0] sm:$0xf]
      %v1837 = vld [vmem:[#allocation8 + $0xa4] sm:$0xf]
      %v1838 = vld [vmem:[#allocation8 + $0xa8] sm:$0xf]
      %v1839 = vld [vmem:[#allocation8 + $0xac] sm:$0xf]
      %v1840 = vld [vmem:[#allocation8 + $0xb0] sm:$0xf]
      %v1841 = vld [vmem:[#allocation8 + $0xb4] sm:$0xf]
      %v1842 = vld [vmem:[#allocation8 + $0xb8] sm:$0xf]
      %v1843 = vld [vmem:[#allocation8 + $0xbc] sm:$0xf]
      %v1844 = vld [vmem:[%s4] sm:$0x1]
      %v1846 = vlaneseq
      %v1847 = vshrl.u32 %v1846, 7
      %v1848 = vsub.s32 0, %v1847
      %v1849 = vrot.slane %v1844, %v1848
      %v1899 = vunpack.c.l.b16 %v1796
      %v1900 = vunpack.c.l.b16 %v1797
      %v1901 = vunpack.c.l.b16 %v1798
      %v1902 = vunpack.c.l.b16 %v1799
      %v1903 = vunpack.c.l.b16 %v1800
      %v1904 = vunpack.c.l.b16 %v1801
      %v1905 = vunpack.c.l.b16 %v1802
      %v1906 = vunpack.c.l.b16 %v1803
      %v1907 = vunpack.c.l.b16 %v1804
      %v1908 = vunpack.c.l.b16 %v1805
      %v1909 = vunpack.c.l.b16 %v1806
      %v1910 = vunpack.c.l.b16 %v1807
      %v1911 = vunpack.c.l.b16 %v1808
      %v1912 = vunpack.c.l.b16 %v1809
      %v1913 = vunpack.c.l.b16 %v1810
      %v1914 = vunpack.c.l.b16 %v1811
      %v1915 = vunpack.c.l.b16 %v1812
      %v1916 = vunpack.c.l.b16 %v1813
      %v1917 = vunpack.c.l.b16 %v1814
      %v1918 = vunpack.c.l.b16 %v1815
      %v1919 = vunpack.c.l.b16 %v1816
      %v1920 = vunpack.c.l.b16 %v1817
      %v1921 = vunpack.c.l.b16 %v1818
      %v1922 = vunpack.c.l.b16 %v1819
      %v1923 = vunpack.c.l.b16 %v1820
      %v1924 = vunpack.c.l.b16 %v1821
      %v1925 = vunpack.c.l.b16 %v1822
      %v1926 = vunpack.c.l.b16 %v1823
      %v1927 = vunpack.c.l.b16 %v1824
      %v1928 = vunpack.c.l.b16 %v1825
      %v1929 = vunpack.c.l.b16 %v1826
      %v1930 = vunpack.c.l.b16 %v1827
      %v1931 = vunpack.c.l.b16 %v1828
      %v1932 = vunpack.c.l.b16 %v1829
      %v1933 = vunpack.c.l.b16 %v1830
      %v1934 = vunpack.c.l.b16 %v1831
      %v1935 = vunpack.c.l.b16 %v1832
      %v1936 = vunpack.c.l.b16 %v1833
      %v1937 = vunpack.c.l.b16 %v1834
      %v1938 = vunpack.c.l.b16 %v1835
      %v1939 = vunpack.c.l.b16 %v1836
      %v1940 = vunpack.c.l.b16 %v1837
      %v1941 = vunpack.c.l.b16 %v1838
      %v1942 = vunpack.c.l.b16 %v1839
      %v1943 = vunpack.c.l.b16 %v1840
      %v1944 = vunpack.c.l.b16 %v1841
      %v1945 = vunpack.c.l.b16 %v1842
      %v1946 = vunpack.c.l.b16 %v1843
      %v1947 = vpack.c.b16 %v1900, %v1899
      %v1948 = vpack.c.b16 %v1902, %v1901
      %v1949 = vpack.c.b16 %v1904, %v1903
      %v1950 = vpack.c.b16 %v1906, %v1905
      %v1951 = vpack.c.b16 %v1908, %v1907
      %v1952 = vpack.c.b16 %v1910, %v1909
      %v1953 = vpack.c.b16 %v1912, %v1911
      %v1954 = vpack.c.b16 %v1914, %v1913
      %v1955 = vpack.c.b16 %v1916, %v1915
      %v1956 = vpack.c.b16 %v1918, %v1917
      %v1957 = vpack.c.b16 %v1920, %v1919
      %v1958 = vpack.c.b16 %v1922, %v1921
      %v1959 = vpack.c.b16 %v1924, %v1923
      %v1960 = vpack.c.b16 %v1926, %v1925
      %v1961 = vpack.c.b16 %v1928, %v1927
      %v1962 = vpack.c.b16 %v1930, %v1929
      %v1963 = vpack.c.b16 %v1932, %v1931
      %v1964 = vpack.c.b16 %v1934, %v1933
      %v1965 = vpack.c.b16 %v1936, %v1935
      %v1966 = vpack.c.b16 %v1938, %v1937
      %v1967 = vpack.c.b16 %v1940, %v1939
      %v1968 = vpack.c.b16 %v1942, %v1941
      %v1969 = vpack.c.b16 %v1944, %v1943
      %v1970 = vpack.c.b16 %v1946, %v1945
      %1995 = vmatprep.subr.bf16.mxu0 0
      %1996 = vmatpush1.bf16.msra.mxu0 %v1954
      %1997 = vmatprep.subr.bf16.mxu0 0
      %1998 = vmatpush1.bf16.msra.mxu0 %v1953
      %1999 = vmatprep.subr.bf16.mxu0 0
      %2000 = vmatpush1.bf16.msra.mxu0 %v1952
      %2001 = vmatprep.subr.bf16.mxu0 0
      %2002 = vmatpush1.bf16.msra.mxu0 %v1951
      %2003 = vmatprep.subr.bf16.mxu0 0
      %2004 = vmatpush1.bf16.msra.mxu0 %v1950
      %2005 = vmatprep.subr.bf16.mxu0 0
      %2006 = vmatpush1.bf16.msra.mxu0 %v1949
      %2007 = vmatprep.subr.bf16.mxu0 0
      %2008 = vmatpush1.bf16.msra.mxu0 %v1948
      %2009 = vmatprep.subr.bf16.mxu0 0
      %2010 = vmatpush1.bf16.msra.mxu0 %v1947
      %2011 = vmatprep.subr.bf16.mxu0 0
      %2012 = vmatpush2.bf16.msra.mxu0 %v1962
      %2013 = vmatprep.subr.bf16.mxu0 0
      %2014 = vmatpush2.bf16.msra.mxu0 %v1961
      %2015 = vmatprep.subr.bf16.mxu0 0
      %2016 = vmatpush2.bf16.msra.mxu0 %v1960
      %2017 = vmatprep.subr.bf16.mxu0 0
      %2018 = vmatpush2.bf16.msra.mxu0 %v1959
      %2019 = vmatprep.subr.bf16.mxu0 0
      %2020 = vmatpush2.bf16.msra.mxu0 %v1958
      %2021 = vmatprep.subr.bf16.mxu0 0
      %2022 = vmatpush2.bf16.msra.mxu0 %v1957
      %2023 = vmatprep.subr.bf16.mxu0 0
      %2024 = vmatpush2.bf16.msra.mxu0 %v1956
      %2025 = vmatprep.subr.bf16.mxu0 0
      %2026 = vmatpush2.bf16.msra.mxu0 %v1955
      %2027 = vmatprep.mubr.bf16.mxu0 %v1794
      %2028 = vmatmul.mubr.bf16.gmra.mxu0 %v1793
      %v2029 = vpop.f32.mrf.mxu0
      %v2030 = vadd.f32 %v1849, %v2029
      %v2031 = vpop.f32.mrf.mxu0
      %v2032 = vpop.f32.mrf.mxu0
      %v2033 = vadd.f32 %v1849, %v2032
      %v2034 = vpop.f32.mrf.mxu0
      %2035 = vdwg.mxu0
      %2036 = vmatprep.subr.bf16.mxu0 0
      %2037 = vmatpush1.bf16.msra.mxu0 %v1970
      %2038 = vmatprep.subr.bf16.mxu0 0
      %2039 = vmatpush1.bf16.msra.mxu0 %v1969
      %2040 = vmatprep.subr.bf16.mxu0 0
      %2041 = vmatpush1.bf16.msra.mxu0 %v1968
      %2042 = vmatprep.subr.bf16.mxu0 0
      %2043 = vmatpush1.bf16.msra.mxu0 %v1967
      %2044 = vmatprep.subr.bf16.mxu0 0
      %2045 = vmatpush1.bf16.msra.mxu0 %v1966
      %2046 = vmatprep.subr.bf16.mxu0 0
      %2047 = vmatpush1.bf16.msra.mxu0 %v1965
      %2048 = vmatprep.subr.bf16.mxu0 0
      %2049 = vmatpush1.bf16.msra.mxu0 %v1964
      %2050 = vmatprep.subr.bf16.mxu0 0
      %2051 = vmatpush1.bf16.msra.mxu0 %v1963
      %2052 = vmatprep.subr.bf16.mxu0 0
      %2053 = vmatpush2.bf16.msra.mxu0 0
      %2054 = vmatprep.subr.bf16.mxu0 0
      %2055 = vmatpush2.bf16.msra.mxu0 0
      %2056 = vmatprep.subr.bf16.mxu0 0
      %2057 = vmatpush2.bf16.msra.mxu0 0
      %2058 = vmatprep.subr.bf16.mxu0 0
      %2059 = vmatpush2.bf16.msra.mxu0 0
      %2060 = vmatprep.subr.bf16.mxu0 0
      %2061 = vmatpush2.bf16.msra.mxu0 0
      %2062 = vmatprep.subr.bf16.mxu0 0
      %2063 = vmatpush2.bf16.msra.mxu0 0
      %2064 = vmatprep.subr.bf16.mxu0 0
      %2065 = vmatpush2.bf16.msra.mxu0 0
      %2066 = vmatprep.subr.bf16.mxu0 0
      %2067 = vmatpush2.bf16.msra.mxu0 0
      %2068 = vmatprep.mubr.bf16.mxu0 0
      %2069 = vmatmul.mubr.bf16.gmra.mxu0 %v1795
      %v2070 = vpop.f32.mrf.mxu0
      %v2071 = vadd.f32 %v2030, %v2070
      %v2072 = vpop.f32.mrf.mxu0
      %v2073 = vpop.f32.mrf.mxu0
      %v2074 = vadd.f32 %v2033, %v2073
      %v2075 = vpop.f32.mrf.mxu0
      %2076 = vdwg.mxu0
      %2077 = vst [vmem:[#allocation9] sm:$0xff] %v2071
      %2078 = vst [vmem:[#allocation9 + $0x8] sm:$0xff] %v2074
    $region41: #{tpu_custom_call.1} parent=1 // pred_fallthru
      _
    // Predicated region
    $region42: #{tpu_custom_call.1} parent=1 // pred_check
      _
    $region43: #{tpu_custom_call.1} parent=1 // pred_check_branch
      %2080 = sbr.rel (0) target = $region45
    $region44: #{tpu_custom_call.1} parent=1 // pred_region
      %s2082 = ssub.s32 256, 256
      %2083 = vsyncadd [#allocation5], %s2082
      %s2084 = sshll.u32 [#allocation9], 4
      %s2085 = int_to_ptr.vmem [resolvable:$true] %s2084
      %2090 = dma.vmem_to_hbm [thread:$0]  %s2085, 256, %s5, [#allocation5], 128, 128, 8
    $region45: #{tpu_custom_call.1} parent=1 // pred_fallthru
      _
    // Predicated region
    $region46: #{tpu_custom_call.1} parent=1 // pred_check
      _
    $region47: #{tpu_custom_call.1} parent=1 // pred_check_branch
      %2092 = sbr.rel (0) target = $region49
    $region48: #{tpu_custom_call.1} parent=1 // pred_region
      %2093 = dma.done [#allocation5], 256
    $region49: #{tpu_custom_call.1} parent=1 // pred_fallthru
      _
    %2094 = vsyncpa [#allocation4], 1
    %2095 = vsyncpa [#allocation7], 1
    %2096 = vsyncpa [#allocation5], 1

// kernel: tpu_custom_call.1
$region0: #{tpu_custom_call.1}
  #allocation0 [shape = 'u32[]', space=smem, size = 0x4, offset = 0x4, fixed_abs, tag = 'smem constant byte address 0x4 - core index']
  #allocation1 [shape = 'u32[144,128]{1,0:T(1,128)}', space=vmem, size = 0x12000, scoped, tag = 'internal scratch']
  #allocation2 [shape = 'f32[16,384]{1,0:T(8,128)}', space=vmem, size = 0x6000, scoped, tag = 'scratch operand']
  %s0 = inlined_call_operand.hbm [shape: bf16[16,1024], index: 0, kind: input, shape index: {}]
  %s1 = inlined_call_operand.hbm [shape: bf16[1024,384], index: 1, kind: input, shape index: {}]
  %s2 = inlined_call_operand.vmem [shape: f32[1,384], index: 2, kind: input, shape index: {}]
  %s3 = inlined_call_operand.hbm [shape: bf16[384,128], index: 3, kind: input, shape index: {}]
  %s4 = inlined_call_operand.vmem [shape: f32[1,128], index: 4, kind: input, shape index: {}]
  %s5 = inlined_call_operand.hbm [shape: f32[16,128], index: 5, kind: output, shape index: {}]
  %s6 = sld [smem:[#allocation0]]
  $region50: #{tpu_custom_call.1} parent=0
    _
  %s8 = ssub.s32 1, %s6
  %s9 = scalar_select 0, %s8, %s6
  $region1: #{tpu_custom_call.1} parent=0
    #allocation3 [shape = 'u8[32768]{0}', space=vmem, size = 0x8000, scoped, tag = 'input window, operand 0, single buffered']
    #allocation4 [shape = 's32[1]{0}', space=sflag, size = 0x4, scoped, tag = 'scoped memory for tpu_custom_call.1']
    #allocation5 [shape = 's32[1]{0}', space=sflag, size = 0x4, scoped, tag = 'scoped memory for tpu_custom_call.1']
    #allocation6 [shape = 'u8[786432]{0}', space=vmem, size = 0xc0000, scoped, tag = 'input window, operand 1, single buffered']
    #allocation7 [shape = 's32[1]{0}', space=sflag, size = 0x4, scoped, tag = 'scoped memory for tpu_custom_call.1']
    #allocation8 [shape = 'u8[98304]{0}', space=vmem, size = 0x18000, scoped, tag = 'input window, operand 3, single buffered']
    #allocation9 [shape = 'u8[8192]{0}', space=vmem, size = 0x2000, scoped, tag = 'output window, operand 0, single buffered']
    %10 = vsyncpa [#allocation4], 0
    %11 = vsyncpa [#allocation7], 0
    %12 = vsyncpa [#allocation5], 0
    // Predicated region
    $region2: #{tpu_custom_call.1} parent=1 // pred_check
      _
    $region3: #{tpu_custom_call.1} parent=1 // pred_check_branch
      %14 = sbr.rel (0) target = $region5
    $region4: #{tpu_custom_call.1} parent=1 // pred_region
      %s16 = ssub.s32 1024, 1024
      %17 = vsyncadd [#allocation4], %s16
      %s18 = sshll.u32 [#allocation3], 4
      %s19 = int_to_ptr.vmem [resolvable:$true] %s18
      %24 = dma.hbm_to_vmem [thread:$0]  %s0, 1024, %s19, [#allocation4], 512, 512, 32
    $region5: #{tpu_custom_call.1} parent=1 // pred_fallthru
      _
    // Predicated region
    $region6: #{tpu_custom_call.1} parent=1 // pred_check
      _
    $region7: #{tpu_custom_call.1} parent=1 // pred_check_branch
      %26 = sbr.rel (0) target = $region9
    $region8: #{tpu_custom_call.1} parent=1 // pred_region
      %s28 = ssub.s32 24576, 24576
      %29 = vsyncadd [#allocation7], %s28
      %s30 = sshll.u32 [#allocation6], 4
      %s31 = int_to_ptr.vmem [resolvable:$true] %s30
      %36 = dma.hbm_to_vmem [thread:$0]  %s1, 24576, %s31, [#allocation7], 192, 192, 12
    $region9: #{tpu_custom_call.1} parent=1 // pred_fallthru
      _
    // Predicated region
    $region10: #{tpu_custom_call.1} parent=1 // pred_check
      _
    $region11: #{tpu_custom_call.1} parent=1 // pred_check_branch
      %38 = sbr.rel (0) target = $region13
    $region12: #{tpu_custom_call.1} parent=1 // pred_region
      _
    $region13: #{tpu_custom_call.1} parent=1 // pred_fallthru
      _
    // Predicated region
    $region14: #{tpu_custom_call.1} parent=1 // pred_check
      _
    $region15: #{tpu_custom_call.1} parent=1 // pred_check_branch
      %40 = sbr.rel (0) target = $region17
    $region16: #{tpu_custom_call.1} parent=1 // pred_region
      %s42 = ssub.s32 3072, 3072
      %43 = vsyncadd [#allocation7], %s42
      %s44 = sshll.u32 [#allocation8], 4
      %s45 = int_to_ptr.vmem [resolvable:$true] %s44
      %50 = dma.hbm_to_vmem [thread:$0]  %s3, 3072, %s45, [#allocation7], 64, 64, 4
    $region17: #{tpu_custom_call.1} parent=1 // pred_fallthru
      _
    // Predicated region
    $region18: #{tpu_custom_call.1} parent=1 // pred_check
      _
    $region19: #{tpu_custom_call.1} parent=1 // pred_check_branch
      %52 = sbr.rel (0) target = $region21
    $region20: #{tpu_custom_call.1} parent=1 // pred_region
      _
    $region21: #{tpu_custom_call.1} parent=1 // pred_fallthru
      _
    // Predicated region
    $region22: #{tpu_custom_call.1} parent=1 // pred_check
      _
    $region23: #{tpu_custom_call.1} parent=1 // pred_check_branch
      %54 = sbr.rel (0) target = $region25
    $region24: #{tpu_custom_call.1} parent=1 // pred_region
      %55 = dma.done [#allocation4], 1024
    $region25: #{tpu_custom_call.1} parent=1 // pred_fallthru
      _
    // Predicated region
    $region26: #{tpu_custom_call.1} parent=1 // pred_check
      _
    $region27: #{tpu_custom_call.1} parent=1 // pred_check_branch
      %57 = sbr.rel (0) target = $region29
    $region28: #{tpu_custom_call.1} parent=1 // pred_region
      %58 = dma.done [#allocation7], 24576
    $region29: #{tpu_custom_call.1} parent=1 // pred_fallthru
      _
    // Predicated region
    $region30: #{tpu_custom_call.1} parent=1 // pred_check
      _
    $region31: #{tpu_custom_call.1} parent=1 // pred_check_branch
      %60 = sbr.rel (0) target = $region33
    $region32: #{tpu_custom_call.1} parent=1 // pred_region
      %61 = dma.done [#allocation7], 3072
    $region33: #{tpu_custom_call.1} parent=1 // pred_fallthru
      _
    %p63 = scmp.eq.s32.totalorder 0, 0
    // Predicated region
    $region34: #{tpu_custom_call.1} parent=1 // pred_check
      %p64 = pneg %p63
    $region35: #{tpu_custom_call.1} parent=1 // pred_check_branch
      %66 = sbr.rel (%p64) target = $region37
    $region36: #{tpu_custom_call.1} parent=1 // pred_region
      %67 = vst [vmem:[#allocation2] sm:$0xff] 0.0
      %68 = vst [vmem:[#allocation2 + $0x8] sm:$0xff] 0.0
      %69 = vst [vmem:[#allocation2 + $0x10] sm:$0xff] 0.0
      %70 = vst [vmem:[#allocation2 + $0x18] sm:$0xff] 0.0
      %71 = vst [vmem:[#allocation2 + $0x20] sm:$0xff] 0.0
      %72 = vst [vmem:[#allocation2 + $0x28] sm:$0xff] 0.0
    $region37: #{tpu_custom_call.1} parent=1 // pred_fallthru
      _
    %v73 = vld [vmem:[#allocation2] sm:$0xff]
    %v74 = vld [vmem:[#allocation2 + $0x8] sm:$0xff]
    %v75 = vld [vmem:[#allocation2 + $0x10] sm:$0xff]
    %v76 = vld [vmem:[#allocation2 + $0x18] sm:$0xff]
    %v77 = vld [vmem:[#allocation2 + $0x20] sm:$0xff]
    %v78 = vld [vmem:[#allocation2 + $0x28] sm:$0xff]
    %v79 = vld [vmem:[#allocation3] sm:$0xff]
    %v80 = vld [vmem:[#allocation3 + $0x8] sm:$0xff]
    %v81 = vld [vmem:[#allocation3 + $0x10] sm:$0xff]
    %v82 = vld [vmem:[#allocation3 + $0x18] sm:$0xff]
    %v83 = vld [vmem:[#allocation3 + $0x20] sm:$0xff]
    %v84 = vld [vmem:[#allocation3 + $0x28] sm:$0xff]
    %v85 = vld [vmem:[#allocation3 + $0x30] sm:$0xff]
    %v86 = vld [vmem:[#allocation3 + $0x38] sm:$0xff]
    %v87 = vld [vmem:[#allocation6] sm:$0xff]
    %v88 = vld [vmem:[#allocation6 + $0x8] sm:$0xf]
    %v89 = vld [vmem:[#allocation6 + $0xc] sm:$0xff]
    %v90 = vld [vmem:[#allocation6 + $0x14] sm:$0xf]
    %v91 = vld [vmem:[#allocation6 + $0x18] sm:$0xff]
    %v92 = vld [vmem:[#allocation6 + $0x20] sm:$0xf]
    %v93 = vld [vmem:[#allocation6 + $0x24] sm:$0xff]
    %v94 = vld [vmem:[#allocation6 + $0x2c] sm:$0xf]
    %v95 = vld [vmem:[#allocation6 + $0x30] sm:$0xff]
    %v96 = vld [vmem:[#allocation6 + $0x38] sm:$0xf]
    %v97 = vld [vmem:[#allocation6 + $0x3c] sm:$0xff]
    %v98 = vld [vmem:[#allocation6 + $0x44] sm:$0xf]
    %v99 = vld [vmem:[#allocation6 + $0x48] sm:$0xff]
    %v100 = vld [vmem:[#allocation6 + $0x50] sm:$0xf]
    %v101 = vld [vmem:[#allocation6 + $0x54] sm:$0xff]
    %v102 = vld [vmem:[#allocation6 + $0x5c] sm:$0xf]
    %v103 = vld [vmem:[#allocation6 + $0x60] sm:$0xff]
    %v104 = vld [vmem:[#allocation6 + $0x68] sm:$0xf]
    %v105 = vld [vmem:[#allocation6 + $0x6c] sm:$0xff]
    %v106 = vld [vmem:[#allocation6 + $0x74] sm:$0xf]
    %v107 = vld [vmem:[#allocation6 + $0x78] sm:$0xff]
    %v108 = vld [vmem:[#allocation6 + $0x80] sm:$0xf]
    %v109 = vld [vmem:[#allocation6 + $0x84] sm:$0xff]
    %v110 = vld [vmem:[#allocation6 + $0x8c] sm:$0xf]
    %v111 = vld [vmem:[#allocation6 + $0x90] sm:$0xff]
    %v112 = vld [vmem:[#allocation6 + $0x98] sm:$0xf]
    %v113 = vld [vmem:[#allocation6 + $0x9c] sm:$0xff]
    %v114 = vld [vmem:[#allocation6 + $0xa4] sm:$0xf]
    %v115 = vld [vmem:[#allocation6 + $0xa8] sm:$0xff]
    %v116 = vld [vmem:[#allocation6 + $0xb0] sm:$0xf]
    %v117 = vld [vmem:[#allocation6 + $0xb4] sm:$0xff]
    %v118 = vld [vmem:[#allocation6 + $0xbc] sm:$0xf]
    %v119 = vld [vmem:[#allocation6 + $0xc0] sm:$0xff]
    %v120 = vld [vmem:[#allocation6 + $0xc8] sm:$0xf]
    %v121 = vld [vmem:[#allocation6 + $0xcc] sm:$0xff]
    %v122 = vld [vmem:[#allocation6 + $0xd4] sm:$0xf]
    %v123 = vld [vmem:[#allocation6 + $0xd8] sm:$0xff]
    %v124 = vld [vmem:[#allocation6 + $0xe0] sm:$0xf]
    %v125 = vld [vmem:[#allocation6 + $0xe4] sm:$0xff]
    %v126 = vld [vmem:[#allocation6 + $0xec] sm:$0xf]
    %v127 = vld [vmem:[#allocation6 + $0xf0] sm:$0xff]
    %v128 = vld [vmem:[#allocation6 + $0xf8] sm:$0xf]
    %v129 = vld [vmem:[#allocation6 + $0xfc] sm:$0xff]
    %v130 = vld [vmem:[#allocation6 + $0x104] sm:$0xf]
    %v131 = vld [vmem:[#allocation6 + $0x108] sm:$0xff]
    %v132 = vld [vmem:[#allocation6 + $0x110] sm:$0xf]
    %v133 = vld [vmem:[#allocation6 + $0x114] sm:$0xff]
    %v134 = vld [vmem:[#allocation6 + $0x11c] sm:$0xf]
    %v135 = vld [vmem:[#allocation6 + $0x120] sm:$0xff]
    %v136 = vld [vmem:[#allocation6 + $0x128] sm:$0xf]
    %v137 = vld [vmem:[#allocation6 + $0x12c] sm:$0xff]
    %v138 = vld [vmem:[#allocation6 + $0x134] sm:$0xf]
    %v139 = vld [vmem:[#allocation6 + $0x138] sm:$0xff]
    %v140 = vld [vmem:[#allocation6 + $0x140] sm:$0xf]
    %v141 = vld [vmem:[#allocation6 + $0x144] sm:$0xff]
    %v142 = vld [vmem:[#allocation6 + $0x14c] sm:$0xf]
    %v143 = vld [vmem:[#allocation6 + $0x150] sm:$0xff]
    %v144 = vld [vmem:[#allocation6 + $0x158] sm:$0xf]
    %v145 = vld [vmem:[#allocation6 + $0x15c] sm:$0xff]
    %v146 = vld [vmem:[#allocation6 + $0x164] sm:$0xf]
    %v147 = vld [vmem:[#allocation6 + $0x168] sm:$0xff]
    %v148 = vld [vmem:[#allocation6 + $0x170] sm:$0xf]
    %v149 = vld [vmem:[#allocation6 + $0x174] sm:$0xff]
    %v150 = vld [vmem:[#allocation6 + $0x17c] sm:$0xf]
    %v151 = vld [vmem:[#allocation6 + $0x180] sm:$0xff]
    %v152 = vld [vmem:[#allocation6 + $0x188] sm:$0xf]
    %v153 = vld [vmem:[#allocation6 + $0x18c] sm:$0xff]
    %v154 = vld [vmem:[#allocation6 + $0x194] sm:$0xf]
    %v155 = vld [vmem:[#allocation6 + $0x198] sm:$0xff]
    %v156 = vld [vmem:[#allocation6 + $0x1a0] sm:$0xf]
    %v157 = vld [vmem:[#allocation6 + $0x1a4] sm:$0xff]
    %v158 = vld [vmem:[#allocation6 + $0x1ac] sm:$0xf]
    %v159 = vld [vmem:[#allocation6 + $0x1b0] sm:$0xff]
    %v160 = vld [vmem:[#allocation6 + $0x1b8] sm:$0xf]
    %v161 = vld [vmem:[#allocation6 + $0x1bc] sm:$0xff]
    %v162 = vld [vmem:[#allocation6 + $0x1c4] sm:$0xf]
    %v163 = vld [vmem:[#allocation6 + $0x1c8] sm:$0xff]
    %v164 = vld [vmem:[#allocation6 + $0x1d0] sm:$0xf]
    %v165 = vld [vmem:[#allocation6 + $0x1d4] sm:$0xff]
    %v166 = vld [vmem:[#allocation6 + $0x1dc] sm:$0xf]
    %v167 = vld [vmem:[#allocation6 + $0x1e0] sm:$0xff]
    %v168 = vld [vmem:[#allocation6 + $0x1e8] sm:$0xf]
    %v169 = vld [vmem:[#allocation6 + $0x1ec] sm:$0xff]
    %v170 = vld [vmem:[#allocation6 + $0x1f4] sm:$0xf]
    %v171 = vld [vmem:[#allocation6 + $0x1f8] sm:$0xff]
    %v172 = vld [vmem:[#allocation6 + $0x200] sm:$0xf]
    %v173 = vld [vmem:[#allocation6 + $0x204] sm:$0xff]
    %v174 = vld [vmem:[#allocation6 + $0x20c] sm:$0xf]
    %v175 = vld [vmem:[#allocation6 + $0x210] sm:$0xff]
    %v176 = vld [vmem:[#allocation6 + $0x218] sm:$0xf]
    %v177 = vld [vmem:[#allocation6 + $0x21c] sm:$0xff]
    %v178 = vld [vmem:[#allocation6 + $0x224] sm:$0xf]
    %v179 = vld [vmem:[#allocation6 + $0x228] sm:$0xff]
    %v180 = vld [vmem:[#allocation6 + $0x230] sm:$0xf]
    %v181 = vld [vmem:[#allocation6 + $0x234] sm:$0xff]
    %v182 = vld [vmem:[#allocation6 + $0x23c] sm:$0xf]
    %v183 = vld [vmem:[#allocation6 + $0x240] sm:$0xff]
    %v184 = vld [vmem:[#allocation6 + $0x248] sm:$0xf]
    %v185 = vld [vmem:[#allocation6 + $0x24c] sm:$0xff]
    %v186 = vld [vmem:[#allocation6 + $0x254] sm:$0xf]
    %v187 = vld [vmem:[#allocation6 + $0x258] sm:$0xff]
    %v188 = vld [vmem:[#allocation6 + $0x260] sm:$0xf]
    %v189 = vld [vmem:[#allocation6 + $0x264] sm:$0xff]
    %v190 = vld [vmem:[#allocation6 + $0x26c] sm:$0xf]
    %v191 = vld [vmem:[#allocation6 + $0x270] sm:$0xff]
    %v192 = vld [vmem:[#allocation6 + $0x278] sm:$0xf]
    %v193 = vld [vmem:[#allocation6 + $0x27c] sm:$0xff]
    %v194 = vld [vmem:[#allocation6 + $0x284] sm:$0xf]
    %v195 = vld [vmem:[#allocation6 + $0x288] sm:$0xff]
    %v196 = vld [vmem:[#allocation6 + $0x290] sm:$0xf]
    %v197 = vld [vmem:[#allocation6 + $0x294] sm:$0xff]
    %v198 = vld [vmem:[#allocation6 + $0x29c] sm:$0xf]
    %v199 = vld [vmem:[#allocation6 + $0x2a0] sm:$0xff]
    %v200 = vld [vmem:[#allocation6 + $0x2a8] sm:$0xf]
    %v201 = vld [vmem:[#allocation6 + $0x2ac] sm:$0xff]
    %v202 = vld [vmem:[#allocation6 + $0x2b4] sm:$0xf]
    %v203 = vld [vmem:[#allocation6 + $0x2b8] sm:$0xff]
    %v204 = vld [vmem:[#allocation6 + $0x2c0] sm:$0xf]
    %v205 = vld [vmem:[#allocation6 + $0x2c4] sm:$0xff]
    %v206 = vld [vmem:[#allocation6 + $0x2cc] sm:$0xf]
    %v207 = vld [vmem:[#allocation6 + $0x2d0] sm:$0xff]
    %v208 = vld [vmem:[#allocation6 + $0x2d8] sm:$0xf]
    %v209 = vld [vmem:[#allocation6 + $0x2dc] sm:$0xff]
    %v210 = vld [vmem:[#allocation6 + $0x2e4] sm:$0xf]
    %v211 = vld [vmem:[#allocation6 + $0x2e8] sm:$0xff]
    %v212 = vld [vmem:[#allocation6 + $0x2f0] sm:$0xf]
    %v213 = vld [vmem:[#allocation6 + $0x2f4] sm:$0xff]
    %v214 = vld [vmem:[#allocation6 + $0x2fc] sm:$0xf]
    %v215 = vld [vmem:[#allocation6 + $0x300] sm:$0xff]
    %v216 = vld [vmem:[#allocation6 + $0x308] sm:$0xf]
    %v217 = vld [vmem:[#allocation6 + $0x30c] sm:$0xff]
    %v218 = vld [vmem:[#allocation6 + $0x314] sm:$0xf]
    %v219 = vld [vmem:[#allocation6 + $0x318] sm:$0xff]
    %v220 = vld [vmem:[#allocation6 + $0x320] sm:$0xf]
    %v221 = vld [vmem:[#allocation6 + $0x324] sm:$0xff]
    %v222 = vld [vmem:[#allocation6 + $0x32c] sm:$0xf]
    %v223 = vld [vmem:[#allocation6 + $0x330] sm:$0xff]
    %v224 = vld [vmem:[#allocation6 + $0x338] sm:$0xf]
    %v225 = vld [vmem:[#allocation6 + $0x33c] sm:$0xff]
    %v226 = vld [vmem:[#allocation6 + $0x344] sm:$0xf]
    %v227 = vld [vmem:[#allocation6 + $0x348] sm:$0xff]
    %v228 = vld [vmem:[#allocation6 + $0x350] sm:$0xf]
    %v229 = vld [vmem:[#allocation6 + $0x354] sm:$0xff]
    %v230 = vld [vmem:[#allocation6 + $0x35c] sm:$0xf]
    %v231 = vld [vmem:[#allocation6 + $0x360] sm:$0xff]
    %v232 = vld [vmem:[#allocation6 + $0x368] sm:$0xf]
    %v233 = vld [vmem:[#allocation6 + $0x36c] sm:$0xff]
    %v234 = vld [vmem:[#allocation6 + $0x374] sm:$0xf]
    %v235 = vld [vmem:[#allocation6 + $0x378] sm:$0xff]
    %v236 = vld [vmem:[#allocation6 + $0x380] sm:$0xf]
    %v237 = vld [vmem:[#allocation6 + $0x384] sm:$0xff]
    %v238 = vld [vmem:[#allocation6 + $0x38c] sm:$0xf]
    %v239 = vld [vmem:[#allocation6 + $0x390] sm:$0xff]
    %v240 = vld [vmem:[#allocation6 + $0x398] sm:$0xf]
    %v241 = vld [vmem:[#allocation6 + $0x39c] sm:$0xff]
    %v242 = vld [vmem:[#allocation6 + $0x3a4] sm:$0xf]
    %v243 = vld [vmem:[#allocation6 + $0x3a8] sm:$0xff]
    %v244 = vld [vmem:[#allocation6 + $0x3b0] sm:$0xf]
    %v245 = vld [vmem:[#allocation6 + $0x3b4] sm:$0xff]
    %v246 = vld [vmem:[#allocation6 + $0x3bc] sm:$0xf]
    %v247 = vld [vmem:[#allocation6 + $0x3c0] sm:$0xff]
    %v248 = vld [vmem:[#allocation6 + $0x3c8] sm:$0xf]
    %v249 = vld [vmem:[#allocation6 + $0x3cc] sm:$0xff]
    %v250 = vld [vmem:[#allocation6 + $0x3d4] sm:$0xf]
    %v251 = vld [vmem:[#allocation6 + $0x3d8] sm:$0xff]
    %v252 = vld [vmem:[#allocation6 + $0x3e0] sm:$0xf]
    %v253 = vld [vmem:[#allocation6 + $0x3e4] sm:$0xff]
    %v254 = vld [vmem:[#allocation6 + $0x3ec] sm:$0xf]
    %v255 = vld [vmem:[#allocation6 + $0x3f0] sm:$0xff]
    %v256 = vld [vmem:[#allocation6 + $0x3f8] sm:$0xf]
    %v257 = vld [vmem:[#allocation6 + $0x3fc] sm:$0xff]
    %v258 = vld [vmem:[#allocation6 + $0x404] sm:$0xf]
    %v259 = vld [vmem:[#allocation6 + $0x408] sm:$0xff]
    %v260 = vld [vmem:[#allocation6 + $0x410] sm:$0xf]
    %v261 = vld [vmem:[#allocation6 + $0x414] sm:$0xff]
    %v262 = vld [vmem:[#allocation6 + $0x41c] sm:$0xf]
    %v263 = vld [vmem:[#allocation6 + $0x420] sm:$0xff]
    %v264 = vld [vmem:[#allocation6 + $0x428] sm:$0xf]
    %v265 = vld [vmem:[#allocation6 + $0x42c] sm:$0xff]
    %v266 = vld [vmem:[#allocation6 + $0x434] sm:$0xf]
    %v267 = vld [vmem:[#allocation6 + $0x438] sm:$0xff]
    %v268 = vld [vmem:[#allocation6 + $0x440] sm:$0xf]
    %v269 = vld [vmem:[#allocation6 + $0x444] sm:$0xff]
    %v270 = vld [vmem:[#allocation6 + $0x44c] sm:$0xf]
    %v271 = vld [vmem:[#allocation6 + $0x450] sm:$0xff]
    %v272 = vld [vmem:[#allocation6 + $0x458] sm:$0xf]
    %v273 = vld [vmem:[#allocation6 + $0x45c] sm:$0xff]
    %v274 = vld [vmem:[#allocation6 + $0x464] sm:$0xf]
    %v275 = vld [vmem:[#allocation6 + $0x468] sm:$0xff]
    %v276 = vld [vmem:[#allocation6 + $0x470] sm:$0xf]
    %v277 = vld [vmem:[#allocation6 + $0x474] sm:$0xff]
    %v278 = vld [vmem:[#allocation6 + $0x47c] sm:$0xf]
    %v279 = vld [vmem:[#allocation6 + $0x480] sm:$0xff]
    %v280 = vld [vmem:[#allocation6 + $0x488] sm:$0xf]
    %v281 = vld [vmem:[#allocation6 + $0x48c] sm:$0xff]
    %v282 = vld [vmem:[#allocation6 + $0x494] sm:$0xf]
    %v283 = vld [vmem:[#allocation6 + $0x498] sm:$0xff]
    %v284 = vld [vmem:[#allocation6 + $0x4a0] sm:$0xf]
    %v285 = vld [vmem:[#allocation6 + $0x4a4] sm:$0xff]
    %v286 = vld [vmem:[#allocation6 + $0x4ac] sm:$0xf]
    %v287 = vld [vmem:[#allocation6 + $0x4b0] sm:$0xff]
    %v288 = vld [vmem:[#allocation6 + $0x4b8] sm:$0xf]
    %v289 = vld [vmem:[#allocation6 + $0x4bc] sm:$0xff]
    %v290 = vld [vmem:[#allocation6 + $0x4c4] sm:$0xf]
    %v291 = vld [vmem:[#allocation6 + $0x4c8] sm:$0xff]
    %v292 = vld [vmem:[#allocation6 + $0x4d0] sm:$0xf]
    %v293 = vld [vmem:[#allocation6 + $0x4d4] sm:$0xff]
    %v294 = vld [vmem:[#allocation6 + $0x4dc] sm:$0xf]
    %v295 = vld [vmem:[#allocation6 + $0x4e0] sm:$0xff]
    %v296 = vld [vmem:[#allocation6 + $0x4e8] sm:$0xf]
    %v297 = vld [vmem:[#allocation6 + $0x4ec] sm:$0xff]
    %v298 = vld [vmem:[#allocation6 + $0x4f4] sm:$0xf]
    %v299 = vld [vmem:[#allocation6 + $0x4f8] sm:$0xff]
    %v300 = vld [vmem:[#allocation6 + $0x500] sm:$0xf]
    %v301 = vld [vmem:[#allocation6 + $0x504] sm:$0xff]
    %v302 = vld [vmem:[#allocation6 + $0x50c] sm:$0xf]
    %v303 = vld [vmem:[#allocation6 + $0x510] sm:$0xff]
    %v304 = vld [vmem:[#allocation6 + $0x518] sm:$0xf]
    %v305 = vld [vmem:[#allocation6 + $0x51c] sm:$0xff]
    %v306 = vld [vmem:[#allocation6 + $0x524] sm:$0xf]
    %v307 = vld [vmem:[#allocation6 + $0x528] sm:$0xff]
    %v308 = vld [vmem:[#allocation6 + $0x530] sm:$0xf]
    %v309 = vld [vmem:[#allocation6 + $0x534] sm:$0xff]
    %v310 = vld [vmem:[#allocation6 + $0x53c] sm:$0xf]
    %v311 = vld [vmem:[#allocation6 + $0x540] sm:$0xff]
    %v312 = vld [vmem:[#allocation6 + $0x548] sm:$0xf]
    %v313 = vld [vmem:[#allocation6 + $0x54c] sm:$0xff]
    %v314 = vld [vmem:[#allocation6 + $0x554] sm:$0xf]
    %v315 = vld [vmem:[#allocation6 + $0x558] sm:$0xff]
    %v316 = vld [vmem:[#allocation6 + $0x560] sm:$0xf]
    %v317 = vld [vmem:[#allocation6 + $0x564] sm:$0xff]
    %v318 = vld [vmem:[#allocation6 + $0x56c] sm:$0xf]
    %v319 = vld [vmem:[#allocation6 + $0x570] sm:$0xff]
    %v320 = vld [vmem:[#allocation6 + $0x578] sm:$0xf]
    %v321 = vld [vmem:[#allocation6 + $0x57c] sm:$0xff]
    %v322 = vld [vmem:[#allocation6 + $0x584] sm:$0xf]
    %v323 = vld [vmem:[#allocation6 + $0x588] sm:$0xff]
    %v324 = vld [vmem:[#allocation6 + $0x590] sm:$0xf]
    %v325 = vld [vmem:[#allocation6 + $0x594] sm:$0xff]
    %v326 = vld [vmem:[#allocation6 + $0x59c] sm:$0xf]
    %v327 = vld [vmem:[#allocation6 + $0x5a0] sm:$0xff]
    %v328 = vld [vmem:[#allocation6 + $0x5a8] sm:$0xf]
    %v329 = vld [vmem:[#allocation6 + $0x5ac] sm:$0xff]
    %v330 = vld [vmem:[#allocation6 + $0x5b4] sm:$0xf]
    %v331 = vld [vmem:[#allocation6 + $0x5b8] sm:$0xff]
    %v332 = vld [vmem:[#allocation6 + $0x5c0] sm:$0xf]
    %v333 = vld [vmem:[#allocation6 + $0x5c4] sm:$0xff]
    %v334 = vld [vmem:[#allocation6 + $0x5cc] sm:$0xf]
    %v335 = vld [vmem:[#allocation6 + $0x5d0] sm:$0xff]
    %v336 = vld [vmem:[#allocation6 + $0x5d8] sm:$0xf]
    %v337 = vld [vmem:[#allocation6 + $0x5dc] sm:$0xff]
    %v338 = vld [vmem:[#allocation6 + $0x5e4] sm:$0xf]
    %v339 = vld [vmem:[#allocation6 + $0x5e8] sm:$0xff]
    %v340 = vld [vmem:[#allocation6 + $0x5f0] sm:$0xf]
    %v341 = vld [vmem:[#allocation6 + $0x5f4] sm:$0xff]
    %v342 = vld [vmem:[#allocation6 + $0x5fc] sm:$0xf]
    %v351 = vunpack.c.l.b16 %v79
    %v352 = vunpack.c.h.b16 %v79
    %v353 = vunpack.c.l.b16 %v80
    %v354 = vunpack.c.h.b16 %v80
    %v355 = vunpack.c.l.b16 %v81
    %v356 = vunpack.c.h.b16 %v81
    %v357 = vunpack.c.l.b16 %v82
    %v358 = vunpack.c.h.b16 %v82
    %v359 = vunpack.c.l.b16 %v83
    %v360 = vunpack.c.h.b16 %v83
    %v361 = vunpack.c.l.b16 %v84
    %v362 = vunpack.c.h.b16 %v84
    %v363 = vunpack.c.l.b16 %v85
    %v364 = vunpack.c.h.b16 %v85
    %v365 = vunpack.c.l.b16 %v86
    %v366 = vunpack.c.h.b16 %v86
    %v367 = vpack.c.b16 %v359, %v351
    %v368 = vpack.c.b16 %v360, %v352
    %v369 = vpack.c.b16 %v361, %v353
    %v370 = vpack.c.b16 %v362, %v354
    %v371 = vpack.c.b16 %v363, %v355
    %v372 = vpack.c.b16 %v364, %v356
    %v373 = vpack.c.b16 %v365, %v357
    %v374 = vpack.c.b16 %v366, %v358
    %v639 = vunpack.c.l.b16 %v87
    %v640 = vunpack.c.h.b16 %v87
    %v641 = vunpack.c.l.b16 %v88
    %v642 = vunpack.c.l.b16 %v89
    %v643 = vunpack.c.h.b16 %v89
    %v644 = vunpack.c.l.b16 %v90
    %v645 = vunpack.c.l.b16 %v91
    %v646 = vunpack.c.h.b16 %v91
    %v647 = vunpack.c.l.b16 %v92
    %v648 = vunpack.c.l.b16 %v93
    %v649 = vunpack.c.h.b16 %v93
    %v650 = vunpack.c.l.b16 %v94
    %v651 = vunpack.c.l.b16 %v95
    %v652 = vunpack.c.h.b16 %v95
    %v653 = vunpack.c.l.b16 %v96
    %v654 = vunpack.c.l.b16 %v97
    %v655 = vunpack.c.h.b16 %v97
    %v656 = vunpack.c.l.b16 %v98
    %v657 = vunpack.c.l.b16 %v99
    %v658 = vunpack.c.h.b16 %v99
    %v659 = vunpack.c.l.b16 %v100
    %v660 = vunpack.c.l.b16 %v101
    %v661 = vunpack.c.h.b16 %v101
    %v662 = vunpack.c.l.b16 %v102
    %v663 = vunpack.c.l.b16 %v103
    %v664 = vunpack.c.h.b16 %v103
    %v665 = vunpack.c.l.b16 %v104
    %v666 = vunpack.c.l.b16 %v105
    %v667 = vunpack.c.h.b16 %v105
    %v668 = vunpack.c.l.b16 %v106
    %v669 = vunpack.c.l.b16 %v107
    %v670 = vunpack.c.h.b16 %v107
    %v671 = vunpack.c.l.b16 %v108
    %v672 = vunpack.c.l.b16 %v109
    %v673 = vunpack.c.h.b16 %v109
    %v674 = vunpack.c.l.b16 %v110
    %v675 = vunpack.c.l.b16 %v111
    %v676 = vunpack.c.h.b16 %v111
    %v677 = vunpack.c.l.b16 %v112
    %v678 = vunpack.c.l.b16 %v113
    %v679 = vunpack.c.h.b16 %v113
    %v680 = vunpack.c.l.b16 %v114
    %v681 = vunpack.c.l.b16 %v115
    %v682 = vunpack.c.h.b16 %v115
    %v683 = vunpack.c.l.b16 %v116
    %v684 = vunpack.c.l.b16 %v117
    %v685 = vunpack.c.h.b16 %v117
    %v686 = vunpack.c.l.b16 %v118
    %v687 = vunpack.c.l.b16 %v119
    %v688 = vunpack.c.h.b16 %v119
    %v689 = vunpack.c.l.b16 %v120
    %v690 = vunpack.c.l.b16 %v121
    %v691 = vunpack.c.h.b16 %v121
    %v692 = vunpack.c.l.b16 %v122
    %v693 = vunpack.c.l.b16 %v123
    %v694 = vunpack.c.h.b16 %v123
    %v695 = vunpack.c.l.b16 %v124
    %v696 = vunpack.c.l.b16 %v125
    %v697 = vunpack.c.h.b16 %v125
    %v698 = vunpack.c.l.b16 %v126
    %v699 = vunpack.c.l.b16 %v127
    %v700 = vunpack.c.h.b16 %v127
    %v701 = vunpack.c.l.b16 %v128
    %v702 = vunpack.c.l.b16 %v129
    %v703 = vunpack.c.h.b16 %v129
    %v704 = vunpack.c.l.b16 %v130
    %v705 = vunpack.c.l.b16 %v131
    %v706 = vunpack.c.h.b16 %v131
    %v707 = vunpack.c.l.b16 %v132
    %v708 = vunpack.c.l.b16 %v133
    %v709 = vunpack.c.h.b16 %v133
    %v710 = vunpack.c.l.b16 %v134
    %v711 = vunpack.c.l.b16 %v135
    %v712 = vunpack.c.h.b16 %v135
    %v713 = vunpack.c.l.b16 %v136
    %v714 = vunpack.c.l.b16 %v137
    %v715 = vunpack.c.h.b16 %v137
    %v716 = vunpack.c.l.b16 %v138
    %v717 = vunpack.c.l.b16 %v139
    %v718 = vunpack.c.h.b16 %v139
    %v719 = vunpack.c.l.b16 %v140
    %v720 = vunpack.c.l.b16 %v141
    %v721 = vunpack.c.h.b16 %v141
    %v722 = vunpack.c.l.b16 %v142
    %v723 = vunpack.c.l.b16 %v143
    %v724 = vunpack.c.h.b16 %v143
    %v725 = vunpack.c.l.b16 %v144
    %v726 = vunpack.c.l.b16 %v145
    %v727 = vunpack.c.h.b16 %v145
    %v728 = vunpack.c.l.b16 %v146
    %v729 = vunpack.c.l.b16 %v147
    %v730 = vunpack.c.h.b16 %v147
    %v731 = vunpack.c.l.b16 %v148
    %v732 = vunpack.c.l.b16 %v149
    %v733 = vunpack.c.h.b16 %v149
    %v734 = vunpack.c.l.b16 %v150
    %v735 = vunpack.c.l.b16 %v151
    %v736 = vunpack.c.h.b16 %v151
    %v737 = vunpack.c.l.b16 %v152
    %v738 = vunpack.c.l.b16 %v153
    %v739 = vunpack.c.h.b16 %v153
    %v740 = vunpack.c.l.b16 %v154
    %v741 = vunpack.c.l.b16 %v155
    %v742 = vunpack.c.h.b16 %v155
    %v743 = vunpack.c.l.b16 %v156
    %v744 = vunpack.c.l.b16 %v157
    %v745 = vunpack.c.h.b16 %v157
    %v746 = vunpack.c.l.b16 %v158
    %v747 = vunpack.c.l.b16 %v159
    %v748 = vunpack.c.h.b16 %v159
    %v749 = vunpack.c.l.b16 %v160
    %v750 = vunpack.c.l.b16 %v161
    %v751 = vunpack.c.h.b16 %v161
    %v752 = vunpack.c.l.b16 %v162
    %v753 = vunpack.c.l.b16 %v163
    %v754 = vunpack.c.h.b16 %v163
    %v755 = vunpack.c.l.b16 %v164
    %v756 = vunpack.c.l.b16 %v165
    %v757 = vunpack.c.h.b16 %v165
    %v758 = vunpack.c.l.b16 %v166
    %v759 = vunpack.c.l.b16 %v167
    %v760 = vunpack.c.h.b16 %v167
    %v761 = vunpack.c.l.b16 %v168
    %v762 = vunpack.c.l.b16 %v169
    %v763 = vunpack.c.h.b16 %v169
    %v764 = vunpack.c.l.b16 %v170
    %v765 = vunpack.c.l.b16 %v171
    %v766 = vunpack.c.h.b16 %v171
    %v767 = vunpack.c.l.b16 %v172
    %v768 = vunpack.c.l.b16 %v173
    %v769 = vunpack.c.h.b16 %v173
    %v770 = vunpack.c.l.b16 %v174
    %v771 = vunpack.c.l.b16 %v175
    %v772 = vunpack.c.h.b16 %v175
    %v773 = vunpack.c.l.b16 %v176
    %v774 = vunpack.c.l.b16 %v177
    %v775 = vunpack.c.h.b16 %v177
    %v776 = vunpack.c.l.b16 %v178
    %v777 = vunpack.c.l.b16 %v179
    %v778 = vunpack.c.h.b16 %v179
    %v779 = vunpack.c.l.b16 %v180
    %v780 = vunpack.c.l.b16 %v181
    %v781 = vunpack.c.h.b16 %v181
    %v782 = vunpack.c.l.b16 %v182
    %v783 = vunpack.c.l.b16 %v183
    %v784 = vunpack.c.h.b16 %v183
    %v785 = vunpack.c.l.b16 %v184
    %v786 = vunpack.c.l.b16 %v185
    %v787 = vunpack.c.h.b16 %v185
    %v788 = vunpack.c.l.b16 %v186
    %v789 = vunpack.c.l.b16 %v187
    %v790 = vunpack.c.h.b16 %v187
    %v791 = vunpack.c.l.b16 %v188
    %v792 = vunpack.c.l.b16 %v189
    %v793 = vunpack.c.h.b16 %v189
    %v794 = vunpack.c.l.b16 %v190
    %v795 = vunpack.c.l.b16 %v191
    %v796 = vunpack.c.h.b16 %v191
    %v797 = vunpack.c.l.b16 %v192
    %v798 = vunpack.c.l.b16 %v193
    %v799 = vunpack.c.h.b16 %v193
    %v800 = vunpack.c.l.b16 %v194
    %v801 = vunpack.c.l.b16 %v195
    %v802 = vunpack.c.h.b16 %v195
    %v803 = vunpack.c.l.b16 %v196
    %v804 = vunpack.c.l.b16 %v197
    %v805 = vunpack.c.h.b16 %v197
    %v806 = vunpack.c.l.b16 %v198
    %v807 = vunpack.c.l.b16 %v199
    %v808 = vunpack.c.h.b16 %v199
    %v809 = vunpack.c.l.b16 %v200
    %v810 = vunpack.c.l.b16 %v201
    %v811 = vunpack.c.h.b16 %v201
    %v812 = vunpack.c.l.b16 %v202
    %v813 = vunpack.c.l.b16 %v203
    %v814 = vunpack.c.h.b16 %v203
    %v815 = vunpack.c.l.b16 %v204
    %v816 = vunpack.c.l.b16 %v205
    %v817 = vunpack.c.h.b16 %v205
    %v818 = vunpack.c.l.b16 %v206
    %v819 = vunpack.c.l.b16 %v207
    %v820 = vunpack.c.h.b16 %v207
    %v821 = vunpack.c.l.b16 %v208
    %v822 = vunpack.c.l.b16 %v209
    %v823 = vunpack.c.h.b16 %v209
    %v824 = vunpack.c.l.b16 %v210
    %v825 = vunpack.c.l.b16 %v211
    %v826 = vunpack.c.h.b16 %v211
    %v827 = vunpack.c.l.b16 %v212
    %v828 = vunpack.c.l.b16 %v213
    %v829 = vunpack.c.h.b16 %v213
    %v830 = vunpack.c.l.b16 %v214
    %v831 = vunpack.c.l.b16 %v215
    %v832 = vunpack.c.h.b16 %v215
    %v833 = vunpack.c.l.b16 %v216
    %v834 = vunpack.c.l.b16 %v217
    %v835 = vunpack.c.h.b16 %v217
    %v836 = vunpack.c.l.b16 %v218
    %v837 = vunpack.c.l.b16 %v219
    %v838 = vunpack.c.h.b16 %v219
    %v839 = vunpack.c.l.b16 %v220
    %v840 = vunpack.c.l.b16 %v221
    %v841 = vunpack.c.h.b16 %v221
    %v842 = vunpack.c.l.b16 %v222
    %v843 = vunpack.c.l.b16 %v223
    %v844 = vunpack.c.h.b16 %v223
    %v845 = vunpack.c.l.b16 %v224
    %v846 = vunpack.c.l.b16 %v225
    %v847 = vunpack.c.h.b16 %v225
    %v848 = vunpack.c.l.b16 %v226
    %v849 = vunpack.c.l.b16 %v227
    %v850 = vunpack.c.h.b16 %v227
    %v851 = vunpack.c.l.b16 %v228
    %v852 = vunpack.c.l.b16 %v229
    %v853 = vunpack.c.h.b16 %v229
    %v854 = vunpack.c.l.b16 %v230
    %v855 = vunpack.c.l.b16 %v231
    %v856 = vunpack.c.h.b16 %v231
    %v857 = vunpack.c.l.b16 %v232
    %v858 = vunpack.c.l.b16 %v233
    %v859 = vunpack.c.h.b16 %v233
    %v860 = vunpack.c.l.b16 %v234
    %v861 = vunpack.c.l.b16 %v235
    %v862 = vunpack.c.h.b16 %v235
    %v863 = vunpack.c.l.b16 %v236
    %v864 = vunpack.c.l.b16 %v237
    %v865 = vunpack.c.h.b16 %v237
    %v866 = vunpack.c.l.b16 %v238
    %v867 = vunpack.c.l.b16 %v239
    %v868 = vunpack.c.h.b16 %v239
    %v869 = vunpack.c.l.b16 %v240
    %v870 = vunpack.c.l.b16 %v241
    %v871 = vunpack.c.h.b16 %v241
    %v872 = vunpack.c.l.b16 %v242
    %v873 = vunpack.c.l.b16 %v243
    %v874 = vunpack.c.h.b16 %v243
    %v875 = vunpack.c.l.b16 %v244
    %v876 = vunpack.c.l.b16 %v245
    %v877 = vunpack.c.h.b16 %v245
    %v878 = vunpack.c.l.b16 %v246
    %v879 = vunpack.c.l.b16 %v247
    %v880 = vunpack.c.h.b16 %v247
    %v881 = vunpack.c.l.b16 %v248
    %v882 = vunpack.c.l.b16 %v249
    %v883 = vunpack.c.h.b16 %v249
    %v884 = vunpack.c.l.b16 %v250
    %v885 = vunpack.c.l.b16 %v251
    %v886 = vunpack.c.h.b16 %v251
    %v887 = vunpack.c.l.b16 %v252
    %v888 = vunpack.c.l.b16 %v253
    %v889 = vunpack.c.h.b16 %v253
    %v890 = vunpack.c.l.b16 %v254
    %v891 = vunpack.c.l.b16 %v255
    %v892 = vunpack.c.h.b16 %v255
    %v893 = vunpack.c.l.b16 %v256
    %v894 = vunpack.c.l.b16 %v257
    %v895 = vunpack.c.h.b16 %v257
    %v896 = vunpack.c.l.b16 %v258
    %v897 = vunpack.c.l.b16 %v259
    %v898 = vunpack.c.h.b16 %v259
    %v899 = vunpack.c.l.b16 %v260
    %v900 = vunpack.c.l.b16 %v261
    %v901 = vunpack.c.h.b16 %v261
    %v902 = vunpack.c.l.b16 %v262
    %v903 = vunpack.c.l.b16 %v263
    %v904 = vunpack.c.h.b16 %v263
    %v905 = vunpack.c.l.b16 %v264
    %v906 = vunpack.c.l.b16 %v265
    %v907 = vunpack.c.h.b16 %v265
    %v908 = vunpack.c.l.b16 %v266
    %v909 = vunpack.c.l.b16 %v267
    %v910 = vunpack.c.h.b16 %v267
    %v911 = vunpack.c.l.b16 %v268
    %v912 = vunpack.c.l.b16 %v269
    %v913 = vunpack.c.h.b16 %v269
    %v914 = vunpack.c.l.b16 %v270
    %v915 = vunpack.c.l.b16 %v271
    %v916 = vunpack.c.h.b16 %v271
    %v917 = vunpack.c.l.b16 %v272
    %v918 = vunpack.c.l.b16 %v273
    %v919 = vunpack.c.h.b16 %v273
    %v920 = vunpack.c.l.b16 %v274
    %v921 = vunpack.c.l.b16 %v275
    %v922 = vunpack.c.h.b16 %v275
    %v923 = vunpack.c.l.b16 %v276
    %v924 = vunpack.c.l.b16 %v277
    %v925 = vunpack.c.h.b16 %v277
    %v926 = vunpack.c.l.b16 %v278
    %v927 = vunpack.c.l.b16 %v279
    %v928 = vunpack.c.h.b16 %v279
    %v929 = vunpack.c.l.b16 %v280
    %v930 = vunpack.c.l.b16 %v281
    %v931 = vunpack.c.h.b16 %v281
    %v932 = vunpack.c.l.b16 %v282
    %v933 = vunpack.c.l.b16 %v283
    %v934 = vunpack.c.h.b16 %v283
    %v935 = vunpack.c.l.b16 %v284
    %v936 = vunpack.c.l.b16 %v285
    %v937 = vunpack.c.h.b16 %v285
    %v938 = vunpack.c.l.b16 %v286
    %v939 = vunpack.c.l.b16 %v287
    %v940 = vunpack.c.h.b16 %v287
    %v941 = vunpack.c.l.b16 %v288
    %v942 = vunpack.c.l.b16 %v289
    %v943 = vunpack.c.h.b16 %v289
    %v944 = vunpack.c.l.b16 %v290
    %v945 = vunpack.c.l.b16 %v291
    %v946 = vunpack.c.h.b16 %v291
    %v947 = vunpack.c.l.b16 %v292
    %v948 = vunpack.c.l.b16 %v293
    %v949 = vunpack.c.h.b16 %v293
    %v950 = vunpack.c.l.b16 %v294
    %v951 = vunpack.c.l.b16 %v295
    %v952 = vunpack.c.h.b16 %v295
    %v953 = vunpack.c.l.b16 %v296
    %v954 = vunpack.c.l.b16 %v297
    %v955 = vunpack.c.h.b16 %v297
    %v956 = vunpack.c.l.b16 %v298
    %v957 = vunpack.c.l.b16 %v299
    %v958 = vunpack.c.h.b16 %v299
    %v959 = vunpack.c.l.b16 %v300
    %v960 = vunpack.c.l.b16 %v301
    %v961 = vunpack.c.h.b16 %v301
    %v962 = vunpack.c.l.b16 %v302
    %v963 = vunpack.c.l.b16 %v303
    %v964 = vunpack.c.h.b16 %v303
    %v965 = vunpack.c.l.b16 %v304
    %v966 = vunpack.c.l.b16 %v305
    %v967 = vunpack.c.h.b16 %v305
    %v968 = vunpack.c.l.b16 %v306
    %v969 = vunpack.c.l.b16 %v307
    %v970 = vunpack.c.h.b16 %v307
    %v971 = vunpack.c.l.b16 %v308
    %v972 = vunpack.c.l.b16 %v309
    %v973 = vunpack.c.h.b16 %v309
    %v974 = vunpack.c.l.b16 %v310
    %v975 = vunpack.c.l.b16 %v311
    %v976 = vunpack.c.h.b16 %v311
    %v977 = vunpack.c.l.b16 %v312
    %v978 = vunpack.c.l.b16 %v313
    %v979 = vunpack.c.h.b16 %v313
    %v980 = vunpack.c.l.b16 %v314
    %v981 = vunpack.c.l.b16 %v315
    %v982 = vunpack.c.h.b16 %v315
    %v983 = vunpack.c.l.b16 %v316
    %v984 = vunpack.c.l.b16 %v317
    %v985 = vunpack.c.h.b16 %v317
    %v986 = vunpack.c.l.b16 %v318
    %v987 = vunpack.c.l.b16 %v319
    %v988 = vunpack.c.h.b16 %v319
    %v989 = vunpack.c.l.b16 %v320
    %v990 = vunpack.c.l.b16 %v321
    %v991 = vunpack.c.h.b16 %v321
    %v992 = vunpack.c.l.b16 %v322
    %v993 = vunpack.c.l.b16 %v323
    %v994 = vunpack.c.h.b16 %v323
    %v995 = vunpack.c.l.b16 %v324
    %v996 = vunpack.c.l.b16 %v325
    %v997 = vunpack.c.h.b16 %v325
    %v998 = vunpack.c.l.b16 %v326
    %v999 = vunpack.c.l.b16 %v327
    %v1000 = vunpack.c.h.b16 %v327
    %v1001 = vunpack.c.l.b16 %v328
    %v1002 = vunpack.c.l.b16 %v329
    %v1003 = vunpack.c.h.b16 %v329
    %v1004 = vunpack.c.l.b16 %v330
    %v1005 = vunpack.c.l.b16 %v331
    %v1006 = vunpack.c.h.b16 %v331
    %v1007 = vunpack.c.l.b16 %v332
    %v1008 = vunpack.c.l.b16 %v333
    %v1009 = vunpack.c.h.b16 %v333
    %v1010 = vunpack.c.l.b16 %v334
    %v1011 = vunpack.c.l.b16 %v335
    %v1012 = vunpack.c.h.b16 %v335
    %v1013 = vunpack.c.l.b16 %v336
    %v1014 = vunpack.c.l.b16 %v337
    %v1015 = vunpack.c.h.b16 %v337
    %v1016 = vunpack.c.l.b16 %v338
    %v1017 = vunpack.c.l.b16 %v339
    %v1018 = vunpack.c.h.b16 %v339
    %v1019 = vunpack.c.l.b16 %v340
    %v1020 = vunpack.c.l.b16 %v341
    %v1021 = vunpack.c.h.b16 %v341
    %v1022 = vunpack.c.l.b16 %v342
    %v1023 = vpack.c.b16 %v642, %v639
    %v1024 = vpack.c.b16 %v643, %v640
    %v1025 = vpack.c.b16 %v644, %v641
    %v1026 = vpack.c.b16 %v648, %v645
    %v1027 = vpack.c.b16 %v649, %v646
    %v1028 = vpack.c.b16 %v650, %v647
    %v1029 = vpack.c.b16 %v654, %v651
    %v1030 = vpack.c.b16 %v655, %v652
    %v1031 = vpack.c.b16 %v656, %v653
    %v1032 = vpack.c.b16 %v660, %v657
    %v1033 = vpack.c.b16 %v661, %v658
    %v1034 = vpack.c.b16 %v662, %v659
    %v1035 = vpack.c.b16 %v666, %v663
    %v1036 = vpack.c.b16 %v667, %v664
    %v1037 = vpack.c.b16 %v668, %v665
    %v1038 = vpack.c.b16 %v672, %v669
    %v1039 = vpack.c.b16 %v673, %v670
    %v1040 = vpack.c.b16 %v674, %v671
    %v1041 = vpack.c.b16 %v678, %v675
    %v1042 = vpack.c.b16 %v679, %v676
    %v1043 = vpack.c.b16 %v680, %v677
    %v1044 = vpack.c.b16 %v684, %v681
    %v1045 = vpack.c.b16 %v685, %v682
    %v1046 = vpack.c.b16 %v686, %v683
    %v1047 = vpack.c.b16 %v690, %v687
    %v1048 = vpack.c.b16 %v691, %v688
    %v1049 = vpack.c.b16 %v692, %v689
    %v1050 = vpack.c.b16 %v696, %v693
    %v1051 = vpack.c.b16 %v697, %v694
    %v1052 = vpack.c.b16 %v698, %v695
    %v1053 = vpack.c.b16 %v702, %v699
    %v1054 = vpack.c.b16 %v703, %v700
    %v1055 = vpack.c.b16 %v704, %v701
    %v1056 = vpack.c.b16 %v708, %v705
    %v1057 = vpack.c.b16 %v709, %v706
    %v1058 = vpack.c.b16 %v710, %v707
    %v1059 = vpack.c.b16 %v714, %v711
    %v1060 = vpack.c.b16 %v715, %v712
    %v1061 = vpack.c.b16 %v716, %v713
    %v1062 = vpack.c.b16 %v720, %v717
    %v1063 = vpack.c.b16 %v721, %v718
    %v1064 = vpack.c.b16 %v722, %v719
    %v1065 = vpack.c.b16 %v726, %v723
    %v1066 = vpack.c.b16 %v727, %v724
    %v1067 = vpack.c.b16 %v728, %v725
    %v1068 = vpack.c.b16 %v732, %v729
    %v1069 = vpack.c.b16 %v733, %v730
    %v1070 = vpack.c.b16 %v734, %v731
    %v1071 = vpack.c.b16 %v738, %v735
    %v1072 = vpack.c.b16 %v739, %v736
    %v1073 = vpack.c.b16 %v740, %v737
    %v1074 = vpack.c.b16 %v744, %v741
    %v1075 = vpack.c.b16 %v745, %v742
    %v1076 = vpack.c.b16 %v746, %v743
    %v1077 = vpack.c.b16 %v750, %v747
    %v1078 = vpack.c.b16 %v751, %v748
    %v1079 = vpack.c.b16 %v752, %v749
    %v1080 = vpack.c.b16 %v756, %v753
    %v1081 = vpack.c.b16 %v757, %v754
    %v1082 = vpack.c.b16 %v758, %v755
    %v1083 = vpack.c.b16 %v762, %v759
    %v1084 = vpack.c.b16 %v763, %v760
    %v1085 = vpack.c.b16 %v764, %v761
    %v1086 = vpack.c.b16 %v768, %v765
    %v1087 = vpack.c.b16 %v769, %v766
    %v1088 = vpack.c.b16 %v770, %v767
    %v1089 = vpack.c.b16 %v774, %v771
    %v1090 = vpack.c.b16 %v775, %v772
    %v1091 = vpack.c.b16 %v776, %v773
    %v1092 = vpack.c.b16 %v780, %v777
    %v1093 = vpack.c.b16 %v781, %v778
    %v1094 = vpack.c.b16 %v782, %v779
    %v1095 = vpack.c.b16 %v786, %v783
    %v1096 = vpack.c.b16 %v787, %v784
    %v1097 = vpack.c.b16 %v788, %v785
    %v1098 = vpack.c.b16 %v792, %v789
    %v1099 = vpack.c.b16 %v793, %v790
    %v1100 = vpack.c.b16 %v794, %v791
    %v1101 = vpack.c.b16 %v798, %v795
    %v1102 = vpack.c.b16 %v799, %v796
    %v1103 = vpack.c.b16 %v800, %v797
    %v1104 = vpack.c.b16 %v804, %v801
    %v1105 = vpack.c.b16 %v805, %v802
    %v1106 = vpack.c.b16 %v806, %v803
    %v1107 = vpack.c.b16 %v810, %v807
    %v1108 = vpack.c.b16 %v811, %v808
    %v1109 = vpack.c.b16 %v812, %v809
    %v1110 = vpack.c.b16 %v816, %v813
    %v1111 = vpack.c.b16 %v817, %v814
    %v1112 = vpack.c.b16 %v818, %v815
    %v1113 = vpack.c.b16 %v822, %v819
    %v1114 = vpack.c.b16 %v823, %v820
    %v1115 = vpack.c.b16 %v824, %v821
    %v1116 = vpack.c.b16 %v828, %v825
    %v1117 = vpack.c.b16 %v829, %v826
    %v1118 = vpack.c.b16 %v830, %v827
    %v1119 = vpack.c.b16 %v834, %v831
    %v1120 = vpack.c.b16 %v835, %v832
    %v1121 = vpack.c.b16 %v836, %v833
    %v1122 = vpack.c.b16 %v840, %v837
    %v1123 = vpack.c.b16 %v841, %v838
    %v1124 = vpack.c.b16 %v842, %v839
    %v1125 = vpack.c.b16 %v846, %v843
    %v1126 = vpack.c.b16 %v847, %v844
    %v1127 = vpack.c.b16 %v848, %v845
    %v1128 = vpack.c.b16 %v852, %v849
    %v1129 = vpack.c.b16 %v853, %v850
    %v1130 = vpack.c.b16 %v854, %v851
    %v1131 = vpack.c.b16 %v858, %v855
    %v1132 = vpack.c.b16 %v859, %v856
    %v1133 = vpack.c.b16 %v860, %v857
    %v1134 = vpack.c.b16 %v864, %v861
    %v1135 = vpack.c.b16 %v865, %v862
    %v1136 = vpack.c.b16 %v866, %v863
    %v1137 = vpack.c.b16 %v870, %v867
    %v1138 = vpack.c.b16 %v871, %v868
    %v1139 = vpack.c.b16 %v872, %v869
    %v1140 = vpack.c.b16 %v876, %v873
    %v1141 = vpack.c.b16 %v877, %v874
    %v1142 = vpack.c.b16 %v878, %v875
    %v1143 = vpack.c.b16 %v882, %v879
    %v1144 = vpack.c.b16 %v883, %v880
    %v1145 = vpack.c.b16 %v884, %v881
    %v1146 = vpack.c.b16 %v888, %v885
    %v1147 = vpack.c.b16 %v889, %v886
    %v1148 = vpack.c.b16 %v890, %v887
    %v1149 = vpack.c.b16 %v894, %v891
    %v1150 = vpack.c.b16 %v895, %v892
    %v1151 = vpack.c.b16 %v896, %v893
    %v1152 = vpack.c.b16 %v900, %v897
    %v1153 = vpack.c.b16 %v901, %v898
    %v1154 = vpack.c.b16 %v902, %v899
    %v1155 = vpack.c.b16 %v906, %v903
    %v1156 = vpack.c.b16 %v907, %v904
    %v1157 = vpack.c.b16 %v908, %v905
    %v1158 = vpack.c.b16 %v912, %v909
    %v1159 = vpack.c.b16 %v913, %v910
    %v1160 = vpack.c.b16 %v914, %v911
    %v1161 = vpack.c.b16 %v918, %v915
    %v1162 = vpack.c.b16 %v919, %v916
    %v1163 = vpack.c.b16 %v920, %v917
    %v1164 = vpack.c.b16 %v924, %v921
    %v1165 = vpack.c.b16 %v925, %v922
    %v1166 = vpack.c.b16 %v926, %v923
    %v1167 = vpack.c.b16 %v930, %v927
    %v1168 = vpack.c.b16 %v931, %v928
    %v1169 = vpack.c.b16 %v932, %v929
    %v1170 = vpack.c.b16 %v936, %v933
    %v1171 = vpack.c.b16 %v937, %v934
    %v1172 = vpack.c.b16 %v938, %v935
    %v1173 = vpack.c.b16 %v942, %v939
    %v1174 = vpack.c.b16 %v943, %v940
    %v1175 = vpack.c.b16 %v944, %v941
    %v1176 = vpack.c.b16 %v948, %v945
    %v1177 = vpack.c.b16 %v949, %v946
    %v1178 = vpack.c.b16 %v950, %v947
    %v1179 = vpack.c.b16 %v954, %v951
    %v1180 = vpack.c.b16 %v955, %v952
    %v1181 = vpack.c.b16 %v956, %v953
    %v1182 = vpack.c.b16 %v960, %v957
    %v1183 = vpack.c.b16 %v961, %v958
    %v1184 = vpack.c.b16 %v962, %v959
    %v1185 = vpack.c.b16 %v966, %v963
    %v1186 = vpack.c.b16 %v967, %v964
    %v1187 = vpack.c.b16 %v968, %v965
    %v1188 = vpack.c.b16 %v972, %v969
    %v1189 = vpack.c.b16 %v973, %v970
    %v1190 = vpack.c.b16 %v974, %v971
    %v1191 = vpack.c.b16 %v978, %v975
    %v1192 = vpack.c.b16 %v979, %v976
    %v1193 = vpack.c.b16 %v980, %v977
    %v1194 = vpack.c.b16 %v984, %v981
    %v1195 = vpack.c.b16 %v985, %v982
    %v1196 = vpack.c.b16 %v986, %v983
    %v1197 = vpack.c.b16 %v990, %v987
    %v1198 = vpack.c.b16 %v991, %v988
    %v1199 = vpack.c.b16 %v992, %v989
    %v1200 = vpack.c.b16 %v996, %v993
    %v1201 = vpack.c.b16 %v997, %v994
    %v1202 = vpack.c.b16 %v998, %v995
    %v1203 = vpack.c.b16 %v1002, %v999
    %v1204 = vpack.c.b16 %v1003, %v1000
    %v1205 = vpack.c.b16 %v1004, %v1001
    %v1206 = vpack.c.b16 %v1008, %v1005
    %v1207 = vpack.c.b16 %v1009, %v1006
    %v1208 = vpack.c.b16 %v1010, %v1007
    %v1209 = vpack.c.b16 %v1014, %v1011
    %v1210 = vpack.c.b16 %v1015, %v1012
    %v1211 = vpack.c.b16 %v1016, %v1013
    %v1212 = vpack.c.b16 %v1020, %v1017
    %v1213 = vpack.c.b16 %v1021, %v1018
    %v1214 = vpack.c.b16 %v1022, %v1019
    %1407 = vmatprep.subr.bf16.mxu0 %v1045
    %1408 = vmatpush1.bf16.msra.mxu0 %v1044
    %1409 = vmatprep.subr.bf16.mxu0 %v1042
    %1410 = vmatpush1.bf16.msra.mxu0 %v1041
    %1411 = vmatprep.subr.bf16.mxu0 %v1039
    %1412 = vmatpush1.bf16.msra.mxu0 %v1038
    %1413 = vmatprep.subr.bf16.mxu0 %v1036
    %1414 = vmatpush1.bf16.msra.mxu0 %v1035
    %1415 = vmatprep.subr.bf16.mxu0 %v1033
    %1416 = vmatpush1.bf16.msra.mxu0 %v1032
    %1417 = vmatprep.subr.bf16.mxu0 %v1030
    %1418 = vmatpush1.bf16.msra.mxu0 %v1029
    %1419 = vmatprep.subr.bf16.mxu0 %v1027
    %1420 = vmatpush1.bf16.msra.mxu0 %v1026
    %1421 = vmatprep.subr.bf16.mxu0 %v1024
    %1422 = vmatpush1.bf16.msra.mxu0 %v1023
    %1423 = vmatprep.subr.bf16.mxu0 %v1069
    %1424 = vmatpush2.bf16.msra.mxu0 %v1068
    %1425 = vmatprep.subr.bf16.mxu0 %v1066
    %1426 = vmatpush2.bf16.msra.mxu0 %v1065
    %1427 = vmatprep.subr.bf16.mxu0 %v1063
    %1428 = vmatpush2.bf16.msra.mxu0 %v1062
    %1429 = vmatprep.subr.bf16.mxu0 %v1060
    %1430 = vmatpush2.bf16.msra.mxu0 %v1059
    %1431 = vmatprep.subr.bf16.mxu0 %v1057
    %1432 = vmatpush2.bf16.msra.mxu0 %v1056
    %1433 = vmatprep.subr.bf16.mxu0 %v1054
    %1434 = vmatpush2.bf16.msra.mxu0 %v1053
    %1435 = vmatprep.subr.bf16.mxu0 %v1051
    %1436 = vmatpush2.bf16.msra.mxu0 %v1050
    %1437 = vmatprep.subr.bf16.mxu0 %v1048
    %1438 = vmatpush2.bf16.msra.mxu0 %v1047
    %1439 = vmatprep.mubr.bf16.mxu0 %v368
    %1440 = vmatmul.mubr.bf16.gmra.mxu0 %v367
    %v1441 = vpop.f32.mrf.mxu0
    %v1442 = vadd.f32 0.0, %v1441
    %v1443 = vpop.f32.mrf.mxu0
    %v1444 = vadd.f32 0.0, %v1443
    %v1445 = vpop.f32.mrf.mxu0
    %v1446 = vadd.f32 0.0, %v1445
    %v1447 = vpop.f32.mrf.mxu0
    %v1448 = vadd.f32 0.0, %v1447
    %1449 = vdwg.mxu0
    %1450 = vmatprep.subr.bf16.mxu0 %v1093
    %1451 = vmatpush1.bf16.msra.mxu0 %v1092
    %1452 = vmatprep.subr.bf16.mxu0 %v1090
    %1453 = vmatpush1.bf16.msra.mxu0 %v1089
    %1454 = vmatprep.subr.bf16.mxu0 %v1087
    %1455 = vmatpush1.bf16.msra.mxu0 %v1086
    %1456 = vmatprep.subr.bf16.mxu0 %v1084
    %1457 = vmatpush1.bf16.msra.mxu0 %v1083
    %1458 = vmatprep.subr.bf16.mxu0 %v1081
    %1459 = vmatpush1.bf16.msra.mxu0 %v1080
    %1460 = vmatprep.subr.bf16.mxu0 %v1078
    %1461 = vmatpush1.bf16.msra.mxu0 %v1077
    %1462 = vmatprep.subr.bf16.mxu0 %v1075
    %1463 = vmatpush1.bf16.msra.mxu0 %v1074
    %1464 = vmatprep.subr.bf16.mxu0 %v1072
    %1465 = vmatpush1.bf16.msra.mxu0 %v1071
    %1466 = vmatprep.subr.bf16.mxu0 %v1117
    %1467 = vmatpush2.bf16.msra.mxu0 %v1116
    %1468 = vmatprep.subr.bf16.mxu0 %v1114
    %1469 = vmatpush2.bf16.msra.mxu0 %v1113
    %1470 = vmatprep.subr.bf16.mxu0 %v1111
    %1471 = vmatpush2.bf16.msra.mxu0 %v1110
    %1472 = vmatprep.subr.bf16.mxu0 %v1108
    %1473 = vmatpush2.bf16.msra.mxu0 %v1107
    %1474 = vmatprep.subr.bf16.mxu0 %v1105
    %1475 = vmatpush2.bf16.msra.mxu0 %v1104
    %1476 = vmatprep.subr.bf16.mxu0 %v1102
    %1477 = vmatpush2.bf16.msra.mxu0 %v1101
    %1478 = vmatprep.subr.bf16.mxu0 %v1099
    %1479 = vmatpush2.bf16.msra.mxu0 %v1098
    %1480 = vmatprep.subr.bf16.mxu0 %v1096
    %1481 = vmatpush2.bf16.msra.mxu0 %v1095
    %1482 = vmatprep.mubr.bf16.mxu0 %v370
    %1483 = vmatmul.mubr.bf16.gmra.mxu0 %v369
    %v1484 = vpop.f32.mrf.mxu0
    %v1485 = vadd.f32 %v1442, %v1484
    %v1486 = vpop.f32.mrf.mxu0
    %v1487 = vadd.f32 %v1444, %v1486
    %v1488 = vpop.f32.mrf.mxu0
    %v1489 = vadd.f32 %v1446, %v1488
    %v1490 = vpop.f32.mrf.mxu0
    %v1491 = vadd.f32 %v1448, %v1490
    %1492 = vdwg.mxu0
    %1493 = vmatprep.subr.bf16.mxu0 %v1141
    %1494 = vmatpush1.bf16.msra.mxu0 %v1140
    %1495 = vmatprep.subr.bf16.mxu0 %v1138
    %1496 = vmatpush1.bf16.msra.mxu0 %v1137
    %1497 = vmatprep.subr.bf16.mxu0 %v1135
    %1498 = vmatpush1.bf16.msra.mxu0 %v1134
    %1499 = vmatprep.subr.bf16.mxu0 %v1132
    %1500 = vmatpush1.bf16.msra.mxu0 %v1131
    %1501 = vmatprep.subr.bf16.mxu0 %v1129
    %1502 = vmatpush1.bf16.msra.mxu0 %v1128
    %1503 = vmatprep.subr.bf16.mxu0 %v1126
    %1504 = vmatpush1.bf16.msra.mxu0 %v1125
    %1505 = vmatprep.subr.bf16.mxu0 %v1123
    %1506 = vmatpush1.bf16.msra.mxu0 %v1122
    %1507 = vmatprep.subr.bf16.mxu0 %v1120
    %1508 = vmatpush1.bf16.msra.mxu0 %v1119
    %1509 = vmatprep.subr.bf16.mxu0 %v1165
    %1510 = vmatpush2.bf16.msra.mxu0 %v1164
    %1511 = vmatprep.subr.bf16.mxu0 %v1162
    %1512 = vmatpush2.bf16.msra.mxu0 %v1161
    %1513 = vmatprep.subr.bf16.mxu0 %v1159
    %1514 = vmatpush2.bf16.msra.mxu0 %v1158
    %1515 = vmatprep.subr.bf16.mxu0 %v1156
    %1516 = vmatpush2.bf16.msra.mxu0 %v1155
    %1517 = vmatprep.subr.bf16.mxu0 %v1153
    %1518 = vmatpush2.bf16.msra.mxu0 %v1152
    %1519 = vmatprep.subr.bf16.mxu0 %v1150
    %1520 = vmatpush2.bf16.msra.mxu0 %v1149
    %1521 = vmatprep.subr.bf16.mxu0 %v1147
    %1522 = vmatpush2.bf16.msra.mxu0 %v1146
    %1523 = vmatprep.subr.bf16.mxu0 %v1144
    %1524 = vmatpush2.bf16.msra.mxu0 %v1143
    %1525 = vmatprep.mubr.bf16.mxu0 %v372
    %1526 = vmatmul.mubr.bf16.gmra.mxu0 %v371
    %v1527 = vpop.f32.mrf.mxu0
    %v1528 = vadd.f32 %v1485, %v1527
    %v1529 = vpop.f32.mrf.mxu0
    %v1530 = vadd.f32 %v1487, %v1529
    %v1531 = vpop.f32.mrf.mxu0
    %v1532 = vadd.f32 %v1489, %v1531
    %v1533 = vpop.f32.mrf.mxu0
    %v1534 = vadd.f32 %v1491, %v1533
    %1535 = vdwg.mxu0
    %1536 = vmatprep.subr.bf16.mxu0 %v1189
    %1537 = vmatpush1.bf16.msra.mxu0 %v1188
    %1538 = vmatprep.subr.bf16.mxu0 %v1186
    %1539 = vmatpush1.bf16.msra.mxu0 %v1185
    %1540 = vmatprep.subr.bf16.mxu0 %v1183
    %1541 = vmatpush1.bf16.msra.mxu0 %v1182
    %1542 = vmatprep.subr.bf16.mxu0 %v1180
    %1543 = vmatpush1.bf16.msra.mxu0 %v1179
    %1544 = vmatprep.subr.bf16.mxu0 %v1177
    %1545 = vmatpush1.bf16.msra.mxu0 %v1176
    %1546 = vmatprep.subr.bf16.mxu0 %v1174
    %1547 = vmatpush1.bf16.msra.mxu0 %v1173
    %1548 = vmatprep.subr.bf16.mxu0 %v1171
    %1549 = vmatpush1.bf16.msra.mxu0 %v1170
    %1550 = vmatprep.subr.bf16.mxu0 %v1168
    %1551 = vmatpush1.bf16.msra.mxu0 %v1167
    %1552 = vmatprep.subr.bf16.mxu0 %v1213
    %1553 = vmatpush2.bf16.msra.mxu0 %v1212
    %1554 = vmatprep.subr.bf16.mxu0 %v1210
    %1555 = vmatpush2.bf16.msra.mxu0 %v1209
    %1556 = vmatprep.subr.bf16.mxu0 %v1207
    %1557 = vmatpush2.bf16.msra.mxu0 %v1206
    %1558 = vmatprep.subr.bf16.mxu0 %v1204
    %1559 = vmatpush2.bf16.msra.mxu0 %v1203
    %1560 = vmatprep.subr.bf16.mxu0 %v1201
    %1561 = vmatpush2.bf16.msra.mxu0 %v1200
    %1562 = vmatprep.subr.bf16.mxu0 %v1198
    %1563 = vmatpush2.bf16.msra.mxu0 %v1197
    %1564 = vmatprep.subr.bf16.mxu0 %v1195
    %1565 = vmatpush2.bf16.msra.mxu0 %v1194
    %1566 = vmatprep.subr.bf16.mxu0 %v1192
    %1567 = vmatpush2.bf16.msra.mxu0 %v1191
    %1568 = vmatprep.mubr.bf16.mxu0 %v374
    %1569 = vmatmul.mubr.bf16.gmra.mxu0 %v373
    %v1570 = vpop.f32.mrf.mxu0
    %v1571 = vadd.f32 %v1528, %v1570
    %v1572 = vpop.f32.mrf.mxu0
    %v1573 = vadd.f32 %v1530, %v1572
    %v1574 = vpop.f32.mrf.mxu0
    %v1575 = vadd.f32 %v1532, %v1574
    %v1576 = vpop.f32.mrf.mxu0
    %v1577 = vadd.f32 %v1534, %v1576
    %1578 = vdwg.mxu0
    %1579 = vmatprep.subr.bf16.mxu0 0
    %1580 = vmatpush1.bf16.msra.mxu0 %v1046
    %1581 = vmatprep.subr.bf16.mxu0 0
    %1582 = vmatpush1.bf16.msra.mxu0 %v1043
    %1583 = vmatprep.subr.bf16.mxu0 0
    %1584 = vmatpush1.bf16.msra.mxu0 %v1040
    %1585 = vmatprep.subr.bf16.mxu0 0
    %1586 = vmatpush1.bf16.msra.mxu0 %v1037
    %1587 = vmatprep.subr.bf16.mxu0 0
    %1588 = vmatpush1.bf16.msra.mxu0 %v1034
    %1589 = vmatprep.subr.bf16.mxu0 0
    %1590 = vmatpush1.bf16.msra.mxu0 %v1031
    %1591 = vmatprep.subr.bf16.mxu0 0
    %1592 = vmatpush1.bf16.msra.mxu0 %v1028
    %1593 = vmatprep.subr.bf16.mxu0 0
    %1594 = vmatpush1.bf16.msra.mxu0 %v1025
    %1595 = vmatprep.subr.bf16.mxu0 0
    %1596 = vmatpush2.bf16.msra.mxu0 %v1070
    %1597 = vmatprep.subr.bf16.mxu0 0
    %1598 = vmatpush2.bf16.msra.mxu0 %v1067
    %1599 = vmatprep.subr.bf16.mxu0 0
    %1600 = vmatpush2.bf16.msra.mxu0 %v1064
    %1601 = vmatprep.subr.bf16.mxu0 0
    %1602 = vmatpush2.bf16.msra.mxu0 %v1061
    %1603 = vmatprep.subr.bf16.mxu0 0
    %1604 = vmatpush2.bf16.msra.mxu0 %v1058
    %1605 = vmatprep.subr.bf16.mxu0 0
    %1606 = vmatpush2.bf16.msra.mxu0 %v1055
    %1607 = vmatprep.subr.bf16.mxu0 0
    %1608 = vmatpush2.bf16.msra.mxu0 %v1052
    %1609 = vmatprep.subr.bf16.mxu0 0
    %1610 = vmatpush2.bf16.msra.mxu0 %v1049
    %1611 = vmatprep.mubr.bf16.mxu0 %v368
    %1612 = vmatmul.mubr.bf16.gmra.mxu0 %v367
    %v1613 = vpop.f32.mrf.mxu0
    %v1614 = vadd.f32 0.0, %v1613
    %v1615 = vpop.f32.mrf.mxu0
    %v1616 = vpop.f32.mrf.mxu0
    %v1617 = vadd.f32 0.0, %v1616
    %v1618 = vpop.f32.mrf.mxu0
    %1619 = vdwg.mxu0
    %1620 = vmatprep.subr.bf16.mxu0 0
    %1621 = vmatpush1.bf16.msra.mxu0 %v1094
    %1622 = vmatprep.subr.bf16.mxu0 0
    %1623 = vmatpush1.bf16.msra.mxu0 %v1091
    %1624 = vmatprep.subr.bf16.mxu0 0
    %1625 = vmatpush1.bf16.msra.mxu0 %v1088
    %1626 = vmatprep.subr.bf16.mxu0 0
    %1627 = vmatpush1.bf16.msra.mxu0 %v1085
    %1628 = vmatprep.subr.bf16.mxu0 0
    %1629 = vmatpush1.bf16.msra.mxu0 %v1082
    %1630 = vmatprep.subr.bf16.mxu0 0
    %1631 = vmatpush1.bf16.msra.mxu0 %v1079
    %1632 = vmatprep.subr.bf16.mxu0 0
    %1633 = vmatpush1.bf16.msra.mxu0 %v1076
    %1634 = vmatprep.subr.bf16.mxu0 0
    %1635 = vmatpush1.bf16.msra.mxu0 %v1073
    %1636 = vmatprep.subr.bf16.mxu0 0
    %1637 = vmatpush2.bf16.msra.mxu0 %v1118
    %1638 = vmatprep.subr.bf16.mxu0 0
    %1639 = vmatpush2.bf16.msra.mxu0 %v1115
    %1640 = vmatprep.subr.bf16.mxu0 0
    %1641 = vmatpush2.bf16.msra.mxu0 %v1112
    %1642 = vmatprep.subr.bf16.mxu0 0
    %1643 = vmatpush2.bf16.msra.mxu0 %v1109
    %1644 = vmatprep.subr.bf16.mxu0 0
    %1645 = vmatpush2.bf16.msra.mxu0 %v1106
    %1646 = vmatprep.subr.bf16.mxu0 0
    %1647 = vmatpush2.bf16.msra.mxu0 %v1103
    %1648 = vmatprep.subr.bf16.mxu0 0
    %1649 = vmatpush2.bf16.msra.mxu0 %v1100
    %1650 = vmatprep.subr.bf16.mxu0 0
    %1651 = vmatpush2.bf16.msra.mxu0 %v1097
    %1652 = vmatprep.mubr.bf16.mxu0 %v370
    %1653 = vmatmul.mubr.bf16.gmra.mxu0 %v369
    %v1654 = vpop.f32.mrf.mxu0
    %v1655 = vadd.f32 %v1614, %v1654
    %v1656 = vpop.f32.mrf.mxu0
    %v1657 = vpop.f32.mrf.mxu0
    %v1658 = vadd.f32 %v1617, %v1657
    %v1659 = vpop.f32.mrf.mxu0
    %1660 = vdwg.mxu0
    %1661 = vmatprep.subr.bf16.mxu0 0
    %1662 = vmatpush1.bf16.msra.mxu0 %v1142
    %1663 = vmatprep.subr.bf16.mxu0 0
    %1664 = vmatpush1.bf16.msra.mxu0 %v1139
    %1665 = vmatprep.subr.bf16.mxu0 0
    %1666 = vmatpush1.bf16.msra.mxu0 %v1136
    %1667 = vmatprep.subr.bf16.mxu0 0
    %1668 = vmatpush1.bf16.msra.mxu0 %v1133
    %1669 = vmatprep.subr.bf16.mxu0 0
    %1670 = vmatpush1.bf16.msra.mxu0 %v1130
    %1671 = vmatprep.subr.bf16.mxu0 0
    %1672 = vmatpush1.bf16.msra.mxu0 %v1127
    %1673 = vmatprep.subr.bf16.mxu0 0
    %1674 = vmatpush1.bf16.msra.mxu0 %v1124
    %1675 = vmatprep.subr.bf16.mxu0 0
    %1676 = vmatpush1.bf16.msra.mxu0 %v1121
    %1677 = vmatprep.subr.bf16.mxu0 0
    %1678 = vmatpush2.bf16.msra.mxu0 %v1166
    %1679 = vmatprep.subr.bf16.mxu0 0
    %1680 = vmatpush2.bf16.msra.mxu0 %v1163
    %1681 = vmatprep.subr.bf16.mxu0 0
    %1682 = vmatpush2.bf16.msra.mxu0 %v1160
    %1683 = vmatprep.subr.bf16.mxu0 0
    %1684 = vmatpush2.bf16.msra.mxu0 %v1157
    %1685 = vmatprep.subr.bf16.mxu0 0
    %1686 = vmatpush2.bf16.msra.mxu0 %v1154
    %1687 = vmatprep.subr.bf16.mxu0 0
    %1688 = vmatpush2.bf16.msra.mxu0 %v1151
    %1689 = vmatprep.subr.bf16.mxu0 0
    %1690 = vmatpush2.bf16.msra.mxu0 %v1148
    %1691 = vmatprep.subr.bf16.mxu0 0
    %1692 = vmatpush2.bf16.msra.mxu0 %v1145
    %1693 = vmatprep.mubr.bf16.mxu0 %v372
    %1694 = vmatmul.mubr.bf16.gmra.mxu0 %v371
    %v1695 = vpop.f32.mrf.mxu0
    %v1696 = vadd.f32 %v1655, %v1695
    %v1697 = vpop.f32.mrf.mxu0
    %v1698 = vpop.f32.mrf.mxu0
    %v1699 = vadd.f32 %v1658, %v1698
    %v1700 = vpop.f32.mrf.mxu0
    %1701 = vdwg.mxu0
    %1702 = vmatprep.subr.bf16.mxu0 0
    %1703 = vmatpush1.bf16.msra.mxu0 %v1190
    %1704 = vmatprep.subr.bf16.mxu0 0
    %1705 = vmatpush1.bf16.msra.mxu0 %v1187
    %1706 = vmatprep.subr.bf16.mxu0 0
    %1707 = vmatpush1.bf16.msra.mxu0 %v1184
    %1708 = vmatprep.subr.bf16.mxu0 0
    %1709 = vmatpush1.bf16.msra.mxu0 %v1181
    %1710 = vmatprep.subr.bf16.mxu0 0
    %1711 = vmatpush1.bf16.msra.mxu0 %v1178
    %1712 = vmatprep.subr.bf16.mxu0 0
    %1713 = vmatpush1.bf16.msra.mxu0 %v1175
    %1714 = vmatprep.subr.bf16.mxu0 0
    %1715 = vmatpush1.bf16.msra.mxu0 %v1172
    %1716 = vmatprep.subr.bf16.mxu0 0
    %1717 = vmatpush1.bf16.msra.mxu0 %v1169
    %1718 = vmatprep.subr.bf16.mxu0 0
    %1719 = vmatpush2.bf16.msra.mxu0 %v1214
    %1720 = vmatprep.subr.bf16.mxu0 0
    %1721 = vmatpush2.bf16.msra.mxu0 %v1211
    %1722 = vmatprep.subr.bf16.mxu0 0
    %1723 = vmatpush2.bf16.msra.mxu0 %v1208
    %1724 = vmatprep.subr.bf16.mxu0 0
    %1725 = vmatpush2.bf16.msra.mxu0 %v1205
    %1726 = vmatprep.subr.bf16.mxu0 0
    %1727 = vmatpush2.bf16.msra.mxu0 %v1202
    %1728 = vmatprep.subr.bf16.mxu0 0
    %1729 = vmatpush2.bf16.msra.mxu0 %v1199
    %1730 = vmatprep.subr.bf16.mxu0 0
    %1731 = vmatpush2.bf16.msra.mxu0 %v1196
    %1732 = vmatprep.subr.bf16.mxu0 0
    %1733 = vmatpush2.bf16.msra.mxu0 %v1193
    %1734 = vmatprep.mubr.bf16.mxu0 %v374
    %1735 = vmatmul.mubr.bf16.gmra.mxu0 %v373
    %v1736 = vpop.f32.mrf.mxu0
    %v1737 = vadd.f32 %v1696, %v1736
    %v1738 = vpop.f32.mrf.mxu0
    %v1739 = vpop.f32.mrf.mxu0
    %v1740 = vadd.f32 %v1699, %v1739
    %v1741 = vpop.f32.mrf.mxu0
    %1742 = vdwg.mxu0
    %v1743 = vadd.f32 %v73, %v1571
    %v1744 = vadd.f32 %v74, %v1573
    %v1745 = vadd.f32 %v75, %v1737
    %v1746 = vadd.f32 %v76, %v1575
    %v1747 = vadd.f32 %v77, %v1577
    %v1748 = vadd.f32 %v78, %v1740
    %1749 = vst [vmem:[#allocation2] sm:$0xff] %v1743
    %1750 = vst [vmem:[#allocation2 + $0x8] sm:$0xff] %v1744
    %1751 = vst [vmem:[#allocation2 + $0x10] sm:$0xff] %v1745
    %1752 = vst [vmem:[#allocation2 + $0x18] sm:$0xff] %v1746
    %1753 = vst [vmem:[#allocation2 + $0x20] sm:$0xff] %v1747
    %1754 = vst [vmem:[#allocation2 + $0x28] sm:$0xff] %v1748
    // Predicated region
    $region38: #{tpu_custom_call.1} parent=1 // pred_check
      %p1755 = pneg %p63
    $region39: #{tpu_custom_call.1} parent=1 // pred_check_branch
      %1757 = sbr.rel (%p1755) target = $region41
    $region40: #{tpu_custom_call.1} parent=1 // pred_region
      %v1758 = vld [vmem:[#allocation2] sm:$0xff]
      %v1759 = vld [vmem:[#allocation2 + $0x8] sm:$0xff]
      %v1760 = vld [vmem:[#allocation2 + $0x10] sm:$0xff]
      %v1761 = vld [vmem:[#allocation2 + $0x18] sm:$0xff]
      %v1762 = vld [vmem:[#allocation2 + $0x20] sm:$0xff]
      %v1763 = vld [vmem:[#allocation2 + $0x28] sm:$0xff]
      %v1764 = vld [vmem:[%s2] sm:$0x7]
      %v1766 = vlaneseq
      %v1767 = vshrl.u32 %v1766, 7
      %v1768 = vsub.s32 0, %v1767
      %v1769 = vrot.slane %v1764, %v1768
      %v1770 = vlaneseq
      %v1771 = vshrl.u32 %v1770, 7
      %v1772 = vsub.s32 1, %v1771
      %v1773 = vrot.slane %v1764, %v1772
      %v1774 = vlaneseq
      %v1775 = vshrl.u32 %v1774, 7
      %v1776 = vsub.s32 2, %v1775
      %v1777 = vrot.slane %v1764, %v1776
      %v1781 = vadd.f32 %v1758, %v1769
      %v1782 = vadd.f32 %v1759, %v1773
      %v1783 = vadd.f32 %v1760, %v1777
      %v1784 = vadd.f32 %v1761, %v1769
      %v1785 = vadd.f32 %v1762, %v1773
      %v1786 = vadd.f32 %v1763, %v1777
      %v1787 = vmax.f32 %v1781, 0.0
      %v1788 = vmax.f32 %v1782, 0.0
      %v1789 = vmax.f32 %v1783, 0.0
      %v1790 = vmax.f32 %v1784, 0.0
      %v1791 = vmax.f32 %v1785, 0.0
      %v1792 = vmax.f32 %v1786, 0.0
      %v1793 = vpack.c.bf16 %v1790, %v1787
      %v1794 = vpack.c.bf16 %v1791, %v1788
      %v1795 = vpack.c.bf16 %v1792, %v1789
      %v1796 = vld [vmem:[#allocation8] sm:$0xf]
      %v1797 = vld [vmem:[#allocation8 + $0x4] sm:$0xf]
      %v1798 = vld [vmem:[#allocation8 + $0x8] sm:$0xf]
      %v1799 = vld [vmem:[#allocation8 + $0xc] sm:$0xf]
      %v1800 = vld [vmem:[#allocation8 + $0x10] sm:$0xf]
      %v1801 = vld [vmem:[#allocation8 + $0x14] sm:$0xf]
      %v1802 = vld [vmem:[#allocation8 + $0x18] sm:$0xf]
      %v1803 = vld [vmem:[#allocation8 + $0x1c] sm:$0xf]
      %v1804 = vld [vmem:[#allocation8 + $0x20] sm:$0xf]
      %v1805 = vld [vmem:[#allocation8 + $0x24] sm:$0xf]
      %v1806 = vld [vmem:[#allocation8 + $0x28] sm:$0xf]
      %v1807 = vld [vmem:[#allocation8 + $0x2c] sm:$0xf]
      %v1808 = vld [vmem:[#allocation8 + $0x30] sm:$0xf]
      %v1809 = vld [vmem:[#allocation8 + $0x34] sm:$0xf]
      %v1810 = vld [vmem:[#allocation8 + $0x38] sm:$0xf]
      %v1811 = vld [vmem:[#allocation8 + $0x3c] sm:$0xf]
      %v1812 = vld [vmem:[#allocation8 + $0x40] sm:$0xf]
      %v1813 = vld [vmem:[#allocation8 + $0x44] sm:$0xf]
      %v1814 = vld [vmem:[#allocation8 + $0x48] sm:$0xf]
      %v1815 = vld [vmem:[#allocation8 + $0x4c] sm:$0xf]
      %v1816 = vld [vmem:[#allocation8 + $0x50] sm:$0xf]
      %v1817 = vld [vmem:[#allocation8 + $0x54] sm:$0xf]
      %v1818 = vld [vmem:[#allocation8 + $0x58] sm:$0xf]
      %v1819 = vld [vmem:[#allocation8 + $0x5c] sm:$0xf]
      %v1820 = vld [vmem:[#allocation8 + $0x60] sm:$0xf]
      %v1821 = vld [vmem:[#allocation8 + $0x64] sm:$0xf]
      %v1822 = vld [vmem:[#allocation8 + $0x68] sm:$0xf]
      %v1823 = vld [vmem:[#allocation8 + $0x6c] sm:$0xf]
      %v1824 = vld [vmem:[#allocation8 + $0x70] sm:$0xf]
      %v1825 = vld [vmem:[#allocation8 + $0x74] sm:$0xf]
      %v1826 = vld [vmem:[#allocation8 + $0x78] sm:$0xf]
      %v1827 = vld [vmem:[#allocation8 + $0x7c] sm:$0xf]
      %v1828 = vld [vmem:[#allocation8 + $0x80] sm:$0xf]
      %v1829 = vld [vmem:[#allocation8 + $0x84] sm:$0xf]
      %v1830 = vld [vmem:[#allocation8 + $0x88] sm:$0xf]
      %v1831 = vld [vmem:[#allocation8 + $0x8c] sm:$0xf]
      %v1832 = vld [vmem:[#allocation8 + $0x90] sm:$0xf]
      %v1833 = vld [vmem:[#allocation8 + $0x94] sm:$0xf]
      %v1834 = vld [vmem:[#allocation8 + $0x98] sm:$0xf]
      %v1835 = vld [vmem:[#allocation8 + $0x9c] sm:$0xf]
      %v1836 = vld [vmem:[#allocation8 + $0xa0] sm:$0xf]
      %v1837 = vld [vmem:[#allocation8 + $0xa4] sm:$0xf]
      %v1838 = vld [vmem:[#allocation8 + $0xa8] sm:$0xf]
      %v1839 = vld [vmem:[#allocation8 + $0xac] sm:$0xf]
      %v1840 = vld [vmem:[#allocation8 + $0xb0] sm:$0xf]
      %v1841 = vld [vmem:[#allocation8 + $0xb4] sm:$0xf]
      %v1842 = vld [vmem:[#allocation8 + $0xb8] sm:$0xf]
      %v1843 = vld [vmem:[#allocation8 + $0xbc] sm:$0xf]
      %v1844 = vld [vmem:[%s4] sm:$0x1]
      %v1846 = vlaneseq
      %v1847 = vshrl.u32 %v1846, 7
      %v1848 = vsub.s32 0, %v1847
      %v1849 = vrot.slane %v1844, %v1848
      %v1899 = vunpack.c.l.b16 %v1796
      %v1900 = vunpack.c.l.b16 %v1797
      %v1901 = vunpack.c.l.b16 %v1798
      %v1902 = vunpack.c.l.b16 %v1799
      %v1903 = vunpack.c.l.b16 %v1800
      %v1904 = vunpack.c.l.b16 %v1801
      %v1905 = vunpack.c.l.b16 %v1802
      %v1906 = vunpack.c.l.b16 %v1803
      %v1907 = vunpack.c.l.b16 %v1804
      %v1908 = vunpack.c.l.b16 %v1805
      %v1909 = vunpack.c.l.b16 %v1806
      %v1910 = vunpack.c.l.b16 %v1807
      %v1911 = vunpack.c.l.b16 %v1808
      %v1912 = vunpack.c.l.b16 %v1809
      %v1913 = vunpack.c.l.b16 %v1810
      %v1914 = vunpack.c.l.b16 %v1811
      %v1915 = vunpack.c.l.b16 %v1812
      %v1916 = vunpack.c.l.b16 %v1813
      %v1917 = vunpack.c.l.b16 %v1814
      %v1918 = vunpack.c.l.b16 %v1815
      %v1919 = vunpack.c.l.b16 %v1816
      %v1920 = vunpack.c.l.b16 %v1817
      %v1921 = vunpack.c.l.b16 %v1818
      %v1922 = vunpack.c.l.b16 %v1819
      %v1923 = vunpack.c.l.b16 %v1820
      %v1924 = vunpack.c.l.b16 %v1821
      %v1925 = vunpack.c.l.b16 %v1822
      %v1926 = vunpack.c.l.b16 %v1823
      %v1927 = vunpack.c.l.b16 %v1824
      %v1928 = vunpack.c.l.b16 %v1825
      %v1929 = vunpack.c.l.b16 %v1826
      %v1930 = vunpack.c.l.b16 %v1827
      %v1931 = vunpack.c.l.b16 %v1828
      %v1932 = vunpack.c.l.b16 %v1829
      %v1933 = vunpack.c.l.b16 %v1830
      %v1934 = vunpack.c.l.b16 %v1831
      %v1935 = vunpack.c.l.b16 %v1832
      %v1936 = vunpack.c.l.b16 %v1833
      %v1937 = vunpack.c.l.b16 %v1834
      %v1938 = vunpack.c.l.b16 %v1835
      %v1939 = vunpack.c.l.b16 %v1836
      %v1940 = vunpack.c.l.b16 %v1837
      %v1941 = vunpack.c.l.b16 %v1838
      %v1942 = vunpack.c.l.b16 %v1839
      %v1943 = vunpack.c.l.b16 %v1840
      %v1944 = vunpack.c.l.b16 %v1841
      %v1945 = vunpack.c.l.b16 %v1842
      %v1946 = vunpack.c.l.b16 %v1843
      %v1947 = vpack.c.b16 %v1900, %v1899
      %v1948 = vpack.c.b16 %v1902, %v1901
      %v1949 = vpack.c.b16 %v1904, %v1903
      %v1950 = vpack.c.b16 %v1906, %v1905
      %v1951 = vpack.c.b16 %v1908, %v1907
      %v1952 = vpack.c.b16 %v1910, %v1909
      %v1953 = vpack.c.b16 %v1912, %v1911
      %v1954 = vpack.c.b16 %v1914, %v1913
      %v1955 = vpack.c.b16 %v1916, %v1915
      %v1956 = vpack.c.b16 %v1918, %v1917
      %v1957 = vpack.c.b16 %v1920, %v1919
      %v1958 = vpack.c.b16 %v1922, %v1921
      %v1959 = vpack.c.b16 %v1924, %v1923
      %v1960 = vpack.c.b16 %v1926, %v1925
      %v1961 = vpack.c.b16 %v1928, %v1927
      %v1962 = vpack.c.b16 %v1930, %v1929
      %v1963 = vpack.c.b16 %v1932, %v1931
      %v1964 = vpack.c.b16 %v1934, %v1933
      %v1965 = vpack.c.b16 %v1936, %v1935
      %v1966 = vpack.c.b16 %v1938, %v1937
      %v1967 = vpack.c.b16 %v1940, %v1939
      %v1968 = vpack.c.b16 %v1942, %v1941
      %v1969 = vpack.c.b16 %v1944, %v1943
      %v1970 = vpack.c.b16 %v1946, %v1945
      %1995 = vmatprep.subr.bf16.mxu0 0
      %1996 = vmatpush1.bf16.msra.mxu0 %v1954
      %1997 = vmatprep.subr.bf16.mxu0 0
      %1998 = vmatpush1.bf16.msra.mxu0 %v1953
      %1999 = vmatprep.subr.bf16.mxu0 0
      %2000 = vmatpush1.bf16.msra.mxu0 %v1952
      %2001 = vmatprep.subr.bf16.mxu0 0
      %2002 = vmatpush1.bf16.msra.mxu0 %v1951
      %2003 = vmatprep.subr.bf16.mxu0 0
      %2004 = vmatpush1.bf16.msra.mxu0 %v1950
      %2005 = vmatprep.subr.bf16.mxu0 0
      %2006 = vmatpush1.bf16.msra.mxu0 %v1949
      %2007 = vmatprep.subr.bf16.mxu0 0
      %2008 = vmatpush1.bf16.msra.mxu0 %v1948
      %2009 = vmatprep.subr.bf16.mxu0 0
      %2010 = vmatpush1.bf16.msra.mxu0 %v1947
      %2011 = vmatprep.subr.bf16.mxu0 0
      %2012 = vmatpush2.bf16.msra.mxu0 %v1962
      %2013 = vmatprep.subr.bf16.mxu0 0
      %2014 = vmatpush2.bf16.msra.mxu0 %v1961
      %2015 = vmatprep.subr.bf16.mxu0 0
      %2016 = vmatpush2.bf16.msra.mxu0 %v1960
      %2017 = vmatprep.subr.bf16.mxu0 0
      %2018 = vmatpush2.bf16.msra.mxu0 %v1959
      %2019 = vmatprep.subr.bf16.mxu0 0
      %2020 = vmatpush2.bf16.msra.mxu0 %v1958
      %2021 = vmatprep.subr.bf16.mxu0 0
      %2022 = vmatpush2.bf16.msra.mxu0 %v1957
      %2023 = vmatprep.subr.bf16.mxu0 0
      %2024 = vmatpush2.bf16.msra.mxu0 %v1956
      %2025 = vmatprep.subr.bf16.mxu0 0
      %2026 = vmatpush2.bf16.msra.mxu0 %v1955
      %2027 = vmatprep.mubr.bf16.mxu0 %v1794
      %2028 = vmatmul.mubr.bf16.gmra.mxu0 %v1793
      %v2029 = vpop.f32.mrf.mxu0
      %v2030 = vadd.f32 %v1849, %v2029
      %v2031 = vpop.f32.mrf.mxu0
      %v2032 = vpop.f32.mrf.mxu0
      %v2033 = vadd.f32 %v1849, %v2032
      %v2034 = vpop.f32.mrf.mxu0
      %2035 = vdwg.mxu0
      %2036 = vmatprep.subr.bf16.mxu0 0
      %2037 = vmatpush1.bf16.msra.mxu0 %v1970
      %2038 = vmatprep.subr.bf16.mxu0 0
      %2039 = vmatpush1.bf16.msra.mxu0 %v1969
      %2040 = vmatprep.subr.bf16.mxu0 0
      %2041 = vmatpush1.bf16.msra.mxu0 %v1968
      %2042 = vmatprep.subr.bf16.mxu0 0
      %2043 = vmatpush1.bf16.msra.mxu0 %v1967
      %2044 = vmatprep.subr.bf16.mxu0 0
      %2045 = vmatpush1.bf16.msra.mxu0 %v1966
      %2046 = vmatprep.subr.bf16.mxu0 0
      %2047 = vmatpush1.bf16.msra.mxu0 %v1965
      %2048 = vmatprep.subr.bf16.mxu0 0
      %2049 = vmatpush1.bf16.msra.mxu0 %v1964
      %2050 = vmatprep.subr.bf16.mxu0 0
      %2051 = vmatpush1.bf16.msra.mxu0 %v1963
      %2052 = vmatprep.subr.bf16.mxu0 0
      %2053 = vmatpush2.bf16.msra.mxu0 0
      %2054 = vmatprep.subr.bf16.mxu0 0
      %2055 = vmatpush2.bf16.msra.mxu0 0
      %2056 = vmatprep.subr.bf16.mxu0 0
      %2057 = vmatpush2.bf16.msra.mxu0 0
      %2058 = vmatprep.subr.bf16.mxu0 0
      %2059 = vmatpush2.bf16.msra.mxu0 0
      %2060 = vmatprep.subr.bf16.mxu0 0
      %2061 = vmatpush2.bf16.msra.mxu0 0
      %2062 = vmatprep.subr.bf16.mxu0 0
      %2063 = vmatpush2.bf16.msra.mxu0 0
      %2064 = vmatprep.subr.bf16.mxu0 0
      %2065 = vmatpush2.bf16.msra.mxu0 0
      %2066 = vmatprep.subr.bf16.mxu0 0
      %2067 = vmatpush2.bf16.msra.mxu0 0
      %2068 = vmatprep.mubr.bf16.mxu0 0
      %2069 = vmatmul.mubr.bf16.gmra.mxu0 %v1795
      %v2070 = vpop.f32.mrf.mxu0
      %v2071 = vadd.f32 %v2030, %v2070
      %v2072 = vpop.f32.mrf.mxu0
      %v2073 = vpop.f32.mrf.mxu0
      %v2074 = vadd.f32 %v2033, %v2073
      %v2075 = vpop.f32.mrf.mxu0
      %2076 = vdwg.mxu0
      %2077 = vst [vmem:[#allocation9] sm:$0xff] %v2071
      %2078 = vst [vmem:[#allocation9 + $0x8] sm:$0xff] %v2074
    $region41: #{tpu_custom_call.1} parent=1 // pred_fallthru
      _
    // Predicated region
    $region42: #{tpu_custom_call.1} parent=1 // pred_check
      _
    $region43: #{tpu_custom_call.1} parent=1 // pred_check_branch
      %2080 = sbr.rel (0) target = $region45
    $region44: #{tpu_custom_call.1} parent=1 // pred_region
      %s2082 = ssub.s32 256, 256
      %2083 = vsyncadd [#allocation5], %s2082
      %s2084 = sshll.u32 [#allocation9], 4
      %s2085 = int_to_ptr.vmem [resolvable:$true] %s2084
      %2090 = dma.vmem_to_hbm [thread:$0]  %s2085, 256, %s5, [#allocation5], 128, 128, 8
    $region45: #{tpu_custom_call.1} parent=1 // pred_fallthru
      _
    // Predicated region
    $region46: #{tpu_custom_call.1} parent=1 // pred_check
      _
    $region47: #{tpu_custom_call.1} parent=1 // pred_check_branch
      %2092 = sbr.rel (0) target = $region49
    $region48: #{tpu_custom_call.1} parent=1 // pred_region
      %2093 = dma.done [#allocation5], 256
    $region49: #{tpu_custom_call.1} parent=1 // pred_fallthru
      _
    %2094 = vsyncpa [#allocation4], 1
    %2095 = vsyncpa [#allocation7], 1
    %2096 = vsyncpa [#allocation5], 1

</llo_original>
